<compile_context>
chip_gen: v7x
topology: tpu7x:2x2x1
jax: 0.10.0
libtpu: 0.0.40
codegen_flags: <defaults>
</compile_context>

<pallas_src>
import functools

import numpy as np
import jax
import jax.numpy as jnp
from jax.experimental import pallas as pl
from jax.experimental.pallas import tpu as pltpu


# --------------------- host-side glue: weights & indices ---------------------

def _cubic_coeffs(t, A=-0.75):
    # PyTorch upsample_bicubic2d coefficients (a = -0.75).
    def c1(x):  # |x| <= 1
        return ((A + 2.0) * x - (A + 3.0)) * x * x + 1.0

    def c2(x):  # 1 < |x| < 2
        return ((A * x - 5.0 * A) * x + 8.0 * A) * x - 4.0 * A

    return (c2(t + 1.0), c1(t), c1(1.0 - t), c2(2.0 - t))


def bicubic_weight_matrix(in_size, out_size):
    """(out_size, in_size) matrix W so that W @ v reproduces PyTorch's
    F.interpolate(..., mode='bicubic', align_corners=False) along one axis
    (per-tap border clamping, no antialiasing)."""
    scale = in_size / out_size
    W = np.zeros((out_size, in_size), dtype=np.float64)
    for i in range(out_size):
        src = scale * (i + 0.5) - 0.5           # align_corners=False
        i0 = int(np.floor(src))
        t = src - i0
        for m, w in enumerate(_cubic_coeffs(t)):
            idx = min(max(i0 - 1 + m, 0), in_size - 1)
            W[i, idx] += w
    return W


def relative_position_index(q_h, q_w, kv):
    """Mirrors RPE._get_relative_position_index(q_shape)."""
    coords_q = np.stack(np.meshgrid(np.arange(q_h), np.arange(q_w), indexing="ij"))
    coords_q = coords_q.reshape(2, -1)                               # (2, Lq)
    coords_kv = np.stack(np.meshgrid(np.arange(kv), np.arange(kv), indexing="ij"))
    coords_kv = coords_kv.reshape(2, -1)                             # (2, Lk)
    rel = coords_q[:, :, None] - coords_kv[:, None, :]               # (2, Lq, Lk)
    rel = rel.transpose(1, 2, 0).astype(np.int64)
    rel[:, :, 0] += kv - 1
    rel[:, :, 1] += kv - 1
    rel[:, :, 0] *= q_w + kv - 1
    return rel.sum(-1)                                               # (Lq, Lk)


@functools.lru_cache(maxsize=None)
def _rpe_constants(q_h, q_w, q_window_size, kv_window_size, n_steps):
    """Per-(q_shape, window) constants: kron bicubic weights + padded indices."""
    S = q_window_size + kv_window_size - 1
    tH = q_h + kv_window_size - 1
    tW = q_w + kv_window_size - 1
    P = tH * tW
    N = q_h * q_w * kv_window_size * kv_window_size
    row_block = pl.cdiv(N, n_steps * 128) * 128          # lane-dense (multiple of 128)
    N_pad = row_block * n_steps

    wh = bicubic_weight_matrix(S, tH)                    # (tH, S)
    ww = bicubic_weight_matrix(S, tW)                    # (tW, S)
    # kronT[s*S + j, o*tW + w] = Wh[o, s] * Ww[w, j]  ->  separable resize == 1 matmul
    kront = np.kron(wh.T, ww.T).astype(np.float32)       # (S*S, P)

    idx = relative_position_index(q_h, q_w, kv_window_size).reshape(-1)
    idx_pad = np.zeros((1, N_pad), np.int32)
    idx_pad[0, :N] = idx                                 # padded tail gathers entry 0 (sliced off)

    return jnp.asarray(kront), jnp.asarray(idx_pad), P, N, N_pad, row_block


# ------------------------------ Pallas kernel ---------------------------------

def _rpe_fused_kernel(idx_ref, tbl_ref, kront_ref, out_ref):
    """Fused bicubic resize + relative-position gather, all heads at once.

    idx_ref   : (1, row_block) int32   flattened relative-position indices
    tbl_ref   : (H, S*S)       float32 bias table, heads on the M (sublane) axis
    kront_ref : (S*S, P)       float32 kron(Wh, Ww) separable-bicubic weights
    out_ref   : (H, row_block) float32 gathered bias, transposed (lane-dense)
    """
    # Bicubic resize for every head in a single MXU matmul: rpb[h, p].
    rpb = jnp.dot(tbl_ref[...], kront_ref[...],
                  preferred_element_type=jnp.float32)                    # (H, P)

    # Exact one-hot gather built in-kernel from the int32 indices; transposed so
    # the Lq*Lk axis is the output lane dimension (unmasked stores, full MXU N).
    p = kront_ref.shape[1]
    nb = out_ref.shape[1]
    onehot_t = (jax.lax.broadcasted_iota(jnp.int32, (p, nb), 0)
                == idx_ref[...]).astype(jnp.float32)                     # (P, row_block)
    out_ref[...] = jnp.dot(rpb, onehot_t, preferred_element_type=jnp.float32)


# ------------------------------ RPE forward -----------------------------------

def rpe_forward(table, q_shape, *, num_heads, q_window_size, kv_window_size,
                with_rpe=True, n_steps=2):
    if not with_rpe:
        return None
    q_h, q_w = q_shape
    S = q_window_size + kv_window_size - 1
    Lq, Lk = q_h * q_w, kv_window_size * kv_window_size

    kront, idx_pad, P, N, N_pad, row_block = _rpe_constants(
        q_h, q_w, q_window_size, kv_window_size, n_steps)

    # (S*S, H) parameter -> (H, S*S): heads become the MXU M dim, matching
    # the PyTorch view(1, S, S, H).permute(0, 3, 1, 2) layout, flattened.
    tbl_flat = jnp.asarray(table, jnp.float32).T

    out_t = pl.pallas_call(
        _rpe_fused_kernel,
        out_shape=jax.ShapeDtypeStruct((num_heads, N_pad), jnp.float32),
        grid=(n_steps,),
        in_specs=[
            pl.BlockSpec((1, row_block), lambda i: (0, i)),        # indices (tiled)
            pl.BlockSpec((num_heads, S * S), lambda i: (0, 0)),    # table   (resident)
            pl.BlockSpec((S * S, P), lambda i: (0, 0)),            # kron W  (resident)
        ],
        out_specs=pl.BlockSpec((num_heads, row_block), lambda i: (0, i)),
        compiler_params=pltpu.CompilerParams(
            dimension_semantics=("parallel",)),
    )(idx_pad, tbl_flat, kront)

    # (H, N) -> (H, Lq, Lk): pure reshape, already head-major (no transpose).
    return out_t[:, :N].reshape(num_heads, Lq, Lk)


def rpe_forward_ref_np(table, q_shape, *, num_heads, q_window_size, kv_window_size):
    """float64 numpy reference, same math as the PyTorch module (for validation)."""
    S = q_window_size + kv_window_size - 1
    q_h, q_w = q_shape
    tH = q_h + kv_window_size - 1
    tW = q_w + kv_window_size - 1
    tbl = np.asarray(table, np.float64).reshape(S, S, num_heads).transpose(2, 0, 1)
    wh = bicubic_weight_matrix(S, tH)
    ww = bicubic_weight_matrix(S, tW)
    resized = np.einsum("oi,hij,pj->hop", wh, tbl, ww)
    rpb_ph = resized.reshape(num_heads, tH * tW).T
    idx = relative_position_index(q_h, q_w, kv_window_size).reshape(-1)
    gathered = rpb_ph[idx]
    return gathered.reshape(q_h * q_w, kv_window_size ** 2, num_heads).transpose(2, 0, 1)


# ------------------------------------ main -------------------------------------

if __name__ == "__main__":
    num_heads = 4
    q_window_size = 8
    kv_window_size = 8
    q_shape = (10, 12)   # forward() input: spatial shape of the query window

    S = q_window_size + kv_window_size - 1
    key = jax.random.PRNGKey(0)
    # Deterministic synthetic init of relative_position_bias_table (trunc_normal, std=0.02).
    table = jax.random.truncated_normal(
        key, -2.0, 2.0, (S * S, num_heads), jnp.float32) * 0.02

    out = rpe_forward(table, q_shape,
                      num_heads=num_heads,
                      q_window_size=q_window_size,
                      kv_window_size=kv_window_size,
                      with_rpe=True)
    out = jax.block_until_ready(out)

    expected_shape = (num_heads, q_shape[0] * q_shape[1], kv_window_size ** 2)
    assert out.shape == expected_shape, (out.shape, expected_shape)

    ref = rpe_forward_ref_np(np.asarray(table), q_shape,
                             num_heads=num_heads,
                             q_window_size=q_window_size,
                             kv_window_size=kv_window_size)
    np.testing.assert_allclose(np.asarray(out), ref, rtol=1e-4, atol=2e-6)

    print("KERNEL_OK")
</pallas_src>

<mosaic_0001>
module attributes {stable_mosaic.version = 11 : i64} {
  func.func @_rpe_fused_kernel(%arg0: i32, %arg1: memref<1x3840xi32, #tpu.memory_space<vmem>>, %arg2: memref<4x225xf32, #tpu.memory_space<vmem>>, %arg3: memref<225x323xf32, #tpu.memory_space<vmem>>, %arg4: memref<4x3840xf32, #tpu.memory_space<vmem>>) attributes {dimension_semantics = [#tpu.dimension_semantics<parallel>], iteration_bounds = array<i64: 2>, scalar_prefetch = 0 : i64, scratch_operands = 0 : i64, tpu.core_type = #tpu.core_type<tc>, window_params = [{transform_indices = @transform_0, window_bounds = array<i64: 1, 3840>}, {pipeline_mode = #tpu.pipeline_mode<synchronous>, transform_indices = @transform_1, window_bounds = array<i64: 4, 225>}, {pipeline_mode = #tpu.pipeline_mode<synchronous>, transform_indices = @transform_2, window_bounds = array<i64: 225, 323>}, {transform_indices = @transform_3, window_bounds = array<i64: 4, 3840>}]} {
    %c0 = arith.constant 0 : index
    %c0_0 = arith.constant 0 : index
    %0 = vector.load %arg2[%c0, %c0_0] : memref<4x225xf32, #tpu.memory_space<vmem>>, vector<4x225xf32>
    %c0_1 = arith.constant 0 : index
    %c0_2 = arith.constant 0 : index
    %1 = vector.load %arg3[%c0_1, %c0_2] : memref<225x323xf32, #tpu.memory_space<vmem>>, vector<225x323xf32>
    %cst = arith.constant dense<0.000000e+00> : vector<4x323xf32>
    %2 = tpu.matmul %0, %1, %cst {dimension_numbers = #tpu.dot_dimension_numbers<[1], [0], [0], [1], [0, 0, 1, 1], [], []>} : vector<4x225xf32>, vector<225x323xf32>, vector<4x323xf32> -> vector<4x323xf32>
    %3 = tpu.iota {dimensions = array<i32: 0>} : vector<323x3840xi32>
    %c0_3 = arith.constant 0 : index
    %c0_4 = arith.constant 0 : index
    %4 = vector.load %arg1[%c0_3, %c0_4] : memref<1x3840xi32, #tpu.memory_space<vmem>>, vector<1x3840xi32>
    %5 = vector.broadcast %4 : vector<1x3840xi32> to vector<323x3840xi32>
    %6 = arith.cmpi eq, %3, %5 : vector<323x3840xi32>
    %7 = arith.extui %6 : vector<323x3840xi1> to vector<323x3840xi32>
    %8 = arith.sitofp %7 : vector<323x3840xi32> to vector<323x3840xf32>
    %cst_5 = arith.constant dense<0.000000e+00> : vector<4x3840xf32>
    %9 = tpu.matmul %2, %8, %cst_5 {dimension_numbers = #tpu.dot_dimension_numbers<[1], [0], [0], [1], [0, 0, 1, 1], [], []>} : vector<4x323xf32>, vector<323x3840xf32>, vector<4x3840xf32> -> vector<4x3840xf32>
    %c0_6 = arith.constant 0 : index
    %c0_7 = arith.constant 0 : index
    %10 = vector.load %arg4[%c0_6, %c0_7] : memref<4x3840xf32, #tpu.memory_space<vmem>>, vector<4x3840xf32>
    tpu.vector_store %arg4[%c0_6, %c0_7], %9 {strides = array<i32>} : memref<4x3840xf32, #tpu.memory_space<vmem>>, vector<4x3840xf32>,
    return
  }
  func.func @transform_0(%arg0: i32) -> (i32, i32) {
    %c0_i32 = arith.constant 0 : i32
    %c0_i32_0 = arith.constant 0 : i32
    return %c0_i32, %arg0 : i32, i32
  }
  func.func @transform_1(%arg0: i32) -> (i32, i32) {
    %c0_i32 = arith.constant 0 : i32
    %c0_i32_0 = arith.constant 0 : i32
    %c0_i32_1 = arith.constant 0 : i32
    return %c0_i32, %c0_i32_0 : i32, i32
  }
  func.func @transform_2(%arg0: i32) -> (i32, i32) {
    %c0_i32 = arith.constant 0 : i32
    %c0_i32_0 = arith.constant 0 : i32
    %c0_i32_1 = arith.constant 0 : i32
    return %c0_i32, %c0_i32_0 : i32, i32
  }
  func.func @transform_3(%arg0: i32) -> (i32, i32) {
    %c0_i32 = arith.constant 0 : i32
    %c0_i32_0 = arith.constant 0 : i32
    return %c0_i32, %arg0 : i32, i32
  }
}

</mosaic_0001>

<llo_original>
// kernel: tpu_custom_call.1
$region0: #{tpu_custom_call.1}
  #allocation0 [shape = 'u32[]', space=smem, size = 0x4, offset = 0x4, fixed_abs, tag = 'smem constant byte address 0x4 - core index']
  #allocation1 [shape = 'u32[144,128]{1,0:T(1,128)}', space=vmem, size = 0x12000, scoped, tag = 'internal scratch']
  %s0 = inlined_call_operand.vmem [shape: s32[1,7680], index: 0, kind: input, shape index: {}]
  %s1 = inlined_call_operand.vmem [shape: f32[4,225], index: 1, kind: input, shape index: {}]
  %s2 = inlined_call_operand.vmem [shape: f32[225,323], index: 2, kind: input, shape index: {}]
  %s3 = inlined_call_operand.hbm [shape: f32[4,7680], index: 3, kind: output, shape index: {}]
  %s4 = sld [smem:[#allocation0]]
  $region45: #{tpu_custom_call.1} parent=0
    _
  %s6 = ssub.s32 1, %s4
  %s7 = scalar_select 0, %s6, %s4
  $region1: #{tpu_custom_call.1} parent=0
    #allocation2 [shape = 'u8[122880]{0}', space=vmem, size = 0x1e000, scoped, tag = 'output window, operand 0']
    #allocation3 [shape = 's32[2]{0}', space=sflag, size = 0x8, scoped, tag = 'scoped memory for tpu_custom_call.1']
    %8 = vsyncpa [#allocation3], 0
    %s9 = scalar_lea.sflag [#allocation3], 1
    %10 = vsyncpa %s9, 0
    loop: start=0, step=1, limit=4
    $region2: #{tpu_custom_call.1} parent=1 // loop_pre_header
      _
    $region3: #{tpu_custom_call.1} parent=1 // loop_header
      %s12 = sphi 0, %s16
      %p13 = scmp.ge.s32.totalorder %s12, 4
      %s22 = sphi 0, %s24
      %s25 = sphi 0, %s22
      %s26 = sphi 0, %s25
      %s42 = sphi 0, %s26
      %s46 = sphi 0, %s46
      %s48 = sphi 0, %s46
      %s49 = sphi 0, %s48
      %s63 = sphi 0, %s49
      %s67 = sphi 0, %s67
      %s69 = sphi 0, %s67
      %s70 = sphi 0, %s69
      %s84 = sphi 0, %s70
      %s90 = sphi 0, %s92
      %s93 = sphi 0, %s90
      %s94 = sphi 0, %s93
      %s110 = sphi 0, %s94
    $region4: #{tpu_custom_call.1} parent=1 // loop_header_branch
      %15 = sbr.rel (%p13) target = $region8
    $region5: #{tpu_custom_call.1} parent=1 // loop_body
      %s17 = ssub.s32 %s12, 1
      %s18 = ssub.s32 %s12, 2
      %s19 = sadd.s32 %s12, 1
      %s20 = ssub.s32 %s12, %s19
      %p21 = scmp.eq.s32.totalorder %s20, 0
      %s23 = sadd.s32 %s22, 1
      %s24 = scalar_select %p21, %s22, %s23
      %p27 = pneg %p21
      %p28 = scmp.eq.s32.totalorder %s12, 1
      %p29 = por %p27, %p28
      %p30 = scmp.ne.s32.totalorder %s22, %s25
      %p31 = scmp.eq.s32.totalorder %s12, 0
      %p32 = por %p30, %p31
      %p33 = scmp.ne.s32.totalorder %s22, %s25
      %p34 = scmp.eq.s32.totalorder %s17, 1
      %p35 = por %p33, %p34
      %p36 = scmp.ne.s32.totalorder %s25, %s26
      %p37 = scmp.eq.s32.totalorder %s17, 0
      %p38 = por %p36, %p37
      %p39 = scmp.ne.s32.totalorder %s25, %s26
      %p40 = scmp.eq.s32.totalorder %s18, 1
      %p41 = por %p39, %p40
      %p43 = scmp.ne.s32.totalorder %s26, %s42
      %p44 = scmp.eq.s32.totalorder %s18, 0
      %p45 = por %p43, %p44
      %s47 = sadd.s32 %s46, 1
      %p50 = scmp.eq.s32.totalorder %s12, 1
      %p51 = scmp.ne.s32.totalorder %s46, %s48
      %p52 = scmp.eq.s32.totalorder %s12, 0
      %p53 = por %p51, %p52
      %p54 = scmp.ne.s32.totalorder %s46, %s48
      %p55 = scmp.eq.s32.totalorder %s17, 1
      %p56 = por %p54, %p55
      %p57 = scmp.ne.s32.totalorder %s48, %s49
      %p58 = scmp.eq.s32.totalorder %s17, 0
      %p59 = por %p57, %p58
      %p60 = scmp.ne.s32.totalorder %s48, %s49
      %p61 = scmp.eq.s32.totalorder %s18, 1
      %p62 = por %p60, %p61
      %p64 = scmp.ne.s32.totalorder %s49, %s63
      %p65 = scmp.eq.s32.totalorder %s18, 0
      %p66 = por %p64, %p65
      %s68 = sadd.s32 %s67, 1
      %p71 = scmp.eq.s32.totalorder %s12, 1
      %p72 = scmp.ne.s32.totalorder %s67, %s69
      %p73 = scmp.eq.s32.totalorder %s12, 0
      %p74 = por %p72, %p73
      %p75 = scmp.ne.s32.totalorder %s67, %s69
      %p76 = scmp.eq.s32.totalorder %s17, 1
      %p77 = por %p75, %p76
      %p78 = scmp.ne.s32.totalorder %s69, %s70
      %p79 = scmp.eq.s32.totalorder %s17, 0
      %p80 = por %p78, %p79
      %p81 = scmp.ne.s32.totalorder %s69, %s70
      %p82 = scmp.eq.s32.totalorder %s18, 1
      %p83 = por %p81, %p82
      %p85 = scmp.ne.s32.totalorder %s70, %s84
      %p86 = scmp.eq.s32.totalorder %s18, 0
      %p87 = por %p85, %p86
      %s88 = ssub.s32 %s12, %s19
      %p89 = scmp.eq.s32.totalorder %s88, 0
      %s91 = sadd.s32 %s90, 1
      %s92 = scalar_select %p89, %s90, %s91
      %p95 = pneg %p89
      %p96 = scmp.eq.s32.totalorder %s12, 1
      %p97 = por %p95, %p96
      %p98 = scmp.ne.s32.totalorder %s90, %s93
      %p99 = scmp.eq.s32.totalorder %s12, 0
      %p100 = por %p98, %p99
      %p101 = scmp.ne.s32.totalorder %s90, %s93
      %p102 = scmp.eq.s32.totalorder %s17, 1
      %p103 = por %p101, %p102
      %p104 = scmp.ne.s32.totalorder %s93, %s94
      %p105 = scmp.eq.s32.totalorder %s17, 0
      %p106 = por %p104, %p105
      %p107 = scmp.ne.s32.totalorder %s93, %s94
      %p108 = scmp.eq.s32.totalorder %s18, 1
      %p109 = por %p107, %p108
      %p111 = scmp.ne.s32.totalorder %s94, %s110
      %p112 = scmp.eq.s32.totalorder %s18, 0
      %p113 = por %p111, %p112
      %p114 = scmp.le.s32.totalorder 1, %s12
      %p115 = scmp.lt.s32.totalorder %s12, 3
      %p116 = pnand %p114, %p115
      %p117 = pneg %p116
      // Predicated region
      $region9: #{tpu_custom_call.1} parent=5 // pred_check
        _
      $region10: #{tpu_custom_call.1} parent=5 // pred_check_branch
        %119 = sbr.rel (%p116) target = $region12
      $region11: #{tpu_custom_call.1} parent=5 // pred_region
        %s120 = ssub.s32 %s12, 1
        // Predicated region
        $region13: #{tpu_custom_call.1} parent=11 // pred_check
          %p121 = pneg %p59
        $region14: #{tpu_custom_call.1} parent=11 // pred_check_branch
          %123 = sbr.rel (%p121) target = $region16
        $region15: #{tpu_custom_call.1} parent=11 // pred_region
          _
        $region16: #{tpu_custom_call.1} parent=11 // pred_fallthru
          _
        // Predicated region
        $region17: #{tpu_custom_call.1} parent=11 // pred_check
          %p124 = pneg %p80
        $region18: #{tpu_custom_call.1} parent=11 // pred_check_branch
          %126 = sbr.rel (%p124) target = $region20
        $region19: #{tpu_custom_call.1} parent=11 // pred_region
          _
        $region20: #{tpu_custom_call.1} parent=11 // pred_fallthru
          _
      $region12: #{tpu_custom_call.1} parent=5 // pred_fallthru
        _
      %p127 = scmp.lt.s32.totalorder %s12, 2
      // Predicated region
      $region21: #{tpu_custom_call.1} parent=5 // pred_check
        %p128 = pneg %p127
      $region22: #{tpu_custom_call.1} parent=5 // pred_check_branch
        %130 = sbr.rel (%p128) target = $region24
      $region23: #{tpu_custom_call.1} parent=5 // pred_region
        // Predicated region
        $region25: #{tpu_custom_call.1} parent=23 // pred_check
          %p131 = pneg %p32
        $region26: #{tpu_custom_call.1} parent=23 // pred_check_branch
          %133 = sbr.rel (%p131) target = $region28
        $region27: #{tpu_custom_call.1} parent=23 // pred_region
          %s134 = smul.u32 30, %s12
          %p135 = scmp.lt.s32.totalorder %s134, 59
          %s136 = scalar_select %p135, %s134, 59
          %s137 = scalar_lea.vmem %s0, %s136
          %s138 = smul.u32 30, %s12
        $region28: #{tpu_custom_call.1} parent=23 // pred_fallthru
          _
      $region24: #{tpu_custom_call.1} parent=5 // pred_fallthru
        _
      %p139 = scmp.le.s32.totalorder 1, %s12
      %p140 = scmp.lt.s32.totalorder %s12, 3
      %p141 = pnand %p139, %p140
      %p142 = pneg %p141
      // Predicated region
      $region29: #{tpu_custom_call.1} parent=5 // pred_check
        _
      $region30: #{tpu_custom_call.1} parent=5 // pred_check_branch
        %144 = sbr.rel (%p141) target = $region32
      $region31: #{tpu_custom_call.1} parent=5 // pred_region
        %s145 = ssub.s32 %s12, 1
        %s146 = smul.u32 30, %s17
        %p147 = scmp.lt.s32.totalorder %s146, 59
        %s148 = scalar_select %p147, %s146, 59
        %s149 = scalar_lea.vmem %s0, %s148
        %p150 = pneg %p38
        %p151 = pneg %p35
        %p152 = pneg %p59
        %p153 = pneg %p56
        %p154 = pneg %p80
        %p155 = pneg %p77
        %p156 = pneg %p106
        %p157 = pneg %p103
        %s158 = sand.u32 %s93, 1
        %s159 = scalar_lea.sflag [#allocation3], %s158
        %s160 = sand.u32 %s93, 1
        %s161 = smul.addr %s160, 120
        %s162 = scalar_lea.vmem [#allocation2], %s161
        %s163 = smul.u32 30, %s17
        %p164 = scmp.lt.s32.totalorder %s163, 59
        %s165 = scalar_select %p164, %s163, 59
        %s166 = scalar_lea.vmem %s0, %s165
        %s167 = smul.u32 30, %s17
        %s168 = smul.u32 30, %s17
        %v169 = vld [vmem:[%s1] sm:$0xff]
        %v170 = vld [vmem:[%s2] sm:$0xff]
        %v171 = vld [vmem:[%s2 + $0x8] sm:$0xff]
        %v172 = vld [vmem:[%s2 + $0x10] sm:$0xff]
        %v173 = vld [vmem:[%s2 + $0x18] sm:$0xff]
        %v174 = vld [vmem:[%s2 + $0x20] sm:$0xff]
        %v175 = vld [vmem:[%s2 + $0x28] sm:$0xff]
        %v176 = vld [vmem:[%s2 + $0x30] sm:$0xff]
        %v177 = vld [vmem:[%s2 + $0x38] sm:$0xff]
        %v178 = vld [vmem:[%s2 + $0x40] sm:$0xff]
        %v179 = vld [vmem:[%s2 + $0x48] sm:$0xff]
        %v180 = vld [vmem:[%s2 + $0x50] sm:$0xff]
        %v181 = vld [vmem:[%s2 + $0x58] sm:$0xff]
        %v182 = vld [vmem:[%s2 + $0x60] sm:$0xff]
        %v183 = vld [vmem:[%s2 + $0x68] sm:$0xff]
        %v184 = vld [vmem:[%s2 + $0x70] sm:$0xff]
        %v185 = vld [vmem:[%s2 + $0x78] sm:$0xff]
        %v186 = vld [vmem:[%s2 + $0x80] sm:$0xff]
        %v187 = vld [vmem:[%s2 + $0x88] sm:$0xff]
        %v188 = vld [vmem:[%s2 + $0x90] sm:$0xff]
        %v189 = vld [vmem:[%s2 + $0x98] sm:$0xff]
        %v190 = vld [vmem:[%s2 + $0xa0] sm:$0xff]
        %v191 = vld [vmem:[%s2 + $0xa8] sm:$0xff]
        %v192 = vld [vmem:[%s2 + $0xb0] sm:$0xff]
        %v193 = vld [vmem:[%s2 + $0xb8] sm:$0xff]
        %v194 = vld [vmem:[%s2 + $0xc0] sm:$0xff]
        %v195 = vld [vmem:[%s2 + $0xc8] sm:$0xff]
        %v196 = vld [vmem:[%s2 + $0xd0] sm:$0xff]
        %v197 = vld [vmem:[%s2 + $0xd8] sm:$0xff]
        %v198 = vld [vmem:[%s2 + $0xe0] sm:$0xff]
        %v199 = vld [vmem:[%s2 + $0xe8] sm:$0xff]
        %v200 = vld [vmem:[%s2 + $0xf0] sm:$0xff]
        %v201 = vld [vmem:[%s2 + $0xf8] sm:$0xff]
        %v202 = vld [vmem:[%s2 + $0x100] sm:$0xff]
        %v203 = vld [vmem:[%s2 + $0x108] sm:$0xff]
        %v204 = vld [vmem:[%s2 + $0x110] sm:$0xff]
        %v205 = vld [vmem:[%s2 + $0x118] sm:$0xff]
        %v206 = vld [vmem:[%s2 + $0x120] sm:$0xff]
        %v207 = vld [vmem:[%s2 + $0x128] sm:$0xff]
        %v208 = vld [vmem:[%s2 + $0x130] sm:$0xff]
        %v209 = vld [vmem:[%s2 + $0x138] sm:$0xff]
        %v210 = vld [vmem:[%s2 + $0x140] sm:$0xff]
        %v211 = vld [vmem:[%s2 + $0x148] sm:$0xff]
        %v212 = vld [vmem:[%s2 + $0x150] sm:$0xff]
        %v213 = vld [vmem:[%s2 + $0x158] sm:$0xff]
        %v214 = vld [vmem:[%s2 + $0x160] sm:$0xff]
        %v215 = vld [vmem:[%s2 + $0x168] sm:$0xff]
        %v216 = vld [vmem:[%s2 + $0x170] sm:$0xff]
        %v217 = vld [vmem:[%s2 + $0x178] sm:$0xff]
        %v218 = vld [vmem:[%s2 + $0x180] sm:$0xff]
        %v219 = vld [vmem:[%s2 + $0x188] sm:$0xff]
        %v220 = vld [vmem:[%s2 + $0x190] sm:$0xff]
        %v221 = vld [vmem:[%s2 + $0x198] sm:$0xff]
        %v222 = vld [vmem:[%s2 + $0x1a0] sm:$0xff]
        %v223 = vld [vmem:[%s2 + $0x1a8] sm:$0xff]
        %v224 = vld [vmem:[%s2 + $0x1b0] sm:$0xff]
        %v225 = vld [vmem:[%s2 + $0x1b8] sm:$0xff]
        %v226 = vld [vmem:[%s2 + $0x1c0] sm:$0xff]
        %v227 = vld [vmem:[%s2 + $0x1c8] sm:$0xff]
        %v228 = vld [vmem:[%s2 + $0x1d0] sm:$0xff]
        %v229 = vld [vmem:[%s2 + $0x1d8] sm:$0xff]
        %v230 = vld [vmem:[%s2 + $0x1e0] sm:$0xff]
        %v231 = vld [vmem:[%s2 + $0x1e8] sm:$0xff]
        %v232 = vld [vmem:[%s2 + $0x1f0] sm:$0xff]
        %v233 = vld [vmem:[%s2 + $0x1f8] sm:$0xff]
        %v234 = vld [vmem:[%s2 + $0x200] sm:$0xff]
        %v235 = vld [vmem:[%s2 + $0x208] sm:$0xff]
        %v236 = vld [vmem:[%s2 + $0x210] sm:$0xff]
        %v237 = vld [vmem:[%s2 + $0x218] sm:$0xff]
        %v238 = vld [vmem:[%s2 + $0x220] sm:$0xff]
        %v239 = vld [vmem:[%s2 + $0x228] sm:$0xff]
        %v240 = vld [vmem:[%s2 + $0x230] sm:$0xff]
        %v241 = vld [vmem:[%s2 + $0x238] sm:$0xff]
        %v242 = vld [vmem:[%s2 + $0x240] sm:$0xff]
        %v243 = vld [vmem:[%s2 + $0x248] sm:$0xff]
        %v244 = vld [vmem:[%s2 + $0x250] sm:$0xff]
        %v245 = vld [vmem:[%s2 + $0x258] sm:$0xff]
        %v246 = vld [vmem:[%s2 + $0x260] sm:$0xff]
        %v247 = vld [vmem:[%s2 + $0x268] sm:$0xff]
        %v248 = vld [vmem:[%s2 + $0x270] sm:$0xff]
        %v249 = vld [vmem:[%s2 + $0x278] sm:$0xff]
        %v250 = vld [vmem:[%s2 + $0x280] sm:$0xff]
        %v251 = vld [vmem:[%s2 + $0x288] sm:$0xff]
        %v252 = vld [vmem:[%s2 + $0x290] sm:$0xff]
        %v253 = vld [vmem:[%s2 + $0x298] sm:$0xff]
        %v254 = vld [vmem:[%s2 + $0x2a0] sm:$0x1]
        %v255 = vld [vmem:[%s2 + $0x2a8] sm:$0x1]
        %v256 = vld [vmem:[%s2 + $0x2b0] sm:$0x1]
        %v258 = vcombine.high %v169, %v169
        %vm259 = vcmask 793600
        %v260 = vsel %vm259, %v258, 0
        %vm262 = vcmask 1040384
        %v264 = vsel %vm262, %v254, 0
        %v267 = vsel %vm262, %v255, 0
        %v270 = vsel %vm262, %v256, 0
        %272 = vmatprep.subr.mxu0 %v171
        %273 = vmatpush1.msra.mxu0 %v170
        %274 = vmatprep.subr.mxu0 %v174
        %275 = vmatpush1.msra.mxu0 %v173
        %276 = vmatprep.subr.mxu0 %v177
        %277 = vmatpush1.msra.mxu0 %v176
        %278 = vmatprep.subr.mxu0 %v180
        %279 = vmatpush1.msra.mxu0 %v179
        %280 = vmatprep.subr.mxu0 %v183
        %281 = vmatpush1.msra.mxu0 %v182
        %282 = vmatprep.subr.mxu0 %v186
        %283 = vmatpush1.msra.mxu0 %v185
        %284 = vmatprep.subr.mxu0 %v189
        %285 = vmatpush1.msra.mxu0 %v188
        %286 = vmatprep.subr.mxu0 %v192
        %287 = vmatpush1.msra.mxu0 %v191
        %288 = vmatprep.subr.mxu0 %v195
        %289 = vmatpush1.msra.mxu0 %v194
        %290 = vmatprep.subr.mxu0 %v198
        %291 = vmatpush1.msra.mxu0 %v197
        %292 = vmatprep.subr.mxu0 %v201
        %293 = vmatpush1.msra.mxu0 %v200
        %294 = vmatprep.subr.mxu0 %v204
        %295 = vmatpush1.msra.mxu0 %v203
        %296 = vmatprep.subr.mxu0 %v207
        %297 = vmatpush1.msra.mxu0 %v206
        %298 = vmatprep.subr.mxu0 %v210
        %299 = vmatpush1.msra.mxu0 %v209
        %300 = vmatprep.subr.mxu0 %v213
        %301 = vmatpush1.msra.mxu0 %v212
        %302 = vmatprep.subr.mxu0 %v216
        %303 = vmatpush1.msra.mxu0 %v215
        %304 = vmatprep.subr.mxu0 %v219
        %305 = vmatpush1.msra.mxu0 %v218
        %306 = vmatprep.subr.mxu0 %v222
        %307 = vmatpush1.msra.mxu0 %v221
        %308 = vmatprep.subr.mxu0 %v225
        %309 = vmatpush1.msra.mxu0 %v224
        %310 = vmatprep.subr.mxu0 %v228
        %311 = vmatpush1.msra.mxu0 %v227
        %312 = vmatprep.subr.mxu0 %v231
        %313 = vmatpush1.msra.mxu0 %v230
        %314 = vmatprep.subr.mxu0 %v234
        %315 = vmatpush1.msra.mxu0 %v233
        %316 = vmatprep.subr.mxu0 %v237
        %317 = vmatpush1.msra.mxu0 %v236
        %318 = vmatprep.subr.mxu0 %v240
        %319 = vmatpush1.msra.mxu0 %v239
        %320 = vmatprep.subr.mxu0 %v243
        %321 = vmatpush1.msra.mxu0 %v242
        %322 = vmatprep.subr.mxu0 %v246
        %323 = vmatpush1.msra.mxu0 %v245
        %324 = vmatprep.subr.mxu0 %v249
        %325 = vmatpush1.msra.mxu0 %v248
        %326 = vmatprep.subr.mxu0 %v252
        %327 = vmatpush1.msra.mxu0 %v251
        %328 = vmatprep.subr.mxu0 %v267
        %329 = vmatpush1.msra.mxu0 %v264
        %330 = vmatprep.subr.mxu0 0.0
        %331 = vmatpush1.msra.mxu0 0.0
        %332 = vmatprep.subr.mxu0 0.0
        %333 = vmatpush1.msra.mxu0 0.0
        %334 = vmatprep.subr.mxu0 0.0
        %335 = vmatpush1.msra.mxu0 0.0
        %336 = vmatprep.mubr.f32.mxu0 %v260
        %337 = vmatmul.mubr.f32.gmra.mrb[0].mxu0 %v169
        %v338 = vpop.f32.mrb[0].mxu0
        %v339 = vadd.f32 0.0, %v338
        %v340 = vpop.f32.mrb[0].mxu0
        %v341 = vadd.f32 0.0, %v340
        %342 = vdwg.mxu0
        %343 = vmatprep.subr.mxu0 0.0
        %344 = vmatpush1.msra.mxu0 %v172
        %345 = vmatprep.subr.mxu0 0.0
        %346 = vmatpush1.msra.mxu0 %v175
        %347 = vmatprep.subr.mxu0 0.0
        %348 = vmatpush1.msra.mxu0 %v178
        %349 = vmatprep.subr.mxu0 0.0
        %350 = vmatpush1.msra.mxu0 %v181
        %351 = vmatprep.subr.mxu0 0.0
        %352 = vmatpush1.msra.mxu0 %v184
        %353 = vmatprep.subr.mxu0 0.0
        %354 = vmatpush1.msra.mxu0 %v187
        %355 = vmatprep.subr.mxu0 0.0
        %356 = vmatpush1.msra.mxu0 %v190
        %357 = vmatprep.subr.mxu0 0.0
        %358 = vmatpush1.msra.mxu0 %v193
        %359 = vmatprep.subr.mxu0 0.0
        %360 = vmatpush1.msra.mxu0 %v196
        %361 = vmatprep.subr.mxu0 0.0
        %362 = vmatpush1.msra.mxu0 %v199
        %363 = vmatprep.subr.mxu0 0.0
        %364 = vmatpush1.msra.mxu0 %v202
        %365 = vmatprep.subr.mxu0 0.0
        %366 = vmatpush1.msra.mxu0 %v205
        %367 = vmatprep.subr.mxu0 0.0
        %368 = vmatpush1.msra.mxu0 %v208
        %369 = vmatprep.subr.mxu0 0.0
        %370 = vmatpush1.msra.mxu0 %v211
        %371 = vmatprep.subr.mxu0 0.0
        %372 = vmatpush1.msra.mxu0 %v214
        %373 = vmatprep.subr.mxu0 0.0
        %374 = vmatpush1.msra.mxu0 %v217
        %375 = vmatprep.subr.mxu0 0.0
        %376 = vmatpush1.msra.mxu0 %v220
        %377 = vmatprep.subr.mxu0 0.0
        %378 = vmatpush1.msra.mxu0 %v223
        %379 = vmatprep.subr.mxu0 0.0
        %380 = vmatpush1.msra.mxu0 %v226
        %381 = vmatprep.subr.mxu0 0.0
        %382 = vmatpush1.msra.mxu0 %v229
        %383 = vmatprep.subr.mxu0 0.0
        %384 = vmatpush1.msra.mxu0 %v232
        %385 = vmatprep.subr.mxu0 0.0
        %386 = vmatpush1.msra.mxu0 %v235
        %387 = vmatprep.subr.mxu0 0.0
        %388 = vmatpush1.msra.mxu0 %v238
        %389 = vmatprep.subr.mxu0 0.0
        %390 = vmatpush1.msra.mxu0 %v241
        %391 = vmatprep.subr.mxu0 0.0
        %392 = vmatpush1.msra.mxu0 %v244
        %393 = vmatprep.subr.mxu0 0.0
        %394 = vmatpush1.msra.mxu0 %v247
        %395 = vmatprep.subr.mxu0 0.0
        %396 = vmatpush1.msra.mxu0 %v250
        %397 = vmatprep.subr.mxu0 0.0
        %398 = vmatpush1.msra.mxu0 %v253
        %399 = vmatprep.subr.mxu0 0.0
        %400 = vmatpush1.msra.mxu0 %v270
        %401 = vmatprep.subr.mxu0 0.0
        %402 = vmatpush1.msra.mxu0 0.0
        %403 = vmatprep.subr.mxu0 0.0
        %404 = vmatpush1.msra.mxu0 0.0
        %405 = vmatprep.subr.mxu0 0.0
        %406 = vmatpush1.msra.mxu0 0.0
        %407 = vmatprep.mubr.f32.mxu0 %v260
        %408 = vmatmul.mubr.f32.gmra.mrb[0].mxu0 %v169
        %v409 = vpop.f32.mrb[0].mxu0
        %v410 = vadd.f32 0.0, %v409
        %v411 = vpop.f32.mrb[0].mxu0
        %412 = vdwg.mxu0
        %v413 = vlaneseq
        %v414 = vshrl.u32 %v413, 7
        %v415 = vadd.s32 %v414, 8
        %v416 = vadd.s32 %v414, 16
        %v417 = vadd.s32 %v414, 24
        %v418 = vadd.s32 %v414, 32
        %v419 = vadd.s32 %v414, 40
        %v420 = vadd.s32 %v414, 48
        %v421 = vadd.s32 %v414, 56
        %v422 = vadd.s32 %v414, 64
        %v423 = vadd.s32 %v414, 72
        %v424 = vadd.s32 %v414, 80
        %v425 = vadd.s32 %v414, 88
        %v426 = vadd.s32 %v414, 96
        %v427 = vadd.s32 %v414, 104
        %v428 = vadd.s32 %v414, 112
        %v429 = vadd.s32 %v414, 120
        %v430 = vadd.s32 %v414, 128
        %v431 = vadd.s32 %v414, 136
        %v432 = vadd.s32 %v414, 144
        %v433 = vadd.s32 %v414, 152
        %v434 = vadd.s32 %v414, 160
        %v435 = vadd.s32 %v414, 168
        %v436 = vadd.s32 %v414, 176
        %v437 = vadd.s32 %v414, 184
        %v438 = vadd.s32 %v414, 192
        %v439 = vadd.s32 %v414, 200
        %v440 = vadd.s32 %v414, 208
        %v441 = vadd.s32 %v414, 216
        %v442 = vadd.s32 %v414, 224
        %v443 = vadd.s32 %v414, 232
        %v444 = vadd.s32 %v414, 240
        %v445 = vadd.s32 %v414, 248
        %v446 = vadd.s32 %v414, 256
        %v447 = vadd.s32 %v414, 264
        %v448 = vadd.s32 %v414, 272
        %v449 = vadd.s32 %v414, 280
        %v450 = vadd.s32 %v414, 288
        %v451 = vadd.s32 %v414, 296
        %v452 = vadd.s32 %v414, 304
        %v453 = vadd.s32 %v414, 312
        %v454 = vadd.s32 %v414, 320
        %v455 = vld [vmem:[%s166] sm:$0xff]
        %v456 = vld [vmem:[%s166 + $0x8] sm:$0xff]
        %v457 = vld [vmem:[%s166 + $0x10] sm:$0xff]
        %v458 = vld [vmem:[%s166 + $0x18] sm:$0x3f]
        %v459 = vlaneseq
        %v460 = vshrl.u32 %v459, 7
        %v461 = vsub.s32 0, %v460
        %v462 = vrot.slane %v455, %v461
        %v463 = vlaneseq
        %v464 = vshrl.u32 %v463, 7
        %v465 = vsub.s32 1, %v464
        %v466 = vrot.slane %v455, %v465
        %v467 = vlaneseq
        %v468 = vshrl.u32 %v467, 7
        %v469 = vsub.s32 2, %v468
        %v470 = vrot.slane %v455, %v469
        %v471 = vlaneseq
        %v472 = vshrl.u32 %v471, 7
        %v473 = vsub.s32 3, %v472
        %v474 = vrot.slane %v455, %v473
        %v475 = vlaneseq
        %v476 = vshrl.u32 %v475, 7
        %v477 = vsub.s32 4, %v476
        %v478 = vrot.slane %v455, %v477
        %v479 = vlaneseq
        %v480 = vshrl.u32 %v479, 7
        %v481 = vsub.s32 5, %v480
        %v482 = vrot.slane %v455, %v481
        %v483 = vlaneseq
        %v484 = vshrl.u32 %v483, 7
        %v485 = vsub.s32 6, %v484
        %v486 = vrot.slane %v455, %v485
        %v487 = vlaneseq
        %v488 = vshrl.u32 %v487, 7
        %v489 = vsub.s32 7, %v488
        %v490 = vrot.slane %v455, %v489
        %v491 = vlaneseq
        %v492 = vshrl.u32 %v491, 7
        %v493 = vsub.s32 0, %v492
        %v494 = vrot.slane %v456, %v493
        %v495 = vlaneseq
        %v496 = vshrl.u32 %v495, 7
        %v497 = vsub.s32 1, %v496
        %v498 = vrot.slane %v456, %v497
        %v499 = vlaneseq
        %v500 = vshrl.u32 %v499, 7
        %v501 = vsub.s32 2, %v500
        %v502 = vrot.slane %v456, %v501
        %v503 = vlaneseq
        %v504 = vshrl.u32 %v503, 7
        %v505 = vsub.s32 3, %v504
        %v506 = vrot.slane %v456, %v505
        %v507 = vlaneseq
        %v508 = vshrl.u32 %v507, 7
        %v509 = vsub.s32 4, %v508
        %v510 = vrot.slane %v456, %v509
        %v511 = vlaneseq
        %v512 = vshrl.u32 %v511, 7
        %v513 = vsub.s32 5, %v512
        %v514 = vrot.slane %v456, %v513
        %v515 = vlaneseq
        %v516 = vshrl.u32 %v515, 7
        %v517 = vsub.s32 6, %v516
        %v518 = vrot.slane %v456, %v517
        %v519 = vlaneseq
        %v520 = vshrl.u32 %v519, 7
        %v521 = vsub.s32 7, %v520
        %v522 = vrot.slane %v456, %v521
        %v523 = vlaneseq
        %v524 = vshrl.u32 %v523, 7
        %v525 = vsub.s32 0, %v524
        %v526 = vrot.slane %v457, %v525
        %v527 = vlaneseq
        %v528 = vshrl.u32 %v527, 7
        %v529 = vsub.s32 1, %v528
        %v530 = vrot.slane %v457, %v529
        %v531 = vlaneseq
        %v532 = vshrl.u32 %v531, 7
        %v533 = vsub.s32 2, %v532
        %v534 = vrot.slane %v457, %v533
        %v535 = vlaneseq
        %v536 = vshrl.u32 %v535, 7
        %v537 = vsub.s32 3, %v536
        %v538 = vrot.slane %v457, %v537
        %v539 = vlaneseq
        %v540 = vshrl.u32 %v539, 7
        %v541 = vsub.s32 4, %v540
        %v542 = vrot.slane %v457, %v541
        %v543 = vlaneseq
        %v544 = vshrl.u32 %v543, 7
        %v545 = vsub.s32 5, %v544
        %v546 = vrot.slane %v457, %v545
        %v547 = vlaneseq
        %v548 = vshrl.u32 %v547, 7
        %v549 = vsub.s32 6, %v548
        %v550 = vrot.slane %v457, %v549
        %v551 = vlaneseq
        %v552 = vshrl.u32 %v551, 7
        %v553 = vsub.s32 7, %v552
        %v554 = vrot.slane %v457, %v553
        %v555 = vlaneseq
        %v556 = vshrl.u32 %v555, 7
        %v557 = vsub.s32 0, %v556
        %v558 = vrot.slane %v458, %v557
        %v559 = vlaneseq
        %v560 = vshrl.u32 %v559, 7
        %v561 = vsub.s32 1, %v560
        %v562 = vrot.slane %v458, %v561
        %v563 = vlaneseq
        %v564 = vshrl.u32 %v563, 7
        %v565 = vsub.s32 2, %v564
        %v566 = vrot.slane %v458, %v565
        %v567 = vlaneseq
        %v568 = vshrl.u32 %v567, 7
        %v569 = vsub.s32 3, %v568
        %v570 = vrot.slane %v458, %v569
        %v571 = vlaneseq
        %v572 = vshrl.u32 %v571, 7
        %v573 = vsub.s32 4, %v572
        %v574 = vrot.slane %v458, %v573
        %v575 = vlaneseq
        %v576 = vshrl.u32 %v575, 7
        %v577 = vsub.s32 5, %v576
        %v578 = vrot.slane %v458, %v577
        %vm579 = vcmp.eq.s32.totalorder %v414, %v462
        %vm580 = vcmp.eq.s32.totalorder %v414, %v466
        %vm581 = vcmp.eq.s32.totalorder %v414, %v470
        %vm582 = vcmp.eq.s32.totalorder %v414, %v474
        %vm583 = vcmp.eq.s32.totalorder %v414, %v478
        %vm584 = vcmp.eq.s32.totalorder %v414, %v482
        %vm585 = vcmp.eq.s32.totalorder %v414, %v486
        %vm586 = vcmp.eq.s32.totalorder %v414, %v490
        %vm587 = vcmp.eq.s32.totalorder %v414, %v494
        %vm588 = vcmp.eq.s32.totalorder %v414, %v498
        %vm589 = vcmp.eq.s32.totalorder %v414, %v502
        %vm590 = vcmp.eq.s32.totalorder %v414, %v506
        %vm591 = vcmp.eq.s32.totalorder %v414, %v510
        %vm592 = vcmp.eq.s32.totalorder %v414, %v514
        %vm593 = vcmp.eq.s32.totalorder %v414, %v518
        %vm594 = vcmp.eq.s32.totalorder %v414, %v522
        %vm595 = vcmp.eq.s32.totalorder %v414, %v526
        %vm596 = vcmp.eq.s32.totalorder %v414, %v530
        %vm597 = vcmp.eq.s32.totalorder %v414, %v534
        %vm598 = vcmp.eq.s32.totalorder %v414, %v538
        %vm599 = vcmp.eq.s32.totalorder %v414, %v542
        %vm600 = vcmp.eq.s32.totalorder %v414, %v546
        %vm601 = vcmp.eq.s32.totalorder %v414, %v550
        %vm602 = vcmp.eq.s32.totalorder %v414, %v554
        %vm603 = vcmp.eq.s32.totalorder %v414, %v558
        %vm604 = vcmp.eq.s32.totalorder %v414, %v562
        %vm605 = vcmp.eq.s32.totalorder %v414, %v566
        %vm606 = vcmp.eq.s32.totalorder %v414, %v570
        %vm607 = vcmp.eq.s32.totalorder %v414, %v574
        %vm608 = vcmp.eq.s32.totalorder %v414, %v578
        %vm609 = vcmp.eq.s32.totalorder %v415, %v462
        %vm610 = vcmp.eq.s32.totalorder %v415, %v466
        %vm611 = vcmp.eq.s32.totalorder %v415, %v470
        %vm612 = vcmp.eq.s32.totalorder %v415, %v474
        %vm613 = vcmp.eq.s32.totalorder %v415, %v478
        %vm614 = vcmp.eq.s32.totalorder %v415, %v482
        %vm615 = vcmp.eq.s32.totalorder %v415, %v486
        %vm616 = vcmp.eq.s32.totalorder %v415, %v490
        %vm617 = vcmp.eq.s32.totalorder %v415, %v494
        %vm618 = vcmp.eq.s32.totalorder %v415, %v498
        %vm619 = vcmp.eq.s32.totalorder %v415, %v502
        %vm620 = vcmp.eq.s32.totalorder %v415, %v506
        %vm621 = vcmp.eq.s32.totalorder %v415, %v510
        %vm622 = vcmp.eq.s32.totalorder %v415, %v514
        %vm623 = vcmp.eq.s32.totalorder %v415, %v518
        %vm624 = vcmp.eq.s32.totalorder %v415, %v522
        %vm625 = vcmp.eq.s32.totalorder %v415, %v526
        %vm626 = vcmp.eq.s32.totalorder %v415, %v530
        %vm627 = vcmp.eq.s32.totalorder %v415, %v534
        %vm628 = vcmp.eq.s32.totalorder %v415, %v538
        %vm629 = vcmp.eq.s32.totalorder %v415, %v542
        %vm630 = vcmp.eq.s32.totalorder %v415, %v546
        %vm631 = vcmp.eq.s32.totalorder %v415, %v550
        %vm632 = vcmp.eq.s32.totalorder %v415, %v554
        %vm633 = vcmp.eq.s32.totalorder %v415, %v558
        %vm634 = vcmp.eq.s32.totalorder %v415, %v562
        %vm635 = vcmp.eq.s32.totalorder %v415, %v566
        %vm636 = vcmp.eq.s32.totalorder %v415, %v570
        %vm637 = vcmp.eq.s32.totalorder %v415, %v574
        %vm638 = vcmp.eq.s32.totalorder %v415, %v578
        %vm639 = vcmp.eq.s32.totalorder %v416, %v462
        %vm640 = vcmp.eq.s32.totalorder %v416, %v466
        %vm641 = vcmp.eq.s32.totalorder %v416, %v470
        %vm642 = vcmp.eq.s32.totalorder %v416, %v474
        %vm643 = vcmp.eq.s32.totalorder %v416, %v478
        %vm644 = vcmp.eq.s32.totalorder %v416, %v482
        %vm645 = vcmp.eq.s32.totalorder %v416, %v486
        %vm646 = vcmp.eq.s32.totalorder %v416, %v490
        %vm647 = vcmp.eq.s32.totalorder %v416, %v494
        %vm648 = vcmp.eq.s32.totalorder %v416, %v498
        %vm649 = vcmp.eq.s32.totalorder %v416, %v502
        %vm650 = vcmp.eq.s32.totalorder %v416, %v506
        %vm651 = vcmp.eq.s32.totalorder %v416, %v510
        %vm652 = vcmp.eq.s32.totalorder %v416, %v514
        %vm653 = vcmp.eq.s32.totalorder %v416, %v518
        %vm654 = vcmp.eq.s32.totalorder %v416, %v522
        %vm655 = vcmp.eq.s32.totalorder %v416, %v526
        %vm656 = vcmp.eq.s32.totalorder %v416, %v530
        %vm657 = vcmp.eq.s32.totalorder %v416, %v534
        %vm658 = vcmp.eq.s32.totalorder %v416, %v538
        %vm659 = vcmp.eq.s32.totalorder %v416, %v542
        %vm660 = vcmp.eq.s32.totalorder %v416, %v546
        %vm661 = vcmp.eq.s32.totalorder %v416, %v550
        %vm662 = vcmp.eq.s32.totalorder %v416, %v554
        %vm663 = vcmp.eq.s32.totalorder %v416, %v558
        %vm664 = vcmp.eq.s32.totalorder %v416, %v562
        %vm665 = vcmp.eq.s32.totalorder %v416, %v566
        %vm666 = vcmp.eq.s32.totalorder %v416, %v570
        %vm667 = vcmp.eq.s32.totalorder %v416, %v574
        %vm668 = vcmp.eq.s32.totalorder %v416, %v578
        %vm669 = vcmp.eq.s32.totalorder %v417, %v462
        %vm670 = vcmp.eq.s32.totalorder %v417, %v466
        %vm671 = vcmp.eq.s32.totalorder %v417, %v470
        %vm672 = vcmp.eq.s32.totalorder %v417, %v474
        %vm673 = vcmp.eq.s32.totalorder %v417, %v478
        %vm674 = vcmp.eq.s32.totalorder %v417, %v482
        %vm675 = vcmp.eq.s32.totalorder %v417, %v486
        %vm676 = vcmp.eq.s32.totalorder %v417, %v490
        %vm677 = vcmp.eq.s32.totalorder %v417, %v494
        %vm678 = vcmp.eq.s32.totalorder %v417, %v498
        %vm679 = vcmp.eq.s32.totalorder %v417, %v502
        %vm680 = vcmp.eq.s32.totalorder %v417, %v506
        %vm681 = vcmp.eq.s32.totalorder %v417, %v510
        %vm682 = vcmp.eq.s32.totalorder %v417, %v514
        %vm683 = vcmp.eq.s32.totalorder %v417, %v518
        %vm684 = vcmp.eq.s32.totalorder %v417, %v522
        %vm685 = vcmp.eq.s32.totalorder %v417, %v526
        %vm686 = vcmp.eq.s32.totalorder %v417, %v530
        %vm687 = vcmp.eq.s32.totalorder %v417, %v534
        %vm688 = vcmp.eq.s32.totalorder %v417, %v538
        %vm689 = vcmp.eq.s32.totalorder %v417, %v542
        %vm690 = vcmp.eq.s32.totalorder %v417, %v546
        %vm691 = vcmp.eq.s32.totalorder %v417, %v550
        %vm692 = vcmp.eq.s32.totalorder %v417, %v554
        %vm693 = vcmp.eq.s32.totalorder %v417, %v558
        %vm694 = vcmp.eq.s32.totalorder %v417, %v562
        %vm695 = vcmp.eq.s32.totalorder %v417, %v566
        %vm696 = vcmp.eq.s32.totalorder %v417, %v570
        %vm697 = vcmp.eq.s32.totalorder %v417, %v574
        %vm698 = vcmp.eq.s32.totalorder %v417, %v578
        %vm699 = vcmp.eq.s32.totalorder %v418, %v462
        %vm700 = vcmp.eq.s32.totalorder %v418, %v466
        %vm701 = vcmp.eq.s32.totalorder %v418, %v470
        %vm702 = vcmp.eq.s32.totalorder %v418, %v474
        %vm703 = vcmp.eq.s32.totalorder %v418, %v478
        %vm704 = vcmp.eq.s32.totalorder %v418, %v482
        %vm705 = vcmp.eq.s32.totalorder %v418, %v486
        %vm706 = vcmp.eq.s32.totalorder %v418, %v490
        %vm707 = vcmp.eq.s32.totalorder %v418, %v494
        %vm708 = vcmp.eq.s32.totalorder %v418, %v498
        %vm709 = vcmp.eq.s32.totalorder %v418, %v502
        %vm710 = vcmp.eq.s32.totalorder %v418, %v506
        %vm711 = vcmp.eq.s32.totalorder %v418, %v510
        %vm712 = vcmp.eq.s32.totalorder %v418, %v514
        %vm713 = vcmp.eq.s32.totalorder %v418, %v518
        %vm714 = vcmp.eq.s32.totalorder %v418, %v522
        %vm715 = vcmp.eq.s32.totalorder %v418, %v526
        %vm716 = vcmp.eq.s32.totalorder %v418, %v530
        %vm717 = vcmp.eq.s32.totalorder %v418, %v534
        %vm718 = vcmp.eq.s32.totalorder %v418, %v538
        %vm719 = vcmp.eq.s32.totalorder %v418, %v542
        %vm720 = vcmp.eq.s32.totalorder %v418, %v546
        %vm721 = vcmp.eq.s32.totalorder %v418, %v550
        %vm722 = vcmp.eq.s32.totalorder %v418, %v554
        %vm723 = vcmp.eq.s32.totalorder %v418, %v558
        %vm724 = vcmp.eq.s32.totalorder %v418, %v562
        %vm725 = vcmp.eq.s32.totalorder %v418, %v566
        %vm726 = vcmp.eq.s32.totalorder %v418, %v570
        %vm727 = vcmp.eq.s32.totalorder %v418, %v574
        %vm728 = vcmp.eq.s32.totalorder %v418, %v578
        %vm729 = vcmp.eq.s32.totalorder %v419, %v462
        %vm730 = vcmp.eq.s32.totalorder %v419, %v466
        %vm731 = vcmp.eq.s32.totalorder %v419, %v470
        %vm732 = vcmp.eq.s32.totalorder %v419, %v474
        %vm733 = vcmp.eq.s32.totalorder %v419, %v478
        %vm734 = vcmp.eq.s32.totalorder %v419, %v482
        %vm735 = vcmp.eq.s32.totalorder %v419, %v486
        %vm736 = vcmp.eq.s32.totalorder %v419, %v490
        %vm737 = vcmp.eq.s32.totalorder %v419, %v494
        %vm738 = vcmp.eq.s32.totalorder %v419, %v498
        %vm739 = vcmp.eq.s32.totalorder %v419, %v502
        %vm740 = vcmp.eq.s32.totalorder %v419, %v506
        %vm741 = vcmp.eq.s32.totalorder %v419, %v510
        %vm742 = vcmp.eq.s32.totalorder %v419, %v514
        %vm743 = vcmp.eq.s32.totalorder %v419, %v518
        %vm744 = vcmp.eq.s32.totalorder %v419, %v522
        %vm745 = vcmp.eq.s32.totalorder %v419, %v526
        %vm746 = vcmp.eq.s32.totalorder %v419, %v530
        %vm747 = vcmp.eq.s32.totalorder %v419, %v534
        %vm748 = vcmp.eq.s32.totalorder %v419, %v538
        %vm749 = vcmp.eq.s32.totalorder %v419, %v542
        %vm750 = vcmp.eq.s32.totalorder %v419, %v546
        %vm751 = vcmp.eq.s32.totalorder %v419, %v550
        %vm752 = vcmp.eq.s32.totalorder %v419, %v554
        %vm753 = vcmp.eq.s32.totalorder %v419, %v558
        %vm754 = vcmp.eq.s32.totalorder %v419, %v562
        %vm755 = vcmp.eq.s32.totalorder %v419, %v566
        %vm756 = vcmp.eq.s32.totalorder %v419, %v570
        %vm757 = vcmp.eq.s32.totalorder %v419, %v574
        %vm758 = vcmp.eq.s32.totalorder %v419, %v578
        %vm759 = vcmp.eq.s32.totalorder %v420, %v462
        %vm760 = vcmp.eq.s32.totalorder %v420, %v466
        %vm761 = vcmp.eq.s32.totalorder %v420, %v470
        %vm762 = vcmp.eq.s32.totalorder %v420, %v474
        %vm763 = vcmp.eq.s32.totalorder %v420, %v478
        %vm764 = vcmp.eq.s32.totalorder %v420, %v482
        %vm765 = vcmp.eq.s32.totalorder %v420, %v486
        %vm766 = vcmp.eq.s32.totalorder %v420, %v490
        %vm767 = vcmp.eq.s32.totalorder %v420, %v494
        %vm768 = vcmp.eq.s32.totalorder %v420, %v498
        %vm769 = vcmp.eq.s32.totalorder %v420, %v502
        %vm770 = vcmp.eq.s32.totalorder %v420, %v506
        %vm771 = vcmp.eq.s32.totalorder %v420, %v510
        %vm772 = vcmp.eq.s32.totalorder %v420, %v514
        %vm773 = vcmp.eq.s32.totalorder %v420, %v518
        %vm774 = vcmp.eq.s32.totalorder %v420, %v522
        %vm775 = vcmp.eq.s32.totalorder %v420, %v526
        %vm776 = vcmp.eq.s32.totalorder %v420, %v530
        %vm777 = vcmp.eq.s32.totalorder %v420, %v534
        %vm778 = vcmp.eq.s32.totalorder %v420, %v538
        %vm779 = vcmp.eq.s32.totalorder %v420, %v542
        %vm780 = vcmp.eq.s32.totalorder %v420, %v546
        %vm781 = vcmp.eq.s32.totalorder %v420, %v550
        %vm782 = vcmp.eq.s32.totalorder %v420, %v554
        %vm783 = vcmp.eq.s32.totalorder %v420, %v558
        %vm784 = vcmp.eq.s32.totalorder %v420, %v562
        %vm785 = vcmp.eq.s32.totalorder %v420, %v566
        %vm786 = vcmp.eq.s32.totalorder %v420, %v570
        %vm787 = vcmp.eq.s32.totalorder %v420, %v574
        %vm788 = vcmp.eq.s32.totalorder %v420, %v578
        %vm789 = vcmp.eq.s32.totalorder %v421, %v462
        %vm790 = vcmp.eq.s32.totalorder %v421, %v466
        %vm791 = vcmp.eq.s32.totalorder %v421, %v470
        %vm792 = vcmp.eq.s32.totalorder %v421, %v474
        %vm793 = vcmp.eq.s32.totalorder %v421, %v478
        %vm794 = vcmp.eq.s32.totalorder %v421, %v482
        %vm795 = vcmp.eq.s32.totalorder %v421, %v486
        %vm796 = vcmp.eq.s32.totalorder %v421, %v490
        %vm797 = vcmp.eq.s32.totalorder %v421, %v494
        %vm798 = vcmp.eq.s32.totalorder %v421, %v498
        %vm799 = vcmp.eq.s32.totalorder %v421, %v502
        %vm800 = vcmp.eq.s32.totalorder %v421, %v506
        %vm801 = vcmp.eq.s32.totalorder %v421, %v510
        %vm802 = vcmp.eq.s32.totalorder %v421, %v514
        %vm803 = vcmp.eq.s32.totalorder %v421, %v518
        %vm804 = vcmp.eq.s32.totalorder %v421, %v522
        %vm805 = vcmp.eq.s32.totalorder %v421, %v526
        %vm806 = vcmp.eq.s32.totalorder %v421, %v530
        %vm807 = vcmp.eq.s32.totalorder %v421, %v534
        %vm808 = vcmp.eq.s32.totalorder %v421, %v538
        %vm809 = vcmp.eq.s32.totalorder %v421, %v542
        %vm810 = vcmp.eq.s32.totalorder %v421, %v546
        %vm811 = vcmp.eq.s32.totalorder %v421, %v550
        %vm812 = vcmp.eq.s32.totalorder %v421, %v554
        %vm813 = vcmp.eq.s32.totalorder %v421, %v558
        %vm814 = vcmp.eq.s32.totalorder %v421, %v562
        %vm815 = vcmp.eq.s32.totalorder %v421, %v566
        %vm816 = vcmp.eq.s32.totalorder %v421, %v570
        %vm817 = vcmp.eq.s32.totalorder %v421, %v574
        %vm818 = vcmp.eq.s32.totalorder %v421, %v578
        %vm819 = vcmp.eq.s32.totalorder %v422, %v462
        %vm820 = vcmp.eq.s32.totalorder %v422, %v466
        %vm821 = vcmp.eq.s32.totalorder %v422, %v470
        %vm822 = vcmp.eq.s32.totalorder %v422, %v474
        %vm823 = vcmp.eq.s32.totalorder %v422, %v478
        %vm824 = vcmp.eq.s32.totalorder %v422, %v482
        %vm825 = vcmp.eq.s32.totalorder %v422, %v486
        %vm826 = vcmp.eq.s32.totalorder %v422, %v490
        %vm827 = vcmp.eq.s32.totalorder %v422, %v494
        %vm828 = vcmp.eq.s32.totalorder %v422, %v498
        %vm829 = vcmp.eq.s32.totalorder %v422, %v502
        %vm830 = vcmp.eq.s32.totalorder %v422, %v506
        %vm831 = vcmp.eq.s32.totalorder %v422, %v510
        %vm832 = vcmp.eq.s32.totalorder %v422, %v514
        %vm833 = vcmp.eq.s32.totalorder %v422, %v518
        %vm834 = vcmp.eq.s32.totalorder %v422, %v522
        %vm835 = vcmp.eq.s32.totalorder %v422, %v526
        %vm836 = vcmp.eq.s32.totalorder %v422, %v530
        %vm837 = vcmp.eq.s32.totalorder %v422, %v534
        %vm838 = vcmp.eq.s32.totalorder %v422, %v538
        %vm839 = vcmp.eq.s32.totalorder %v422, %v542
        %vm840 = vcmp.eq.s32.totalorder %v422, %v546
        %vm841 = vcmp.eq.s32.totalorder %v422, %v550
        %vm842 = vcmp.eq.s32.totalorder %v422, %v554
        %vm843 = vcmp.eq.s32.totalorder %v422, %v558
        %vm844 = vcmp.eq.s32.totalorder %v422, %v562
        %vm845 = vcmp.eq.s32.totalorder %v422, %v566
        %vm846 = vcmp.eq.s32.totalorder %v422, %v570
        %vm847 = vcmp.eq.s32.totalorder %v422, %v574
        %vm848 = vcmp.eq.s32.totalorder %v422, %v578
        %vm849 = vcmp.eq.s32.totalorder %v423, %v462
        %vm850 = vcmp.eq.s32.totalorder %v423, %v466
        %vm851 = vcmp.eq.s32.totalorder %v423, %v470
        %vm852 = vcmp.eq.s32.totalorder %v423, %v474
        %vm853 = vcmp.eq.s32.totalorder %v423, %v478
        %vm854 = vcmp.eq.s32.totalorder %v423, %v482
        %vm855 = vcmp.eq.s32.totalorder %v423, %v486
        %vm856 = vcmp.eq.s32.totalorder %v423, %v490
        %vm857 = vcmp.eq.s32.totalorder %v423, %v494
        %vm858 = vcmp.eq.s32.totalorder %v423, %v498
        %vm859 = vcmp.eq.s32.totalorder %v423, %v502
        %vm860 = vcmp.eq.s32.totalorder %v423, %v506
        %vm861 = vcmp.eq.s32.totalorder %v423, %v510
        %vm862 = vcmp.eq.s32.totalorder %v423, %v514
        %vm863 = vcmp.eq.s32.totalorder %v423, %v518
        %vm864 = vcmp.eq.s32.totalorder %v423, %v522
        %vm865 = vcmp.eq.s32.totalorder %v423, %v526
        %vm866 = vcmp.eq.s32.totalorder %v423, %v530
        %vm867 = vcmp.eq.s32.totalorder %v423, %v534
        %vm868 = vcmp.eq.s32.totalorder %v423, %v538
        %vm869 = vcmp.eq.s32.totalorder %v423, %v542
        %vm870 = vcmp.eq.s32.totalorder %v423, %v546
        %vm871 = vcmp.eq.s32.totalorder %v423, %v550
        %vm872 = vcmp.eq.s32.totalorder %v423, %v554
        %vm873 = vcmp.eq.s32.totalorder %v423, %v558
        %vm874 = vcmp.eq.s32.totalorder %v423, %v562
        %vm875 = vcmp.eq.s32.totalorder %v423, %v566
        %vm876 = vcmp.eq.s32.totalorder %v423, %v570
        %vm877 = vcmp.eq.s32.totalorder %v423, %v574
        %vm878 = vcmp.eq.s32.totalorder %v423, %v578
        %vm879 = vcmp.eq.s32.totalorder %v424, %v462
        %vm880 = vcmp.eq.s32.totalorder %v424, %v466
        %vm881 = vcmp.eq.s32.totalorder %v424, %v470
        %vm882 = vcmp.eq.s32.totalorder %v424, %v474
        %vm883 = vcmp.eq.s32.totalorder %v424, %v478
        %vm884 = vcmp.eq.s32.totalorder %v424, %v482
        %vm885 = vcmp.eq.s32.totalorder %v424, %v486
        %vm886 = vcmp.eq.s32.totalorder %v424, %v490
        %vm887 = vcmp.eq.s32.totalorder %v424, %v494
        %vm888 = vcmp.eq.s32.totalorder %v424, %v498
        %vm889 = vcmp.eq.s32.totalorder %v424, %v502
        %vm890 = vcmp.eq.s32.totalorder %v424, %v506
        %vm891 = vcmp.eq.s32.totalorder %v424, %v510
        %vm892 = vcmp.eq.s32.totalorder %v424, %v514
        %vm893 = vcmp.eq.s32.totalorder %v424, %v518
        %vm894 = vcmp.eq.s32.totalorder %v424, %v522
        %vm895 = vcmp.eq.s32.totalorder %v424, %v526
        %vm896 = vcmp.eq.s32.totalorder %v424, %v530
        %vm897 = vcmp.eq.s32.totalorder %v424, %v534
        %vm898 = vcmp.eq.s32.totalorder %v424, %v538
        %vm899 = vcmp.eq.s32.totalorder %v424, %v542
        %vm900 = vcmp.eq.s32.totalorder %v424, %v546
        %vm901 = vcmp.eq.s32.totalorder %v424, %v550
        %vm902 = vcmp.eq.s32.totalorder %v424, %v554
        %vm903 = vcmp.eq.s32.totalorder %v424, %v558
        %vm904 = vcmp.eq.s32.totalorder %v424, %v562
        %vm905 = vcmp.eq.s32.totalorder %v424, %v566
        %vm906 = vcmp.eq.s32.totalorder %v424, %v570
        %vm907 = vcmp.eq.s32.totalorder %v424, %v574
        %vm908 = vcmp.eq.s32.totalorder %v424, %v578
        %vm909 = vcmp.eq.s32.totalorder %v425, %v462
        %vm910 = vcmp.eq.s32.totalorder %v425, %v466
        %vm911 = vcmp.eq.s32.totalorder %v425, %v470
        %vm912 = vcmp.eq.s32.totalorder %v425, %v474
        %vm913 = vcmp.eq.s32.totalorder %v425, %v478
        %vm914 = vcmp.eq.s32.totalorder %v425, %v482
        %vm915 = vcmp.eq.s32.totalorder %v425, %v486
        %vm916 = vcmp.eq.s32.totalorder %v425, %v490
        %vm917 = vcmp.eq.s32.totalorder %v425, %v494
        %vm918 = vcmp.eq.s32.totalorder %v425, %v498
        %vm919 = vcmp.eq.s32.totalorder %v425, %v502
        %vm920 = vcmp.eq.s32.totalorder %v425, %v506
        %vm921 = vcmp.eq.s32.totalorder %v425, %v510
        %vm922 = vcmp.eq.s32.totalorder %v425, %v514
        %vm923 = vcmp.eq.s32.totalorder %v425, %v518
        %vm924 = vcmp.eq.s32.totalorder %v425, %v522
        %vm925 = vcmp.eq.s32.totalorder %v425, %v526
        %vm926 = vcmp.eq.s32.totalorder %v425, %v530
        %vm927 = vcmp.eq.s32.totalorder %v425, %v534
        %vm928 = vcmp.eq.s32.totalorder %v425, %v538
        %vm929 = vcmp.eq.s32.totalorder %v425, %v542
        %vm930 = vcmp.eq.s32.totalorder %v425, %v546
        %vm931 = vcmp.eq.s32.totalorder %v425, %v550
        %vm932 = vcmp.eq.s32.totalorder %v425, %v554
        %vm933 = vcmp.eq.s32.totalorder %v425, %v558
        %vm934 = vcmp.eq.s32.totalorder %v425, %v562
        %vm935 = vcmp.eq.s32.totalorder %v425, %v566
        %vm936 = vcmp.eq.s32.totalorder %v425, %v570
        %vm937 = vcmp.eq.s32.totalorder %v425, %v574
        %vm938 = vcmp.eq.s32.totalorder %v425, %v578
        %vm939 = vcmp.eq.s32.totalorder %v426, %v462
        %vm940 = vcmp.eq.s32.totalorder %v426, %v466
        %vm941 = vcmp.eq.s32.totalorder %v426, %v470
        %vm942 = vcmp.eq.s32.totalorder %v426, %v474
        %vm943 = vcmp.eq.s32.totalorder %v426, %v478
        %vm944 = vcmp.eq.s32.totalorder %v426, %v482
        %vm945 = vcmp.eq.s32.totalorder %v426, %v486
        %vm946 = vcmp.eq.s32.totalorder %v426, %v490
        %vm947 = vcmp.eq.s32.totalorder %v426, %v494
        %vm948 = vcmp.eq.s32.totalorder %v426, %v498
        %vm949 = vcmp.eq.s32.totalorder %v426, %v502
        %vm950 = vcmp.eq.s32.totalorder %v426, %v506
        %vm951 = vcmp.eq.s32.totalorder %v426, %v510
        %vm952 = vcmp.eq.s32.totalorder %v426, %v514
        %vm953 = vcmp.eq.s32.totalorder %v426, %v518
        %vm954 = vcmp.eq.s32.totalorder %v426, %v522
        %vm955 = vcmp.eq.s32.totalorder %v426, %v526
        %vm956 = vcmp.eq.s32.totalorder %v426, %v530
        %vm957 = vcmp.eq.s32.totalorder %v426, %v534
        %vm958 = vcmp.eq.s32.totalorder %v426, %v538
        %vm959 = vcmp.eq.s32.totalorder %v426, %v542
        %vm960 = vcmp.eq.s32.totalorder %v426, %v546
        %vm961 = vcmp.eq.s32.totalorder %v426, %v550
        %vm962 = vcmp.eq.s32.totalorder %v426, %v554
        %vm963 = vcmp.eq.s32.totalorder %v426, %v558
        %vm964 = vcmp.eq.s32.totalorder %v426, %v562
        %vm965 = vcmp.eq.s32.totalorder %v426, %v566
        %vm966 = vcmp.eq.s32.totalorder %v426, %v570
        %vm967 = vcmp.eq.s32.totalorder %v426, %v574
        %vm968 = vcmp.eq.s32.totalorder %v426, %v578
        %vm969 = vcmp.eq.s32.totalorder %v427, %v462
        %vm970 = vcmp.eq.s32.totalorder %v427, %v466
        %vm971 = vcmp.eq.s32.totalorder %v427, %v470
        %vm972 = vcmp.eq.s32.totalorder %v427, %v474
        %vm973 = vcmp.eq.s32.totalorder %v427, %v478
        %vm974 = vcmp.eq.s32.totalorder %v427, %v482
        %vm975 = vcmp.eq.s32.totalorder %v427, %v486
        %vm976 = vcmp.eq.s32.totalorder %v427, %v490
        %vm977 = vcmp.eq.s32.totalorder %v427, %v494
        %vm978 = vcmp.eq.s32.totalorder %v427, %v498
        %vm979 = vcmp.eq.s32.totalorder %v427, %v502
        %vm980 = vcmp.eq.s32.totalorder %v427, %v506
        %vm981 = vcmp.eq.s32.totalorder %v427, %v510
        %vm982 = vcmp.eq.s32.totalorder %v427, %v514
        %vm983 = vcmp.eq.s32.totalorder %v427, %v518
        %vm984 = vcmp.eq.s32.totalorder %v427, %v522
        %vm985 = vcmp.eq.s32.totalorder %v427, %v526
        %vm986 = vcmp.eq.s32.totalorder %v427, %v530
        %vm987 = vcmp.eq.s32.totalorder %v427, %v534
        %vm988 = vcmp.eq.s32.totalorder %v427, %v538
        %vm989 = vcmp.eq.s32.totalorder %v427, %v542
        %vm990 = vcmp.eq.s32.totalorder %v427, %v546
        %vm991 = vcmp.eq.s32.totalorder %v427, %v550
        %vm992 = vcmp.eq.s32.totalorder %v427, %v554
        %vm993 = vcmp.eq.s32.totalorder %v427, %v558
        %vm994 = vcmp.eq.s32.totalorder %v427, %v562
        %vm995 = vcmp.eq.s32.totalorder %v427, %v566
        %vm996 = vcmp.eq.s32.totalorder %v427, %v570
        %vm997 = vcmp.eq.s32.totalorder %v427, %v574
        %vm998 = vcmp.eq.s32.totalorder %v427, %v578
        %vm999 = vcmp.eq.s32.totalorder %v428, %v462
        %vm1000 = vcmp.eq.s32.totalorder %v428, %v466
        %vm1001 = vcmp.eq.s32.totalorder %v428, %v470
        %vm1002 = vcmp.eq.s32.totalorder %v428, %v474
        %vm1003 = vcmp.eq.s32.totalorder %v428, %v478
        %vm1004 = vcmp.eq.s32.totalorder %v428, %v482
        %vm1005 = vcmp.eq.s32.totalorder %v428, %v486
        %vm1006 = vcmp.eq.s32.totalorder %v428, %v490
        %vm1007 = vcmp.eq.s32.totalorder %v428, %v494
        %vm1008 = vcmp.eq.s32.totalorder %v428, %v498
        %vm1009 = vcmp.eq.s32.totalorder %v428, %v502
        %vm1010 = vcmp.eq.s32.totalorder %v428, %v506
        %vm1011 = vcmp.eq.s32.totalorder %v428, %v510
        %vm1012 = vcmp.eq.s32.totalorder %v428, %v514
        %vm1013 = vcmp.eq.s32.totalorder %v428, %v518
        %vm1014 = vcmp.eq.s32.totalorder %v428, %v522
        %vm1015 = vcmp.eq.s32.totalorder %v428, %v526
        %vm1016 = vcmp.eq.s32.totalorder %v428, %v530
        %vm1017 = vcmp.eq.s32.totalorder %v428, %v534
        %vm1018 = vcmp.eq.s32.totalorder %v428, %v538
        %vm1019 = vcmp.eq.s32.totalorder %v428, %v542
        %vm1020 = vcmp.eq.s32.totalorder %v428, %v546
        %vm1021 = vcmp.eq.s32.totalorder %v428, %v550
        %vm1022 = vcmp.eq.s32.totalorder %v428, %v554
        %vm1023 = vcmp.eq.s32.totalorder %v428, %v558
        %vm1024 = vcmp.eq.s32.totalorder %v428, %v562
        %vm1025 = vcmp.eq.s32.totalorder %v428, %v566
        %vm1026 = vcmp.eq.s32.totalorder %v428, %v570
        %vm1027 = vcmp.eq.s32.totalorder %v428, %v574
        %vm1028 = vcmp.eq.s32.totalorder %v428, %v578
        %vm1029 = vcmp.eq.s32.totalorder %v429, %v462
        %vm1030 = vcmp.eq.s32.totalorder %v429, %v466
        %vm1031 = vcmp.eq.s32.totalorder %v429, %v470
        %vm1032 = vcmp.eq.s32.totalorder %v429, %v474
        %vm1033 = vcmp.eq.s32.totalorder %v429, %v478
        %vm1034 = vcmp.eq.s32.totalorder %v429, %v482
        %vm1035 = vcmp.eq.s32.totalorder %v429, %v486
        %vm1036 = vcmp.eq.s32.totalorder %v429, %v490
        %vm1037 = vcmp.eq.s32.totalorder %v429, %v494
        %vm1038 = vcmp.eq.s32.totalorder %v429, %v498
        %vm1039 = vcmp.eq.s32.totalorder %v429, %v502
        %vm1040 = vcmp.eq.s32.totalorder %v429, %v506
        %vm1041 = vcmp.eq.s32.totalorder %v429, %v510
        %vm1042 = vcmp.eq.s32.totalorder %v429, %v514
        %vm1043 = vcmp.eq.s32.totalorder %v429, %v518
        %vm1044 = vcmp.eq.s32.totalorder %v429, %v522
        %vm1045 = vcmp.eq.s32.totalorder %v429, %v526
        %vm1046 = vcmp.eq.s32.totalorder %v429, %v530
        %vm1047 = vcmp.eq.s32.totalorder %v429, %v534
        %vm1048 = vcmp.eq.s32.totalorder %v429, %v538
        %vm1049 = vcmp.eq.s32.totalorder %v429, %v542
        %vm1050 = vcmp.eq.s32.totalorder %v429, %v546
        %vm1051 = vcmp.eq.s32.totalorder %v429, %v550
        %vm1052 = vcmp.eq.s32.totalorder %v429, %v554
        %vm1053 = vcmp.eq.s32.totalorder %v429, %v558
        %vm1054 = vcmp.eq.s32.totalorder %v429, %v562
        %vm1055 = vcmp.eq.s32.totalorder %v429, %v566
        %vm1056 = vcmp.eq.s32.totalorder %v429, %v570
        %vm1057 = vcmp.eq.s32.totalorder %v429, %v574
        %vm1058 = vcmp.eq.s32.totalorder %v429, %v578
        %vm1059 = vcmp.eq.s32.totalorder %v430, %v462
        %vm1060 = vcmp.eq.s32.totalorder %v430, %v466
        %vm1061 = vcmp.eq.s32.totalorder %v430, %v470
        %vm1062 = vcmp.eq.s32.totalorder %v430, %v474
        %vm1063 = vcmp.eq.s32.totalorder %v430, %v478
        %vm1064 = vcmp.eq.s32.totalorder %v430, %v482
        %vm1065 = vcmp.eq.s32.totalorder %v430, %v486
        %vm1066 = vcmp.eq.s32.totalorder %v430, %v490
        %vm1067 = vcmp.eq.s32.totalorder %v430, %v494
        %vm1068 = vcmp.eq.s32.totalorder %v430, %v498
        %vm1069 = vcmp.eq.s32.totalorder %v430, %v502
        %vm1070 = vcmp.eq.s32.totalorder %v430, %v506
        %vm1071 = vcmp.eq.s32.totalorder %v430, %v510
        %vm1072 = vcmp.eq.s32.totalorder %v430, %v514
        %vm1073 = vcmp.eq.s32.totalorder %v430, %v518
        %vm1074 = vcmp.eq.s32.totalorder %v430, %v522
        %vm1075 = vcmp.eq.s32.totalorder %v430, %v526
        %vm1076 = vcmp.eq.s32.totalorder %v430, %v530
        %vm1077 = vcmp.eq.s32.totalorder %v430, %v534
        %vm1078 = vcmp.eq.s32.totalorder %v430, %v538
        %vm1079 = vcmp.eq.s32.totalorder %v430, %v542
        %vm1080 = vcmp.eq.s32.totalorder %v430, %v546
        %vm1081 = vcmp.eq.s32.totalorder %v430, %v550
        %vm1082 = vcmp.eq.s32.totalorder %v430, %v554
        %vm1083 = vcmp.eq.s32.totalorder %v430, %v558
        %vm1084 = vcmp.eq.s32.totalorder %v430, %v562
        %vm1085 = vcmp.eq.s32.totalorder %v430, %v566
        %vm1086 = vcmp.eq.s32.totalorder %v430, %v570
        %vm1087 = vcmp.eq.s32.totalorder %v430, %v574
        %vm1088 = vcmp.eq.s32.totalorder %v430, %v578
        %vm1089 = vcmp.eq.s32.totalorder %v431, %v462
        %vm1090 = vcmp.eq.s32.totalorder %v431, %v466
        %vm1091 = vcmp.eq.s32.totalorder %v431, %v470
        %vm1092 = vcmp.eq.s32.totalorder %v431, %v474
        %vm1093 = vcmp.eq.s32.totalorder %v431, %v478
        %vm1094 = vcmp.eq.s32.totalorder %v431, %v482
        %vm1095 = vcmp.eq.s32.totalorder %v431, %v486
        %vm1096 = vcmp.eq.s32.totalorder %v431, %v490
        %vm1097 = vcmp.eq.s32.totalorder %v431, %v494
        %vm1098 = vcmp.eq.s32.totalorder %v431, %v498
        %vm1099 = vcmp.eq.s32.totalorder %v431, %v502
        %vm1100 = vcmp.eq.s32.totalorder %v431, %v506
        %vm1101 = vcmp.eq.s32.totalorder %v431, %v510
        %vm1102 = vcmp.eq.s32.totalorder %v431, %v514
        %vm1103 = vcmp.eq.s32.totalorder %v431, %v518
        %vm1104 = vcmp.eq.s32.totalorder %v431, %v522
        %vm1105 = vcmp.eq.s32.totalorder %v431, %v526
        %vm1106 = vcmp.eq.s32.totalorder %v431, %v530
        %vm1107 = vcmp.eq.s32.totalorder %v431, %v534
        %vm1108 = vcmp.eq.s32.totalorder %v431, %v538
        %vm1109 = vcmp.eq.s32.totalorder %v431, %v542
        %vm1110 = vcmp.eq.s32.totalorder %v431, %v546
        %vm1111 = vcmp.eq.s32.totalorder %v431, %v550
        %vm1112 = vcmp.eq.s32.totalorder %v431, %v554
        %vm1113 = vcmp.eq.s32.totalorder %v431, %v558
        %vm1114 = vcmp.eq.s32.totalorder %v431, %v562
        %vm1115 = vcmp.eq.s32.totalorder %v431, %v566
        %vm1116 = vcmp.eq.s32.totalorder %v431, %v570
        %vm1117 = vcmp.eq.s32.totalorder %v431, %v574
        %vm1118 = vcmp.eq.s32.totalorder %v431, %v578
        %vm1119 = vcmp.eq.s32.totalorder %v432, %v462
        %vm1120 = vcmp.eq.s32.totalorder %v432, %v466
        %vm1121 = vcmp.eq.s32.totalorder %v432, %v470
        %vm1122 = vcmp.eq.s32.totalorder %v432, %v474
        %vm1123 = vcmp.eq.s32.totalorder %v432, %v478
        %vm1124 = vcmp.eq.s32.totalorder %v432, %v482
        %vm1125 = vcmp.eq.s32.totalorder %v432, %v486
        %vm1126 = vcmp.eq.s32.totalorder %v432, %v490
        %vm1127 = vcmp.eq.s32.totalorder %v432, %v494
        %vm1128 = vcmp.eq.s32.totalorder %v432, %v498
        %vm1129 = vcmp.eq.s32.totalorder %v432, %v502
        %vm1130 = vcmp.eq.s32.totalorder %v432, %v506
        %vm1131 = vcmp.eq.s32.totalorder %v432, %v510
        %vm1132 = vcmp.eq.s32.totalorder %v432, %v514
        %vm1133 = vcmp.eq.s32.totalorder %v432, %v518
        %vm1134 = vcmp.eq.s32.totalorder %v432, %v522
        %vm1135 = vcmp.eq.s32.totalorder %v432, %v526
        %vm1136 = vcmp.eq.s32.totalorder %v432, %v530
        %vm1137 = vcmp.eq.s32.totalorder %v432, %v534
        %vm1138 = vcmp.eq.s32.totalorder %v432, %v538
        %vm1139 = vcmp.eq.s32.totalorder %v432, %v542
        %vm1140 = vcmp.eq.s32.totalorder %v432, %v546
        %vm1141 = vcmp.eq.s32.totalorder %v432, %v550
        %vm1142 = vcmp.eq.s32.totalorder %v432, %v554
        %vm1143 = vcmp.eq.s32.totalorder %v432, %v558
        %vm1144 = vcmp.eq.s32.totalorder %v432, %v562
        %vm1145 = vcmp.eq.s32.totalorder %v432, %v566
        %vm1146 = vcmp.eq.s32.totalorder %v432, %v570
        %vm1147 = vcmp.eq.s32.totalorder %v432, %v574
        %vm1148 = vcmp.eq.s32.totalorder %v432, %v578
        %vm1149 = vcmp.eq.s32.totalorder %v433, %v462
        %vm1150 = vcmp.eq.s32.totalorder %v433, %v466
        %vm1151 = vcmp.eq.s32.totalorder %v433, %v470
        %vm1152 = vcmp.eq.s32.totalorder %v433, %v474
        %vm1153 = vcmp.eq.s32.totalorder %v433, %v478
        %vm1154 = vcmp.eq.s32.totalorder %v433, %v482
        %vm1155 = vcmp.eq.s32.totalorder %v433, %v486
        %vm1156 = vcmp.eq.s32.totalorder %v433, %v490
        %vm1157 = vcmp.eq.s32.totalorder %v433, %v494
        %vm1158 = vcmp.eq.s32.totalorder %v433, %v498
        %vm1159 = vcmp.eq.s32.totalorder %v433, %v502
        %vm1160 = vcmp.eq.s32.totalorder %v433, %v506
        %vm1161 = vcmp.eq.s32.totalorder %v433, %v510
        %vm1162 = vcmp.eq.s32.totalorder %v433, %v514
        %vm1163 = vcmp.eq.s32.totalorder %v433, %v518
        %vm1164 = vcmp.eq.s32.totalorder %v433, %v522
        %vm1165 = vcmp.eq.s32.totalorder %v433, %v526
        %vm1166 = vcmp.eq.s32.totalorder %v433, %v530
        %vm1167 = vcmp.eq.s32.totalorder %v433, %v534
        %vm1168 = vcmp.eq.s32.totalorder %v433, %v538
        %vm1169 = vcmp.eq.s32.totalorder %v433, %v542
        %vm1170 = vcmp.eq.s32.totalorder %v433, %v546
        %vm1171 = vcmp.eq.s32.totalorder %v433, %v550
        %vm1172 = vcmp.eq.s32.totalorder %v433, %v554
        %vm1173 = vcmp.eq.s32.totalorder %v433, %v558
        %vm1174 = vcmp.eq.s32.totalorder %v433, %v562
        %vm1175 = vcmp.eq.s32.totalorder %v433, %v566
        %vm1176 = vcmp.eq.s32.totalorder %v433, %v570
        %vm1177 = vcmp.eq.s32.totalorder %v433, %v574
        %vm1178 = vcmp.eq.s32.totalorder %v433, %v578
        %vm1179 = vcmp.eq.s32.totalorder %v434, %v462
        %vm1180 = vcmp.eq.s32.totalorder %v434, %v466
        %vm1181 = vcmp.eq.s32.totalorder %v434, %v470
        %vm1182 = vcmp.eq.s32.totalorder %v434, %v474
        %vm1183 = vcmp.eq.s32.totalorder %v434, %v478
        %vm1184 = vcmp.eq.s32.totalorder %v434, %v482
        %vm1185 = vcmp.eq.s32.totalorder %v434, %v486
        %vm1186 = vcmp.eq.s32.totalorder %v434, %v490
        %vm1187 = vcmp.eq.s32.totalorder %v434, %v494
        %vm1188 = vcmp.eq.s32.totalorder %v434, %v498
        %vm1189 = vcmp.eq.s32.totalorder %v434, %v502
        %vm1190 = vcmp.eq.s32.totalorder %v434, %v506
        %vm1191 = vcmp.eq.s32.totalorder %v434, %v510
        %vm1192 = vcmp.eq.s32.totalorder %v434, %v514
        %vm1193 = vcmp.eq.s32.totalorder %v434, %v518
        %vm1194 = vcmp.eq.s32.totalorder %v434, %v522
        %vm1195 = vcmp.eq.s32.totalorder %v434, %v526
        %vm1196 = vcmp.eq.s32.totalorder %v434, %v530
        %vm1197 = vcmp.eq.s32.totalorder %v434, %v534
        %vm1198 = vcmp.eq.s32.totalorder %v434, %v538
        %vm1199 = vcmp.eq.s32.totalorder %v434, %v542
        %vm1200 = vcmp.eq.s32.totalorder %v434, %v546
        %vm1201 = vcmp.eq.s32.totalorder %v434, %v550
        %vm1202 = vcmp.eq.s32.totalorder %v434, %v554
        %vm1203 = vcmp.eq.s32.totalorder %v434, %v558
        %vm1204 = vcmp.eq.s32.totalorder %v434, %v562
        %vm1205 = vcmp.eq.s32.totalorder %v434, %v566
        %vm1206 = vcmp.eq.s32.totalorder %v434, %v570
        %vm1207 = vcmp.eq.s32.totalorder %v434, %v574
        %vm1208 = vcmp.eq.s32.totalorder %v434, %v578
        %vm1209 = vcmp.eq.s32.totalorder %v435, %v462
        %vm1210 = vcmp.eq.s32.totalorder %v435, %v466
        %vm1211 = vcmp.eq.s32.totalorder %v435, %v470
        %vm1212 = vcmp.eq.s32.totalorder %v435, %v474
        %vm1213 = vcmp.eq.s32.totalorder %v435, %v478
        %vm1214 = vcmp.eq.s32.totalorder %v435, %v482
        %vm1215 = vcmp.eq.s32.totalorder %v435, %v486
        %vm1216 = vcmp.eq.s32.totalorder %v435, %v490
        %vm1217 = vcmp.eq.s32.totalorder %v435, %v494
        %vm1218 = vcmp.eq.s32.totalorder %v435, %v498
        %vm1219 = vcmp.eq.s32.totalorder %v435, %v502
        %vm1220 = vcmp.eq.s32.totalorder %v435, %v506
        %vm1221 = vcmp.eq.s32.totalorder %v435, %v510
        %vm1222 = vcmp.eq.s32.totalorder %v435, %v514
        %vm1223 = vcmp.eq.s32.totalorder %v435, %v518
        %vm1224 = vcmp.eq.s32.totalorder %v435, %v522
        %vm1225 = vcmp.eq.s32.totalorder %v435, %v526
        %vm1226 = vcmp.eq.s32.totalorder %v435, %v530
        %vm1227 = vcmp.eq.s32.totalorder %v435, %v534
        %vm1228 = vcmp.eq.s32.totalorder %v435, %v538
        %vm1229 = vcmp.eq.s32.totalorder %v435, %v542
        %vm1230 = vcmp.eq.s32.totalorder %v435, %v546
        %vm1231 = vcmp.eq.s32.totalorder %v435, %v550
        %vm1232 = vcmp.eq.s32.totalorder %v435, %v554
        %vm1233 = vcmp.eq.s32.totalorder %v435, %v558
        %vm1234 = vcmp.eq.s32.totalorder %v435, %v562
        %vm1235 = vcmp.eq.s32.totalorder %v435, %v566
        %vm1236 = vcmp.eq.s32.totalorder %v435, %v570
        %vm1237 = vcmp.eq.s32.totalorder %v435, %v574
        %vm1238 = vcmp.eq.s32.totalorder %v435, %v578
        %vm1239 = vcmp.eq.s32.totalorder %v436, %v462
        %vm1240 = vcmp.eq.s32.totalorder %v436, %v466
        %vm1241 = vcmp.eq.s32.totalorder %v436, %v470
        %vm1242 = vcmp.eq.s32.totalorder %v436, %v474
        %vm1243 = vcmp.eq.s32.totalorder %v436, %v478
        %vm1244 = vcmp.eq.s32.totalorder %v436, %v482
        %vm1245 = vcmp.eq.s32.totalorder %v436, %v486
        %vm1246 = vcmp.eq.s32.totalorder %v436, %v490
        %vm1247 = vcmp.eq.s32.totalorder %v436, %v494
        %vm1248 = vcmp.eq.s32.totalorder %v436, %v498
        %vm1249 = vcmp.eq.s32.totalorder %v436, %v502
        %vm1250 = vcmp.eq.s32.totalorder %v436, %v506
        %vm1251 = vcmp.eq.s32.totalorder %v436, %v510
        %vm1252 = vcmp.eq.s32.totalorder %v436, %v514
        %vm1253 = vcmp.eq.s32.totalorder %v436, %v518
        %vm1254 = vcmp.eq.s32.totalorder %v436, %v522
        %vm1255 = vcmp.eq.s32.totalorder %v436, %v526
        %vm1256 = vcmp.eq.s32.totalorder %v436, %v530
        %vm1257 = vcmp.eq.s32.totalorder %v436, %v534
        %vm1258 = vcmp.eq.s32.totalorder %v436, %v538
        %vm1259 = vcmp.eq.s32.totalorder %v436, %v542
        %vm1260 = vcmp.eq.s32.totalorder %v436, %v546
        %vm1261 = vcmp.eq.s32.totalorder %v436, %v550
        %vm1262 = vcmp.eq.s32.totalorder %v436, %v554
        %vm1263 = vcmp.eq.s32.totalorder %v436, %v558
        %vm1264 = vcmp.eq.s32.totalorder %v436, %v562
        %vm1265 = vcmp.eq.s32.totalorder %v436, %v566
        %vm1266 = vcmp.eq.s32.totalorder %v436, %v570
        %vm1267 = vcmp.eq.s32.totalorder %v436, %v574
        %vm1268 = vcmp.eq.s32.totalorder %v436, %v578
        %vm1269 = vcmp.eq.s32.totalorder %v437, %v462
        %vm1270 = vcmp.eq.s32.totalorder %v437, %v466
        %vm1271 = vcmp.eq.s32.totalorder %v437, %v470
        %vm1272 = vcmp.eq.s32.totalorder %v437, %v474
        %vm1273 = vcmp.eq.s32.totalorder %v437, %v478
        %vm1274 = vcmp.eq.s32.totalorder %v437, %v482
        %vm1275 = vcmp.eq.s32.totalorder %v437, %v486
        %vm1276 = vcmp.eq.s32.totalorder %v437, %v490
        %vm1277 = vcmp.eq.s32.totalorder %v437, %v494
        %vm1278 = vcmp.eq.s32.totalorder %v437, %v498
        %vm1279 = vcmp.eq.s32.totalorder %v437, %v502
        %vm1280 = vcmp.eq.s32.totalorder %v437, %v506
        %vm1281 = vcmp.eq.s32.totalorder %v437, %v510
        %vm1282 = vcmp.eq.s32.totalorder %v437, %v514
        %vm1283 = vcmp.eq.s32.totalorder %v437, %v518
        %vm1284 = vcmp.eq.s32.totalorder %v437, %v522
        %vm1285 = vcmp.eq.s32.totalorder %v437, %v526
        %vm1286 = vcmp.eq.s32.totalorder %v437, %v530
        %vm1287 = vcmp.eq.s32.totalorder %v437, %v534
        %vm1288 = vcmp.eq.s32.totalorder %v437, %v538
        %vm1289 = vcmp.eq.s32.totalorder %v437, %v542
        %vm1290 = vcmp.eq.s32.totalorder %v437, %v546
        %vm1291 = vcmp.eq.s32.totalorder %v437, %v550
        %vm1292 = vcmp.eq.s32.totalorder %v437, %v554
        %vm1293 = vcmp.eq.s32.totalorder %v437, %v558
        %vm1294 = vcmp.eq.s32.totalorder %v437, %v562
        %vm1295 = vcmp.eq.s32.totalorder %v437, %v566
        %vm1296 = vcmp.eq.s32.totalorder %v437, %v570
        %vm1297 = vcmp.eq.s32.totalorder %v437, %v574
        %vm1298 = vcmp.eq.s32.totalorder %v437, %v578
        %vm1299 = vcmp.eq.s32.totalorder %v438, %v462
        %vm1300 = vcmp.eq.s32.totalorder %v438, %v466
        %vm1301 = vcmp.eq.s32.totalorder %v438, %v470
        %vm1302 = vcmp.eq.s32.totalorder %v438, %v474
        %vm1303 = vcmp.eq.s32.totalorder %v438, %v478
        %vm1304 = vcmp.eq.s32.totalorder %v438, %v482
        %vm1305 = vcmp.eq.s32.totalorder %v438, %v486
        %vm1306 = vcmp.eq.s32.totalorder %v438, %v490
        %vm1307 = vcmp.eq.s32.totalorder %v438, %v494
        %vm1308 = vcmp.eq.s32.totalorder %v438, %v498
        %vm1309 = vcmp.eq.s32.totalorder %v438, %v502
        %vm1310 = vcmp.eq.s32.totalorder %v438, %v506
        %vm1311 = vcmp.eq.s32.totalorder %v438, %v510
        %vm1312 = vcmp.eq.s32.totalorder %v438, %v514
        %vm1313 = vcmp.eq.s32.totalorder %v438, %v518
        %vm1314 = vcmp.eq.s32.totalorder %v438, %v522
        %vm1315 = vcmp.eq.s32.totalorder %v438, %v526
        %vm1316 = vcmp.eq.s32.totalorder %v438, %v530
        %vm1317 = vcmp.eq.s32.totalorder %v438, %v534
        %vm1318 = vcmp.eq.s32.totalorder %v438, %v538
        %vm1319 = vcmp.eq.s32.totalorder %v438, %v542
        %vm1320 = vcmp.eq.s32.totalorder %v438, %v546
        %vm1321 = vcmp.eq.s32.totalorder %v438, %v550
        %vm1322 = vcmp.eq.s32.totalorder %v438, %v554
        %vm1323 = vcmp.eq.s32.totalorder %v438, %v558
        %vm1324 = vcmp.eq.s32.totalorder %v438, %v562
        %vm1325 = vcmp.eq.s32.totalorder %v438, %v566
        %vm1326 = vcmp.eq.s32.totalorder %v438, %v570
        %vm1327 = vcmp.eq.s32.totalorder %v438, %v574
        %vm1328 = vcmp.eq.s32.totalorder %v438, %v578
        %vm1329 = vcmp.eq.s32.totalorder %v439, %v462
        %vm1330 = vcmp.eq.s32.totalorder %v439, %v466
        %vm1331 = vcmp.eq.s32.totalorder %v439, %v470
        %vm1332 = vcmp.eq.s32.totalorder %v439, %v474
        %vm1333 = vcmp.eq.s32.totalorder %v439, %v478
        %vm1334 = vcmp.eq.s32.totalorder %v439, %v482
        %vm1335 = vcmp.eq.s32.totalorder %v439, %v486
        %vm1336 = vcmp.eq.s32.totalorder %v439, %v490
        %vm1337 = vcmp.eq.s32.totalorder %v439, %v494
        %vm1338 = vcmp.eq.s32.totalorder %v439, %v498
        %vm1339 = vcmp.eq.s32.totalorder %v439, %v502
        %vm1340 = vcmp.eq.s32.totalorder %v439, %v506
        %vm1341 = vcmp.eq.s32.totalorder %v439, %v510
        %vm1342 = vcmp.eq.s32.totalorder %v439, %v514
        %vm1343 = vcmp.eq.s32.totalorder %v439, %v518
        %vm1344 = vcmp.eq.s32.totalorder %v439, %v522
        %vm1345 = vcmp.eq.s32.totalorder %v439, %v526
        %vm1346 = vcmp.eq.s32.totalorder %v439, %v530
        %vm1347 = vcmp.eq.s32.totalorder %v439, %v534
        %vm1348 = vcmp.eq.s32.totalorder %v439, %v538
        %vm1349 = vcmp.eq.s32.totalorder %v439, %v542
        %vm1350 = vcmp.eq.s32.totalorder %v439, %v546
        %vm1351 = vcmp.eq.s32.totalorder %v439, %v550
        %vm1352 = vcmp.eq.s32.totalorder %v439, %v554
        %vm1353 = vcmp.eq.s32.totalorder %v439, %v558
        %vm1354 = vcmp.eq.s32.totalorder %v439, %v562
        %vm1355 = vcmp.eq.s32.totalorder %v439, %v566
        %vm1356 = vcmp.eq.s32.totalorder %v439, %v570
        %vm1357 = vcmp.eq.s32.totalorder %v439, %v574
        %vm1358 = vcmp.eq.s32.totalorder %v439, %v578
        %vm1359 = vcmp.eq.s32.totalorder %v440, %v462
        %vm1360 = vcmp.eq.s32.totalorder %v440, %v466
        %vm1361 = vcmp.eq.s32.totalorder %v440, %v470
        %vm1362 = vcmp.eq.s32.totalorder %v440, %v474
        %vm1363 = vcmp.eq.s32.totalorder %v440, %v478
        %vm1364 = vcmp.eq.s32.totalorder %v440, %v482
        %vm1365 = vcmp.eq.s32.totalorder %v440, %v486
        %vm1366 = vcmp.eq.s32.totalorder %v440, %v490
        %vm1367 = vcmp.eq.s32.totalorder %v440, %v494
        %vm1368 = vcmp.eq.s32.totalorder %v440, %v498
        %vm1369 = vcmp.eq.s32.totalorder %v440, %v502
        %vm1370 = vcmp.eq.s32.totalorder %v440, %v506
        %vm1371 = vcmp.eq.s32.totalorder %v440, %v510
        %vm1372 = vcmp.eq.s32.totalorder %v440, %v514
        %vm1373 = vcmp.eq.s32.totalorder %v440, %v518
        %vm1374 = vcmp.eq.s32.totalorder %v440, %v522
        %vm1375 = vcmp.eq.s32.totalorder %v440, %v526
        %vm1376 = vcmp.eq.s32.totalorder %v440, %v530
        %vm1377 = vcmp.eq.s32.totalorder %v440, %v534
        %vm1378 = vcmp.eq.s32.totalorder %v440, %v538
        %vm1379 = vcmp.eq.s32.totalorder %v440, %v542
        %vm1380 = vcmp.eq.s32.totalorder %v440, %v546
        %vm1381 = vcmp.eq.s32.totalorder %v440, %v550
        %vm1382 = vcmp.eq.s32.totalorder %v440, %v554
        %vm1383 = vcmp.eq.s32.totalorder %v440, %v558
        %vm1384 = vcmp.eq.s32.totalorder %v440, %v562
        %vm1385 = vcmp.eq.s32.totalorder %v440, %v566
        %vm1386 = vcmp.eq.s32.totalorder %v440, %v570
        %vm1387 = vcmp.eq.s32.totalorder %v440, %v574
        %vm1388 = vcmp.eq.s32.totalorder %v440, %v578
        %vm1389 = vcmp.eq.s32.totalorder %v441, %v462
        %vm1390 = vcmp.eq.s32.totalorder %v441, %v466
        %vm1391 = vcmp.eq.s32.totalorder %v441, %v470
        %vm1392 = vcmp.eq.s32.totalorder %v441, %v474
        %vm1393 = vcmp.eq.s32.totalorder %v441, %v478
        %vm1394 = vcmp.eq.s32.totalorder %v441, %v482
        %vm1395 = vcmp.eq.s32.totalorder %v441, %v486
        %vm1396 = vcmp.eq.s32.totalorder %v441, %v490
        %vm1397 = vcmp.eq.s32.totalorder %v441, %v494
        %vm1398 = vcmp.eq.s32.totalorder %v441, %v498
        %vm1399 = vcmp.eq.s32.totalorder %v441, %v502
        %vm1400 = vcmp.eq.s32.totalorder %v441, %v506
        %vm1401 = vcmp.eq.s32.totalorder %v441, %v510
        %vm1402 = vcmp.eq.s32.totalorder %v441, %v514
        %vm1403 = vcmp.eq.s32.totalorder %v441, %v518
        %vm1404 = vcmp.eq.s32.totalorder %v441, %v522
        %vm1405 = vcmp.eq.s32.totalorder %v441, %v526
        %vm1406 = vcmp.eq.s32.totalorder %v441, %v530
        %vm1407 = vcmp.eq.s32.totalorder %v441, %v534
        %vm1408 = vcmp.eq.s32.totalorder %v441, %v538
        %vm1409 = vcmp.eq.s32.totalorder %v441, %v542
        %vm1410 = vcmp.eq.s32.totalorder %v441, %v546
        %vm1411 = vcmp.eq.s32.totalorder %v441, %v550
        %vm1412 = vcmp.eq.s32.totalorder %v441, %v554
        %vm1413 = vcmp.eq.s32.totalorder %v441, %v558
        %vm1414 = vcmp.eq.s32.totalorder %v441, %v562
        %vm1415 = vcmp.eq.s32.totalorder %v441, %v566
        %vm1416 = vcmp.eq.s32.totalorder %v441, %v570
        %vm1417 = vcmp.eq.s32.totalorder %v441, %v574
        %vm1418 = vcmp.eq.s32.totalorder %v441, %v578
        %vm1419 = vcmp.eq.s32.totalorder %v442, %v462
        %vm1420 = vcmp.eq.s32.totalorder %v442, %v466
        %vm1421 = vcmp.eq.s32.totalorder %v442, %v470
        %vm1422 = vcmp.eq.s32.totalorder %v442, %v474
        %vm1423 = vcmp.eq.s32.totalorder %v442, %v478
        %vm1424 = vcmp.eq.s32.totalorder %v442, %v482
        %vm1425 = vcmp.eq.s32.totalorder %v442, %v486
        %vm1426 = vcmp.eq.s32.totalorder %v442, %v490
        %vm1427 = vcmp.eq.s32.totalorder %v442, %v494
        %vm1428 = vcmp.eq.s32.totalorder %v442, %v498
        %vm1429 = vcmp.eq.s32.totalorder %v442, %v502
        %vm1430 = vcmp.eq.s32.totalorder %v442, %v506
        %vm1431 = vcmp.eq.s32.totalorder %v442, %v510
        %vm1432 = vcmp.eq.s32.totalorder %v442, %v514
        %vm1433 = vcmp.eq.s32.totalorder %v442, %v518
        %vm1434 = vcmp.eq.s32.totalorder %v442, %v522
        %vm1435 = vcmp.eq.s32.totalorder %v442, %v526
        %vm1436 = vcmp.eq.s32.totalorder %v442, %v530
        %vm1437 = vcmp.eq.s32.totalorder %v442, %v534
        %vm1438 = vcmp.eq.s32.totalorder %v442, %v538
        %vm1439 = vcmp.eq.s32.totalorder %v442, %v542
        %vm1440 = vcmp.eq.s32.totalorder %v442, %v546
        %vm1441 = vcmp.eq.s32.totalorder %v442, %v550
        %vm1442 = vcmp.eq.s32.totalorder %v442, %v554
        %vm1443 = vcmp.eq.s32.totalorder %v442, %v558
        %vm1444 = vcmp.eq.s32.totalorder %v442, %v562
        %vm1445 = vcmp.eq.s32.totalorder %v442, %v566
        %vm1446 = vcmp.eq.s32.totalorder %v442, %v570
        %vm1447 = vcmp.eq.s32.totalorder %v442, %v574
        %vm1448 = vcmp.eq.s32.totalorder %v442, %v578
        %vm1449 = vcmp.eq.s32.totalorder %v443, %v462
        %vm1450 = vcmp.eq.s32.totalorder %v443, %v466
        %vm1451 = vcmp.eq.s32.totalorder %v443, %v470
        %vm1452 = vcmp.eq.s32.totalorder %v443, %v474
        %vm1453 = vcmp.eq.s32.totalorder %v443, %v478
        %vm1454 = vcmp.eq.s32.totalorder %v443, %v482
        %vm1455 = vcmp.eq.s32.totalorder %v443, %v486
        %vm1456 = vcmp.eq.s32.totalorder %v443, %v490
        %vm1457 = vcmp.eq.s32.totalorder %v443, %v494
        %vm1458 = vcmp.eq.s32.totalorder %v443, %v498
        %vm1459 = vcmp.eq.s32.totalorder %v443, %v502
        %vm1460 = vcmp.eq.s32.totalorder %v443, %v506
        %vm1461 = vcmp.eq.s32.totalorder %v443, %v510
        %vm1462 = vcmp.eq.s32.totalorder %v443, %v514
        %vm1463 = vcmp.eq.s32.totalorder %v443, %v518
        %vm1464 = vcmp.eq.s32.totalorder %v443, %v522
        %vm1465 = vcmp.eq.s32.totalorder %v443, %v526
        %vm1466 = vcmp.eq.s32.totalorder %v443, %v530
        %vm1467 = vcmp.eq.s32.totalorder %v443, %v534
        %vm1468 = vcmp.eq.s32.totalorder %v443, %v538
        %vm1469 = vcmp.eq.s32.totalorder %v443, %v542
        %vm1470 = vcmp.eq.s32.totalorder %v443, %v546
        %vm1471 = vcmp.eq.s32.totalorder %v443, %v550
        %vm1472 = vcmp.eq.s32.totalorder %v443, %v554
        %vm1473 = vcmp.eq.s32.totalorder %v443, %v558
        %vm1474 = vcmp.eq.s32.totalorder %v443, %v562
        %vm1475 = vcmp.eq.s32.totalorder %v443, %v566
        %vm1476 = vcmp.eq.s32.totalorder %v443, %v570
        %vm1477 = vcmp.eq.s32.totalorder %v443, %v574
        %vm1478 = vcmp.eq.s32.totalorder %v443, %v578
        %vm1479 = vcmp.eq.s32.totalorder %v444, %v462
        %vm1480 = vcmp.eq.s32.totalorder %v444, %v466
        %vm1481 = vcmp.eq.s32.totalorder %v444, %v470
        %vm1482 = vcmp.eq.s32.totalorder %v444, %v474
        %vm1483 = vcmp.eq.s32.totalorder %v444, %v478
        %vm1484 = vcmp.eq.s32.totalorder %v444, %v482
        %vm1485 = vcmp.eq.s32.totalorder %v444, %v486
        %vm1486 = vcmp.eq.s32.totalorder %v444, %v490
        %vm1487 = vcmp.eq.s32.totalorder %v444, %v494
        %vm1488 = vcmp.eq.s32.totalorder %v444, %v498
        %vm1489 = vcmp.eq.s32.totalorder %v444, %v502
        %vm1490 = vcmp.eq.s32.totalorder %v444, %v506
        %vm1491 = vcmp.eq.s32.totalorder %v444, %v510
        %vm1492 = vcmp.eq.s32.totalorder %v444, %v514
        %vm1493 = vcmp.eq.s32.totalorder %v444, %v518
        %vm1494 = vcmp.eq.s32.totalorder %v444, %v522
        %vm1495 = vcmp.eq.s32.totalorder %v444, %v526
        %vm1496 = vcmp.eq.s32.totalorder %v444, %v530
        %vm1497 = vcmp.eq.s32.totalorder %v444, %v534
        %vm1498 = vcmp.eq.s32.totalorder %v444, %v538
        %vm1499 = vcmp.eq.s32.totalorder %v444, %v542
        %vm1500 = vcmp.eq.s32.totalorder %v444, %v546
        %vm1501 = vcmp.eq.s32.totalorder %v444, %v550
        %vm1502 = vcmp.eq.s32.totalorder %v444, %v554
        %vm1503 = vcmp.eq.s32.totalorder %v444, %v558
        %vm1504 = vcmp.eq.s32.totalorder %v444, %v562
        %vm1505 = vcmp.eq.s32.totalorder %v444, %v566
        %vm1506 = vcmp.eq.s32.totalorder %v444, %v570
        %vm1507 = vcmp.eq.s32.totalorder %v444, %v574
        %vm1508 = vcmp.eq.s32.totalorder %v444, %v578
        %vm1509 = vcmp.eq.s32.totalorder %v445, %v462
        %vm1510 = vcmp.eq.s32.totalorder %v445, %v466
        %vm1511 = vcmp.eq.s32.totalorder %v445, %v470
        %vm1512 = vcmp.eq.s32.totalorder %v445, %v474
        %vm1513 = vcmp.eq.s32.totalorder %v445, %v478
        %vm1514 = vcmp.eq.s32.totalorder %v445, %v482
        %vm1515 = vcmp.eq.s32.totalorder %v445, %v486
        %vm1516 = vcmp.eq.s32.totalorder %v445, %v490
        %vm1517 = vcmp.eq.s32.totalorder %v445, %v494
        %vm1518 = vcmp.eq.s32.totalorder %v445, %v498
        %vm1519 = vcmp.eq.s32.totalorder %v445, %v502
        %vm1520 = vcmp.eq.s32.totalorder %v445, %v506
        %vm1521 = vcmp.eq.s32.totalorder %v445, %v510
        %vm1522 = vcmp.eq.s32.totalorder %v445, %v514
        %vm1523 = vcmp.eq.s32.totalorder %v445, %v518
        %vm1524 = vcmp.eq.s32.totalorder %v445, %v522
        %vm1525 = vcmp.eq.s32.totalorder %v445, %v526
        %vm1526 = vcmp.eq.s32.totalorder %v445, %v530
        %vm1527 = vcmp.eq.s32.totalorder %v445, %v534
        %vm1528 = vcmp.eq.s32.totalorder %v445, %v538
        %vm1529 = vcmp.eq.s32.totalorder %v445, %v542
        %vm1530 = vcmp.eq.s32.totalorder %v445, %v546
        %vm1531 = vcmp.eq.s32.totalorder %v445, %v550
        %vm1532 = vcmp.eq.s32.totalorder %v445, %v554
        %vm1533 = vcmp.eq.s32.totalorder %v445, %v558
        %vm1534 = vcmp.eq.s32.totalorder %v445, %v562
        %vm1535 = vcmp.eq.s32.totalorder %v445, %v566
        %vm1536 = vcmp.eq.s32.totalorder %v445, %v570
        %vm1537 = vcmp.eq.s32.totalorder %v445, %v574
        %vm1538 = vcmp.eq.s32.totalorder %v445, %v578
        %vm1539 = vcmp.eq.s32.totalorder %v446, %v462
        %vm1540 = vcmp.eq.s32.totalorder %v446, %v466
        %vm1541 = vcmp.eq.s32.totalorder %v446, %v470
        %vm1542 = vcmp.eq.s32.totalorder %v446, %v474
        %vm1543 = vcmp.eq.s32.totalorder %v446, %v478
        %vm1544 = vcmp.eq.s32.totalorder %v446, %v482
        %vm1545 = vcmp.eq.s32.totalorder %v446, %v486
        %vm1546 = vcmp.eq.s32.totalorder %v446, %v490
        %vm1547 = vcmp.eq.s32.totalorder %v446, %v494
        %vm1548 = vcmp.eq.s32.totalorder %v446, %v498
        %vm1549 = vcmp.eq.s32.totalorder %v446, %v502
        %vm1550 = vcmp.eq.s32.totalorder %v446, %v506
        %vm1551 = vcmp.eq.s32.totalorder %v446, %v510
        %vm1552 = vcmp.eq.s32.totalorder %v446, %v514
        %vm1553 = vcmp.eq.s32.totalorder %v446, %v518
        %vm1554 = vcmp.eq.s32.totalorder %v446, %v522
        %vm1555 = vcmp.eq.s32.totalorder %v446, %v526
        %vm1556 = vcmp.eq.s32.totalorder %v446, %v530
        %vm1557 = vcmp.eq.s32.totalorder %v446, %v534
        %vm1558 = vcmp.eq.s32.totalorder %v446, %v538
        %vm1559 = vcmp.eq.s32.totalorder %v446, %v542
        %vm1560 = vcmp.eq.s32.totalorder %v446, %v546
        %vm1561 = vcmp.eq.s32.totalorder %v446, %v550
        %vm1562 = vcmp.eq.s32.totalorder %v446, %v554
        %vm1563 = vcmp.eq.s32.totalorder %v446, %v558
        %vm1564 = vcmp.eq.s32.totalorder %v446, %v562
        %vm1565 = vcmp.eq.s32.totalorder %v446, %v566
        %vm1566 = vcmp.eq.s32.totalorder %v446, %v570
        %vm1567 = vcmp.eq.s32.totalorder %v446, %v574
        %vm1568 = vcmp.eq.s32.totalorder %v446, %v578
        %vm1569 = vcmp.eq.s32.totalorder %v447, %v462
        %vm1570 = vcmp.eq.s32.totalorder %v447, %v466
        %vm1571 = vcmp.eq.s32.totalorder %v447, %v470
        %vm1572 = vcmp.eq.s32.totalorder %v447, %v474
        %vm1573 = vcmp.eq.s32.totalorder %v447, %v478
        %vm1574 = vcmp.eq.s32.totalorder %v447, %v482
        %vm1575 = vcmp.eq.s32.totalorder %v447, %v486
        %vm1576 = vcmp.eq.s32.totalorder %v447, %v490
        %vm1577 = vcmp.eq.s32.totalorder %v447, %v494
        %vm1578 = vcmp.eq.s32.totalorder %v447, %v498
        %vm1579 = vcmp.eq.s32.totalorder %v447, %v502
        %vm1580 = vcmp.eq.s32.totalorder %v447, %v506
        %vm1581 = vcmp.eq.s32.totalorder %v447, %v510
        %vm1582 = vcmp.eq.s32.totalorder %v447, %v514
        %vm1583 = vcmp.eq.s32.totalorder %v447, %v518
        %vm1584 = vcmp.eq.s32.totalorder %v447, %v522
        %vm1585 = vcmp.eq.s32.totalorder %v447, %v526
        %vm1586 = vcmp.eq.s32.totalorder %v447, %v530
        %vm1587 = vcmp.eq.s32.totalorder %v447, %v534
        %vm1588 = vcmp.eq.s32.totalorder %v447, %v538
        %vm1589 = vcmp.eq.s32.totalorder %v447, %v542
        %vm1590 = vcmp.eq.s32.totalorder %v447, %v546
        %vm1591 = vcmp.eq.s32.totalorder %v447, %v550
        %vm1592 = vcmp.eq.s32.totalorder %v447, %v554
        %vm1593 = vcmp.eq.s32.totalorder %v447, %v558
        %vm1594 = vcmp.eq.s32.totalorder %v447, %v562
        %vm1595 = vcmp.eq.s32.totalorder %v447, %v566
        %vm1596 = vcmp.eq.s32.totalorder %v447, %v570
        %vm1597 = vcmp.eq.s32.totalorder %v447, %v574
        %vm1598 = vcmp.eq.s32.totalorder %v447, %v578
        %vm1599 = vcmp.eq.s32.totalorder %v448, %v462
        %vm1600 = vcmp.eq.s32.totalorder %v448, %v466
        %vm1601 = vcmp.eq.s32.totalorder %v448, %v470
        %vm1602 = vcmp.eq.s32.totalorder %v448, %v474
        %vm1603 = vcmp.eq.s32.totalorder %v448, %v478
        %vm1604 = vcmp.eq.s32.totalorder %v448, %v482
        %vm1605 = vcmp.eq.s32.totalorder %v448, %v486
        %vm1606 = vcmp.eq.s32.totalorder %v448, %v490
        %vm1607 = vcmp.eq.s32.totalorder %v448, %v494
        %vm1608 = vcmp.eq.s32.totalorder %v448, %v498
        %vm1609 = vcmp.eq.s32.totalorder %v448, %v502
        %vm1610 = vcmp.eq.s32.totalorder %v448, %v506
        %vm1611 = vcmp.eq.s32.totalorder %v448, %v510
        %vm1612 = vcmp.eq.s32.totalorder %v448, %v514
        %vm1613 = vcmp.eq.s32.totalorder %v448, %v518
        %vm1614 = vcmp.eq.s32.totalorder %v448, %v522
        %vm1615 = vcmp.eq.s32.totalorder %v448, %v526
        %vm1616 = vcmp.eq.s32.totalorder %v448, %v530
        %vm1617 = vcmp.eq.s32.totalorder %v448, %v534
        %vm1618 = vcmp.eq.s32.totalorder %v448, %v538
        %vm1619 = vcmp.eq.s32.totalorder %v448, %v542
        %vm1620 = vcmp.eq.s32.totalorder %v448, %v546
        %vm1621 = vcmp.eq.s32.totalorder %v448, %v550
        %vm1622 = vcmp.eq.s32.totalorder %v448, %v554
        %vm1623 = vcmp.eq.s32.totalorder %v448, %v558
        %vm1624 = vcmp.eq.s32.totalorder %v448, %v562
        %vm1625 = vcmp.eq.s32.totalorder %v448, %v566
        %vm1626 = vcmp.eq.s32.totalorder %v448, %v570
        %vm1627 = vcmp.eq.s32.totalorder %v448, %v574
        %vm1628 = vcmp.eq.s32.totalorder %v448, %v578
        %vm1629 = vcmp.eq.s32.totalorder %v449, %v462
        %vm1630 = vcmp.eq.s32.totalorder %v449, %v466
        %vm1631 = vcmp.eq.s32.totalorder %v449, %v470
        %vm1632 = vcmp.eq.s32.totalorder %v449, %v474
        %vm1633 = vcmp.eq.s32.totalorder %v449, %v478
        %vm1634 = vcmp.eq.s32.totalorder %v449, %v482
        %vm1635 = vcmp.eq.s32.totalorder %v449, %v486
        %vm1636 = vcmp.eq.s32.totalorder %v449, %v490
        %vm1637 = vcmp.eq.s32.totalorder %v449, %v494
        %vm1638 = vcmp.eq.s32.totalorder %v449, %v498
        %vm1639 = vcmp.eq.s32.totalorder %v449, %v502
        %vm1640 = vcmp.eq.s32.totalorder %v449, %v506
        %vm1641 = vcmp.eq.s32.totalorder %v449, %v510
        %vm1642 = vcmp.eq.s32.totalorder %v449, %v514
        %vm1643 = vcmp.eq.s32.totalorder %v449, %v518
        %vm1644 = vcmp.eq.s32.totalorder %v449, %v522
        %vm1645 = vcmp.eq.s32.totalorder %v449, %v526
        %vm1646 = vcmp.eq.s32.totalorder %v449, %v530
        %vm1647 = vcmp.eq.s32.totalorder %v449, %v534
        %vm1648 = vcmp.eq.s32.totalorder %v449, %v538
        %vm1649 = vcmp.eq.s32.totalorder %v449, %v542
        %vm1650 = vcmp.eq.s32.totalorder %v449, %v546
        %vm1651 = vcmp.eq.s32.totalorder %v449, %v550
        %vm1652 = vcmp.eq.s32.totalorder %v449, %v554
        %vm1653 = vcmp.eq.s32.totalorder %v449, %v558
        %vm1654 = vcmp.eq.s32.totalorder %v449, %v562
        %vm1655 = vcmp.eq.s32.totalorder %v449, %v566
        %vm1656 = vcmp.eq.s32.totalorder %v449, %v570
        %vm1657 = vcmp.eq.s32.totalorder %v449, %v574
        %vm1658 = vcmp.eq.s32.totalorder %v449, %v578
        %vm1659 = vcmp.eq.s32.totalorder %v450, %v462
        %vm1660 = vcmp.eq.s32.totalorder %v450, %v466
        %vm1661 = vcmp.eq.s32.totalorder %v450, %v470
        %vm1662 = vcmp.eq.s32.totalorder %v450, %v474
        %vm1663 = vcmp.eq.s32.totalorder %v450, %v478
        %vm1664 = vcmp.eq.s32.totalorder %v450, %v482
        %vm1665 = vcmp.eq.s32.totalorder %v450, %v486
        %vm1666 = vcmp.eq.s32.totalorder %v450, %v490
        %vm1667 = vcmp.eq.s32.totalorder %v450, %v494
        %vm1668 = vcmp.eq.s32.totalorder %v450, %v498
        %vm1669 = vcmp.eq.s32.totalorder %v450, %v502
        %vm1670 = vcmp.eq.s32.totalorder %v450, %v506
        %vm1671 = vcmp.eq.s32.totalorder %v450, %v510
        %vm1672 = vcmp.eq.s32.totalorder %v450, %v514
        %vm1673 = vcmp.eq.s32.totalorder %v450, %v518
        %vm1674 = vcmp.eq.s32.totalorder %v450, %v522
        %vm1675 = vcmp.eq.s32.totalorder %v450, %v526
        %vm1676 = vcmp.eq.s32.totalorder %v450, %v530
        %vm1677 = vcmp.eq.s32.totalorder %v450, %v534
        %vm1678 = vcmp.eq.s32.totalorder %v450, %v538
        %vm1679 = vcmp.eq.s32.totalorder %v450, %v542
        %vm1680 = vcmp.eq.s32.totalorder %v450, %v546
        %vm1681 = vcmp.eq.s32.totalorder %v450, %v550
        %vm1682 = vcmp.eq.s32.totalorder %v450, %v554
        %vm1683 = vcmp.eq.s32.totalorder %v450, %v558
        %vm1684 = vcmp.eq.s32.totalorder %v450, %v562
        %vm1685 = vcmp.eq.s32.totalorder %v450, %v566
        %vm1686 = vcmp.eq.s32.totalorder %v450, %v570
        %vm1687 = vcmp.eq.s32.totalorder %v450, %v574
        %vm1688 = vcmp.eq.s32.totalorder %v450, %v578
        %vm1689 = vcmp.eq.s32.totalorder %v451, %v462
        %vm1690 = vcmp.eq.s32.totalorder %v451, %v466
        %vm1691 = vcmp.eq.s32.totalorder %v451, %v470
        %vm1692 = vcmp.eq.s32.totalorder %v451, %v474
        %vm1693 = vcmp.eq.s32.totalorder %v451, %v478
        %vm1694 = vcmp.eq.s32.totalorder %v451, %v482
        %vm1695 = vcmp.eq.s32.totalorder %v451, %v486
        %vm1696 = vcmp.eq.s32.totalorder %v451, %v490
        %vm1697 = vcmp.eq.s32.totalorder %v451, %v494
        %vm1698 = vcmp.eq.s32.totalorder %v451, %v498
        %vm1699 = vcmp.eq.s32.totalorder %v451, %v502
        %vm1700 = vcmp.eq.s32.totalorder %v451, %v506
        %vm1701 = vcmp.eq.s32.totalorder %v451, %v510
        %vm1702 = vcmp.eq.s32.totalorder %v451, %v514
        %vm1703 = vcmp.eq.s32.totalorder %v451, %v518
        %vm1704 = vcmp.eq.s32.totalorder %v451, %v522
        %vm1705 = vcmp.eq.s32.totalorder %v451, %v526
        %vm1706 = vcmp.eq.s32.totalorder %v451, %v530
        %vm1707 = vcmp.eq.s32.totalorder %v451, %v534
        %vm1708 = vcmp.eq.s32.totalorder %v451, %v538
        %vm1709 = vcmp.eq.s32.totalorder %v451, %v542
        %vm1710 = vcmp.eq.s32.totalorder %v451, %v546
        %vm1711 = vcmp.eq.s32.totalorder %v451, %v550
        %vm1712 = vcmp.eq.s32.totalorder %v451, %v554
        %vm1713 = vcmp.eq.s32.totalorder %v451, %v558
        %vm1714 = vcmp.eq.s32.totalorder %v451, %v562
        %vm1715 = vcmp.eq.s32.totalorder %v451, %v566
        %vm1716 = vcmp.eq.s32.totalorder %v451, %v570
        %vm1717 = vcmp.eq.s32.totalorder %v451, %v574
        %vm1718 = vcmp.eq.s32.totalorder %v451, %v578
        %vm1719 = vcmp.eq.s32.totalorder %v452, %v462
        %vm1720 = vcmp.eq.s32.totalorder %v452, %v466
        %vm1721 = vcmp.eq.s32.totalorder %v452, %v470
        %vm1722 = vcmp.eq.s32.totalorder %v452, %v474
        %vm1723 = vcmp.eq.s32.totalorder %v452, %v478
        %vm1724 = vcmp.eq.s32.totalorder %v452, %v482
        %vm1725 = vcmp.eq.s32.totalorder %v452, %v486
        %vm1726 = vcmp.eq.s32.totalorder %v452, %v490
        %vm1727 = vcmp.eq.s32.totalorder %v452, %v494
        %vm1728 = vcmp.eq.s32.totalorder %v452, %v498
        %vm1729 = vcmp.eq.s32.totalorder %v452, %v502
        %vm1730 = vcmp.eq.s32.totalorder %v452, %v506
        %vm1731 = vcmp.eq.s32.totalorder %v452, %v510
        %vm1732 = vcmp.eq.s32.totalorder %v452, %v514
        %vm1733 = vcmp.eq.s32.totalorder %v452, %v518
        %vm1734 = vcmp.eq.s32.totalorder %v452, %v522
        %vm1735 = vcmp.eq.s32.totalorder %v452, %v526
        %vm1736 = vcmp.eq.s32.totalorder %v452, %v530
        %vm1737 = vcmp.eq.s32.totalorder %v452, %v534
        %vm1738 = vcmp.eq.s32.totalorder %v452, %v538
        %vm1739 = vcmp.eq.s32.totalorder %v452, %v542
        %vm1740 = vcmp.eq.s32.totalorder %v452, %v546
        %vm1741 = vcmp.eq.s32.totalorder %v452, %v550
        %vm1742 = vcmp.eq.s32.totalorder %v452, %v554
        %vm1743 = vcmp.eq.s32.totalorder %v452, %v558
        %vm1744 = vcmp.eq.s32.totalorder %v452, %v562
        %vm1745 = vcmp.eq.s32.totalorder %v452, %v566
        %vm1746 = vcmp.eq.s32.totalorder %v452, %v570
        %vm1747 = vcmp.eq.s32.totalorder %v452, %v574
        %vm1748 = vcmp.eq.s32.totalorder %v452, %v578
        %vm1749 = vcmp.eq.s32.totalorder %v453, %v462
        %vm1750 = vcmp.eq.s32.totalorder %v453, %v466
        %vm1751 = vcmp.eq.s32.totalorder %v453, %v470
        %vm1752 = vcmp.eq.s32.totalorder %v453, %v474
        %vm1753 = vcmp.eq.s32.totalorder %v453, %v478
        %vm1754 = vcmp.eq.s32.totalorder %v453, %v482
        %vm1755 = vcmp.eq.s32.totalorder %v453, %v486
        %vm1756 = vcmp.eq.s32.totalorder %v453, %v490
        %vm1757 = vcmp.eq.s32.totalorder %v453, %v494
        %vm1758 = vcmp.eq.s32.totalorder %v453, %v498
        %vm1759 = vcmp.eq.s32.totalorder %v453, %v502
        %vm1760 = vcmp.eq.s32.totalorder %v453, %v506
        %vm1761 = vcmp.eq.s32.totalorder %v453, %v510
        %vm1762 = vcmp.eq.s32.totalorder %v453, %v514
        %vm1763 = vcmp.eq.s32.totalorder %v453, %v518
        %vm1764 = vcmp.eq.s32.totalorder %v453, %v522
        %vm1765 = vcmp.eq.s32.totalorder %v453, %v526
        %vm1766 = vcmp.eq.s32.totalorder %v453, %v530
        %vm1767 = vcmp.eq.s32.totalorder %v453, %v534
        %vm1768 = vcmp.eq.s32.totalorder %v453, %v538
        %vm1769 = vcmp.eq.s32.totalorder %v453, %v542
        %vm1770 = vcmp.eq.s32.totalorder %v453, %v546
        %vm1771 = vcmp.eq.s32.totalorder %v453, %v550
        %vm1772 = vcmp.eq.s32.totalorder %v453, %v554
        %vm1773 = vcmp.eq.s32.totalorder %v453, %v558
        %vm1774 = vcmp.eq.s32.totalorder %v453, %v562
        %vm1775 = vcmp.eq.s32.totalorder %v453, %v566
        %vm1776 = vcmp.eq.s32.totalorder %v453, %v570
        %vm1777 = vcmp.eq.s32.totalorder %v453, %v574
        %vm1778 = vcmp.eq.s32.totalorder %v453, %v578
        %vm1779 = vcmp.eq.s32.totalorder %v454, %v462
        %vm1780 = vcmp.eq.s32.totalorder %v454, %v466
        %vm1781 = vcmp.eq.s32.totalorder %v454, %v470
        %vm1782 = vcmp.eq.s32.totalorder %v454, %v474
        %vm1783 = vcmp.eq.s32.totalorder %v454, %v478
        %vm1784 = vcmp.eq.s32.totalorder %v454, %v482
        %vm1785 = vcmp.eq.s32.totalorder %v454, %v486
        %vm1786 = vcmp.eq.s32.totalorder %v454, %v490
        %vm1787 = vcmp.eq.s32.totalorder %v454, %v494
        %vm1788 = vcmp.eq.s32.totalorder %v454, %v498
        %vm1789 = vcmp.eq.s32.totalorder %v454, %v502
        %vm1790 = vcmp.eq.s32.totalorder %v454, %v506
        %vm1791 = vcmp.eq.s32.totalorder %v454, %v510
        %vm1792 = vcmp.eq.s32.totalorder %v454, %v514
        %vm1793 = vcmp.eq.s32.totalorder %v454, %v518
        %vm1794 = vcmp.eq.s32.totalorder %v454, %v522
        %vm1795 = vcmp.eq.s32.totalorder %v454, %v526
        %vm1796 = vcmp.eq.s32.totalorder %v454, %v530
        %vm1797 = vcmp.eq.s32.totalorder %v454, %v534
        %vm1798 = vcmp.eq.s32.totalorder %v454, %v538
        %vm1799 = vcmp.eq.s32.totalorder %v454, %v542
        %vm1800 = vcmp.eq.s32.totalorder %v454, %v546
        %vm1801 = vcmp.eq.s32.totalorder %v454, %v550
        %vm1802 = vcmp.eq.s32.totalorder %v454, %v554
        %vm1803 = vcmp.eq.s32.totalorder %v454, %v558
        %vm1804 = vcmp.eq.s32.totalorder %v454, %v562
        %vm1805 = vcmp.eq.s32.totalorder %v454, %v566
        %vm1806 = vcmp.eq.s32.totalorder %v454, %v570
        %vm1807 = vcmp.eq.s32.totalorder %v454, %v574
        %vm1808 = vcmp.eq.s32.totalorder %v454, %v578
        %v1809 = vsel %vm579, 1, 0
        %v1810 = vsel %vm580, 1, 0
        %v1811 = vsel %vm581, 1, 0
        %v1812 = vsel %vm582, 1, 0
        %v1813 = vsel %vm583, 1, 0
        %v1814 = vsel %vm584, 1, 0
        %v1815 = vsel %vm585, 1, 0
        %v1816 = vsel %vm586, 1, 0
        %v1817 = vsel %vm587, 1, 0
        %v1818 = vsel %vm588, 1, 0
        %v1819 = vsel %vm589, 1, 0
        %v1820 = vsel %vm590, 1, 0
        %v1821 = vsel %vm591, 1, 0
        %v1822 = vsel %vm592, 1, 0
        %v1823 = vsel %vm593, 1, 0
        %v1824 = vsel %vm594, 1, 0
        %v1825 = vsel %vm595, 1, 0
        %v1826 = vsel %vm596, 1, 0
        %v1827 = vsel %vm597, 1, 0
        %v1828 = vsel %vm598, 1, 0
        %v1829 = vsel %vm599, 1, 0
        %v1830 = vsel %vm600, 1, 0
        %v1831 = vsel %vm601, 1, 0
        %v1832 = vsel %vm602, 1, 0
        %v1833 = vsel %vm603, 1, 0
        %v1834 = vsel %vm604, 1, 0
        %v1835 = vsel %vm605, 1, 0
        %v1836 = vsel %vm606, 1, 0
        %v1837 = vsel %vm607, 1, 0
        %v1838 = vsel %vm608, 1, 0
        %v1839 = vsel %vm609, 1, 0
        %v1840 = vsel %vm610, 1, 0
        %v1841 = vsel %vm611, 1, 0
        %v1842 = vsel %vm612, 1, 0
        %v1843 = vsel %vm613, 1, 0
        %v1844 = vsel %vm614, 1, 0
        %v1845 = vsel %vm615, 1, 0
        %v1846 = vsel %vm616, 1, 0
        %v1847 = vsel %vm617, 1, 0
        %v1848 = vsel %vm618, 1, 0
        %v1849 = vsel %vm619, 1, 0
        %v1850 = vsel %vm620, 1, 0
        %v1851 = vsel %vm621, 1, 0
        %v1852 = vsel %vm622, 1, 0
        %v1853 = vsel %vm623, 1, 0
        %v1854 = vsel %vm624, 1, 0
        %v1855 = vsel %vm625, 1, 0
        %v1856 = vsel %vm626, 1, 0
        %v1857 = vsel %vm627, 1, 0
        %v1858 = vsel %vm628, 1, 0
        %v1859 = vsel %vm629, 1, 0
        %v1860 = vsel %vm630, 1, 0
        %v1861 = vsel %vm631, 1, 0
        %v1862 = vsel %vm632, 1, 0
        %v1863 = vsel %vm633, 1, 0
        %v1864 = vsel %vm634, 1, 0
        %v1865 = vsel %vm635, 1, 0
        %v1866 = vsel %vm636, 1, 0
        %v1867 = vsel %vm637, 1, 0
        %v1868 = vsel %vm638, 1, 0
        %v1869 = vsel %vm639, 1, 0
        %v1870 = vsel %vm640, 1, 0
        %v1871 = vsel %vm641, 1, 0
        %v1872 = vsel %vm642, 1, 0
        %v1873 = vsel %vm643, 1, 0
        %v1874 = vsel %vm644, 1, 0
        %v1875 = vsel %vm645, 1, 0
        %v1876 = vsel %vm646, 1, 0
        %v1877 = vsel %vm647, 1, 0
        %v1878 = vsel %vm648, 1, 0
        %v1879 = vsel %vm649, 1, 0
        %v1880 = vsel %vm650, 1, 0
        %v1881 = vsel %vm651, 1, 0
        %v1882 = vsel %vm652, 1, 0
        %v1883 = vsel %vm653, 1, 0
        %v1884 = vsel %vm654, 1, 0
        %v1885 = vsel %vm655, 1, 0
        %v1886 = vsel %vm656, 1, 0
        %v1887 = vsel %vm657, 1, 0
        %v1888 = vsel %vm658, 1, 0
        %v1889 = vsel %vm659, 1, 0
        %v1890 = vsel %vm660, 1, 0
        %v1891 = vsel %vm661, 1, 0
        %v1892 = vsel %vm662, 1, 0
        %v1893 = vsel %vm663, 1, 0
        %v1894 = vsel %vm664, 1, 0
        %v1895 = vsel %vm665, 1, 0
        %v1896 = vsel %vm666, 1, 0
        %v1897 = vsel %vm667, 1, 0
        %v1898 = vsel %vm668, 1, 0
        %v1899 = vsel %vm669, 1, 0
        %v1900 = vsel %vm670, 1, 0
        %v1901 = vsel %vm671, 1, 0
        %v1902 = vsel %vm672, 1, 0
        %v1903 = vsel %vm673, 1, 0
        %v1904 = vsel %vm674, 1, 0
        %v1905 = vsel %vm675, 1, 0
        %v1906 = vsel %vm676, 1, 0
        %v1907 = vsel %vm677, 1, 0
        %v1908 = vsel %vm678, 1, 0
        %v1909 = vsel %vm679, 1, 0
        %v1910 = vsel %vm680, 1, 0
        %v1911 = vsel %vm681, 1, 0
        %v1912 = vsel %vm682, 1, 0
        %v1913 = vsel %vm683, 1, 0
        %v1914 = vsel %vm684, 1, 0
        %v1915 = vsel %vm685, 1, 0
        %v1916 = vsel %vm686, 1, 0
        %v1917 = vsel %vm687, 1, 0
        %v1918 = vsel %vm688, 1, 0
        %v1919 = vsel %vm689, 1, 0
        %v1920 = vsel %vm690, 1, 0
        %v1921 = vsel %vm691, 1, 0
        %v1922 = vsel %vm692, 1, 0
        %v1923 = vsel %vm693, 1, 0
        %v1924 = vsel %vm694, 1, 0
        %v1925 = vsel %vm695, 1, 0
        %v1926 = vsel %vm696, 1, 0
        %v1927 = vsel %vm697, 1, 0
        %v1928 = vsel %vm698, 1, 0
        %v1929 = vsel %vm699, 1, 0
        %v1930 = vsel %vm700, 1, 0
        %v1931 = vsel %vm701, 1, 0
        %v1932 = vsel %vm702, 1, 0
        %v1933 = vsel %vm703, 1, 0
        %v1934 = vsel %vm704, 1, 0
        %v1935 = vsel %vm705, 1, 0
        %v1936 = vsel %vm706, 1, 0
        %v1937 = vsel %vm707, 1, 0
        %v1938 = vsel %vm708, 1, 0
        %v1939 = vsel %vm709, 1, 0
        %v1940 = vsel %vm710, 1, 0
        %v1941 = vsel %vm711, 1, 0
        %v1942 = vsel %vm712, 1, 0
        %v1943 = vsel %vm713, 1, 0
        %v1944 = vsel %vm714, 1, 0
        %v1945 = vsel %vm715, 1, 0
        %v1946 = vsel %vm716, 1, 0
        %v1947 = vsel %vm717, 1, 0
        %v1948 = vsel %vm718, 1, 0
        %v1949 = vsel %vm719, 1, 0
        %v1950 = vsel %vm720, 1, 0
        %v1951 = vsel %vm721, 1, 0
        %v1952 = vsel %vm722, 1, 0
        %v1953 = vsel %vm723, 1, 0
        %v1954 = vsel %vm724, 1, 0
        %v1955 = vsel %vm725, 1, 0
        %v1956 = vsel %vm726, 1, 0
        %v1957 = vsel %vm727, 1, 0
        %v1958 = vsel %vm728, 1, 0
        %v1959 = vsel %vm729, 1, 0
        %v1960 = vsel %vm730, 1, 0
        %v1961 = vsel %vm731, 1, 0
        %v1962 = vsel %vm732, 1, 0
        %v1963 = vsel %vm733, 1, 0
        %v1964 = vsel %vm734, 1, 0
        %v1965 = vsel %vm735, 1, 0
        %v1966 = vsel %vm736, 1, 0
        %v1967 = vsel %vm737, 1, 0
        %v1968 = vsel %vm738, 1, 0
        %v1969 = vsel %vm739, 1, 0
        %v1970 = vsel %vm740, 1, 0
        %v1971 = vsel %vm741, 1, 0
        %v1972 = vsel %vm742, 1, 0
        %v1973 = vsel %vm743, 1, 0
        %v1974 = vsel %vm744, 1, 0
        %v1975 = vsel %vm745, 1, 0
        %v1976 = vsel %vm746, 1, 0
        %v1977 = vsel %vm747, 1, 0
        %v1978 = vsel %vm748, 1, 0
        %v1979 = vsel %vm749, 1, 0
        %v1980 = vsel %vm750, 1, 0
        %v1981 = vsel %vm751, 1, 0
        %v1982 = vsel %vm752, 1, 0
        %v1983 = vsel %vm753, 1, 0
        %v1984 = vsel %vm754, 1, 0
        %v1985 = vsel %vm755, 1, 0
        %v1986 = vsel %vm756, 1, 0
        %v1987 = vsel %vm757, 1, 0
        %v1988 = vsel %vm758, 1, 0
        %v1989 = vsel %vm759, 1, 0
        %v1990 = vsel %vm760, 1, 0
        %v1991 = vsel %vm761, 1, 0
        %v1992 = vsel %vm762, 1, 0
        %v1993 = vsel %vm763, 1, 0
        %v1994 = vsel %vm764, 1, 0
        %v1995 = vsel %vm765, 1, 0
        %v1996 = vsel %vm766, 1, 0
        %v1997 = vsel %vm767, 1, 0
        %v1998 = vsel %vm768, 1, 0
        %v1999 = vsel %vm769, 1, 0
        %v2000 = vsel %vm770, 1, 0
        %v2001 = vsel %vm771, 1, 0
        %v2002 = vsel %vm772, 1, 0
        %v2003 = vsel %vm773, 1, 0
        %v2004 = vsel %vm774, 1, 0
        %v2005 = vsel %vm775, 1, 0
        %v2006 = vsel %vm776, 1, 0
        %v2007 = vsel %vm777, 1, 0
        %v2008 = vsel %vm778, 1, 0
        %v2009 = vsel %vm779, 1, 0
        %v2010 = vsel %vm780, 1, 0
        %v2011 = vsel %vm781, 1, 0
        %v2012 = vsel %vm782, 1, 0
        %v2013 = vsel %vm783, 1, 0
        %v2014 = vsel %vm784, 1, 0
        %v2015 = vsel %vm785, 1, 0
        %v2016 = vsel %vm786, 1, 0
        %v2017 = vsel %vm787, 1, 0
        %v2018 = vsel %vm788, 1, 0
        %v2019 = vsel %vm789, 1, 0
        %v2020 = vsel %vm790, 1, 0
        %v2021 = vsel %vm791, 1, 0
        %v2022 = vsel %vm792, 1, 0
        %v2023 = vsel %vm793, 1, 0
        %v2024 = vsel %vm794, 1, 0
        %v2025 = vsel %vm795, 1, 0
        %v2026 = vsel %vm796, 1, 0
        %v2027 = vsel %vm797, 1, 0
        %v2028 = vsel %vm798, 1, 0
        %v2029 = vsel %vm799, 1, 0
        %v2030 = vsel %vm800, 1, 0
        %v2031 = vsel %vm801, 1, 0
        %v2032 = vsel %vm802, 1, 0
        %v2033 = vsel %vm803, 1, 0
        %v2034 = vsel %vm804, 1, 0
        %v2035 = vsel %vm805, 1, 0
        %v2036 = vsel %vm806, 1, 0
        %v2037 = vsel %vm807, 1, 0
        %v2038 = vsel %vm808, 1, 0
        %v2039 = vsel %vm809, 1, 0
        %v2040 = vsel %vm810, 1, 0
        %v2041 = vsel %vm811, 1, 0
        %v2042 = vsel %vm812, 1, 0
        %v2043 = vsel %vm813, 1, 0
        %v2044 = vsel %vm814, 1, 0
        %v2045 = vsel %vm815, 1, 0
        %v2046 = vsel %vm816, 1, 0
        %v2047 = vsel %vm817, 1, 0
        %v2048 = vsel %vm818, 1, 0
        %v2049 = vsel %vm819, 1, 0
        %v2050 = vsel %vm820, 1, 0
        %v2051 = vsel %vm821, 1, 0
        %v2052 = vsel %vm822, 1, 0
        %v2053 = vsel %vm823, 1, 0
        %v2054 = vsel %vm824, 1, 0
        %v2055 = vsel %vm825, 1, 0
        %v2056 = vsel %vm826, 1, 0
        %v2057 = vsel %vm827, 1, 0
        %v2058 = vsel %vm828, 1, 0
        %v2059 = vsel %vm829, 1, 0
        %v2060 = vsel %vm830, 1, 0
        %v2061 = vsel %vm831, 1, 0
        %v2062 = vsel %vm832, 1, 0
        %v2063 = vsel %vm833, 1, 0
        %v2064 = vsel %vm834, 1, 0
        %v2065 = vsel %vm835, 1, 0
        %v2066 = vsel %vm836, 1, 0
        %v2067 = vsel %vm837, 1, 0
        %v2068 = vsel %vm838, 1, 0
        %v2069 = vsel %vm839, 1, 0
        %v2070 = vsel %vm840, 1, 0
        %v2071 = vsel %vm841, 1, 0
        %v2072 = vsel %vm842, 1, 0
        %v2073 = vsel %vm843, 1, 0
        %v2074 = vsel %vm844, 1, 0
        %v2075 = vsel %vm845, 1, 0
        %v2076 = vsel %vm846, 1, 0
        %v2077 = vsel %vm847, 1, 0
        %v2078 = vsel %vm848, 1, 0
        %v2079 = vsel %vm849, 1, 0
        %v2080 = vsel %vm850, 1, 0
        %v2081 = vsel %vm851, 1, 0
        %v2082 = vsel %vm852, 1, 0
        %v2083 = vsel %vm853, 1, 0
        %v2084 = vsel %vm854, 1, 0
        %v2085 = vsel %vm855, 1, 0
        %v2086 = vsel %vm856, 1, 0
        %v2087 = vsel %vm857, 1, 0
        %v2088 = vsel %vm858, 1, 0
        %v2089 = vsel %vm859, 1, 0
        %v2090 = vsel %vm860, 1, 0
        %v2091 = vsel %vm861, 1, 0
        %v2092 = vsel %vm862, 1, 0
        %v2093 = vsel %vm863, 1, 0
        %v2094 = vsel %vm864, 1, 0
        %v2095 = vsel %vm865, 1, 0
        %v2096 = vsel %vm866, 1, 0
        %v2097 = vsel %vm867, 1, 0
        %v2098 = vsel %vm868, 1, 0
        %v2099 = vsel %vm869, 1, 0
        %v2100 = vsel %vm870, 1, 0
        %v2101 = vsel %vm871, 1, 0
        %v2102 = vsel %vm872, 1, 0
        %v2103 = vsel %vm873, 1, 0
        %v2104 = vsel %vm874, 1, 0
        %v2105 = vsel %vm875, 1, 0
        %v2106 = vsel %vm876, 1, 0
        %v2107 = vsel %vm877, 1, 0
        %v2108 = vsel %vm878, 1, 0
        %v2109 = vsel %vm879, 1, 0
        %v2110 = vsel %vm880, 1, 0
        %v2111 = vsel %vm881, 1, 0
        %v2112 = vsel %vm882, 1, 0
        %v2113 = vsel %vm883, 1, 0
        %v2114 = vsel %vm884, 1, 0
        %v2115 = vsel %vm885, 1, 0
        %v2116 = vsel %vm886, 1, 0
        %v2117 = vsel %vm887, 1, 0
        %v2118 = vsel %vm888, 1, 0
        %v2119 = vsel %vm889, 1, 0
        %v2120 = vsel %vm890, 1, 0
        %v2121 = vsel %vm891, 1, 0
        %v2122 = vsel %vm892, 1, 0
        %v2123 = vsel %vm893, 1, 0
        %v2124 = vsel %vm894, 1, 0
        %v2125 = vsel %vm895, 1, 0
        %v2126 = vsel %vm896, 1, 0
        %v2127 = vsel %vm897, 1, 0
        %v2128 = vsel %vm898, 1, 0
        %v2129 = vsel %vm899, 1, 0
        %v2130 = vsel %vm900, 1, 0
        %v2131 = vsel %vm901, 1, 0
        %v2132 = vsel %vm902, 1, 0
        %v2133 = vsel %vm903, 1, 0
        %v2134 = vsel %vm904, 1, 0
        %v2135 = vsel %vm905, 1, 0
        %v2136 = vsel %vm906, 1, 0
        %v2137 = vsel %vm907, 1, 0
        %v2138 = vsel %vm908, 1, 0
        %v2139 = vsel %vm909, 1, 0
        %v2140 = vsel %vm910, 1, 0
        %v2141 = vsel %vm911, 1, 0
        %v2142 = vsel %vm912, 1, 0
        %v2143 = vsel %vm913, 1, 0
        %v2144 = vsel %vm914, 1, 0
        %v2145 = vsel %vm915, 1, 0
        %v2146 = vsel %vm916, 1, 0
        %v2147 = vsel %vm917, 1, 0
        %v2148 = vsel %vm918, 1, 0
        %v2149 = vsel %vm919, 1, 0
        %v2150 = vsel %vm920, 1, 0
        %v2151 = vsel %vm921, 1, 0
        %v2152 = vsel %vm922, 1, 0
        %v2153 = vsel %vm923, 1, 0
        %v2154 = vsel %vm924, 1, 0
        %v2155 = vsel %vm925, 1, 0
        %v2156 = vsel %vm926, 1, 0
        %v2157 = vsel %vm927, 1, 0
        %v2158 = vsel %vm928, 1, 0
        %v2159 = vsel %vm929, 1, 0
        %v2160 = vsel %vm930, 1, 0
        %v2161 = vsel %vm931, 1, 0
        %v2162 = vsel %vm932, 1, 0
        %v2163 = vsel %vm933, 1, 0
        %v2164 = vsel %vm934, 1, 0
        %v2165 = vsel %vm935, 1, 0
        %v2166 = vsel %vm936, 1, 0
        %v2167 = vsel %vm937, 1, 0
        %v2168 = vsel %vm938, 1, 0
        %v2169 = vsel %vm939, 1, 0
        %v2170 = vsel %vm940, 1, 0
        %v2171 = vsel %vm941, 1, 0
        %v2172 = vsel %vm942, 1, 0
        %v2173 = vsel %vm943, 1, 0
        %v2174 = vsel %vm944, 1, 0
        %v2175 = vsel %vm945, 1, 0
        %v2176 = vsel %vm946, 1, 0
        %v2177 = vsel %vm947, 1, 0
        %v2178 = vsel %vm948, 1, 0
        %v2179 = vsel %vm949, 1, 0
        %v2180 = vsel %vm950, 1, 0
        %v2181 = vsel %vm951, 1, 0
        %v2182 = vsel %vm952, 1, 0
        %v2183 = vsel %vm953, 1, 0
        %v2184 = vsel %vm954, 1, 0
        %v2185 = vsel %vm955, 1, 0
        %v2186 = vsel %vm956, 1, 0
        %v2187 = vsel %vm957, 1, 0
        %v2188 = vsel %vm958, 1, 0
        %v2189 = vsel %vm959, 1, 0
        %v2190 = vsel %vm960, 1, 0
        %v2191 = vsel %vm961, 1, 0
        %v2192 = vsel %vm962, 1, 0
        %v2193 = vsel %vm963, 1, 0
        %v2194 = vsel %vm964, 1, 0
        %v2195 = vsel %vm965, 1, 0
        %v2196 = vsel %vm966, 1, 0
        %v2197 = vsel %vm967, 1, 0
        %v2198 = vsel %vm968, 1, 0
        %v2199 = vsel %vm969, 1, 0
        %v2200 = vsel %vm970, 1, 0
        %v2201 = vsel %vm971, 1, 0
        %v2202 = vsel %vm972, 1, 0
        %v2203 = vsel %vm973, 1, 0
        %v2204 = vsel %vm974, 1, 0
        %v2205 = vsel %vm975, 1, 0
        %v2206 = vsel %vm976, 1, 0
        %v2207 = vsel %vm977, 1, 0
        %v2208 = vsel %vm978, 1, 0
        %v2209 = vsel %vm979, 1, 0
        %v2210 = vsel %vm980, 1, 0
        %v2211 = vsel %vm981, 1, 0
        %v2212 = vsel %vm982, 1, 0
        %v2213 = vsel %vm983, 1, 0
        %v2214 = vsel %vm984, 1, 0
        %v2215 = vsel %vm985, 1, 0
        %v2216 = vsel %vm986, 1, 0
        %v2217 = vsel %vm987, 1, 0
        %v2218 = vsel %vm988, 1, 0
        %v2219 = vsel %vm989, 1, 0
        %v2220 = vsel %vm990, 1, 0
        %v2221 = vsel %vm991, 1, 0
        %v2222 = vsel %vm992, 1, 0
        %v2223 = vsel %vm993, 1, 0
        %v2224 = vsel %vm994, 1, 0
        %v2225 = vsel %vm995, 1, 0
        %v2226 = vsel %vm996, 1, 0
        %v2227 = vsel %vm997, 1, 0
        %v2228 = vsel %vm998, 1, 0
        %v2229 = vsel %vm999, 1, 0
        %v2230 = vsel %vm1000, 1, 0
        %v2231 = vsel %vm1001, 1, 0
        %v2232 = vsel %vm1002, 1, 0
        %v2233 = vsel %vm1003, 1, 0
        %v2234 = vsel %vm1004, 1, 0
        %v2235 = vsel %vm1005, 1, 0
        %v2236 = vsel %vm1006, 1, 0
        %v2237 = vsel %vm1007, 1, 0
        %v2238 = vsel %vm1008, 1, 0
        %v2239 = vsel %vm1009, 1, 0
        %v2240 = vsel %vm1010, 1, 0
        %v2241 = vsel %vm1011, 1, 0
        %v2242 = vsel %vm1012, 1, 0
        %v2243 = vsel %vm1013, 1, 0
        %v2244 = vsel %vm1014, 1, 0
        %v2245 = vsel %vm1015, 1, 0
        %v2246 = vsel %vm1016, 1, 0
        %v2247 = vsel %vm1017, 1, 0
        %v2248 = vsel %vm1018, 1, 0
        %v2249 = vsel %vm1019, 1, 0
        %v2250 = vsel %vm1020, 1, 0
        %v2251 = vsel %vm1021, 1, 0
        %v2252 = vsel %vm1022, 1, 0
        %v2253 = vsel %vm1023, 1, 0
        %v2254 = vsel %vm1024, 1, 0
        %v2255 = vsel %vm1025, 1, 0
        %v2256 = vsel %vm1026, 1, 0
        %v2257 = vsel %vm1027, 1, 0
        %v2258 = vsel %vm1028, 1, 0
        %v2259 = vsel %vm1029, 1, 0
        %v2260 = vsel %vm1030, 1, 0
        %v2261 = vsel %vm1031, 1, 0
        %v2262 = vsel %vm1032, 1, 0
        %v2263 = vsel %vm1033, 1, 0
        %v2264 = vsel %vm1034, 1, 0
        %v2265 = vsel %vm1035, 1, 0
        %v2266 = vsel %vm1036, 1, 0
        %v2267 = vsel %vm1037, 1, 0
        %v2268 = vsel %vm1038, 1, 0
        %v2269 = vsel %vm1039, 1, 0
        %v2270 = vsel %vm1040, 1, 0
        %v2271 = vsel %vm1041, 1, 0
        %v2272 = vsel %vm1042, 1, 0
        %v2273 = vsel %vm1043, 1, 0
        %v2274 = vsel %vm1044, 1, 0
        %v2275 = vsel %vm1045, 1, 0
        %v2276 = vsel %vm1046, 1, 0
        %v2277 = vsel %vm1047, 1, 0
        %v2278 = vsel %vm1048, 1, 0
        %v2279 = vsel %vm1049, 1, 0
        %v2280 = vsel %vm1050, 1, 0
        %v2281 = vsel %vm1051, 1, 0
        %v2282 = vsel %vm1052, 1, 0
        %v2283 = vsel %vm1053, 1, 0
        %v2284 = vsel %vm1054, 1, 0
        %v2285 = vsel %vm1055, 1, 0
        %v2286 = vsel %vm1056, 1, 0
        %v2287 = vsel %vm1057, 1, 0
        %v2288 = vsel %vm1058, 1, 0
        %v2289 = vsel %vm1059, 1, 0
        %v2290 = vsel %vm1060, 1, 0
        %v2291 = vsel %vm1061, 1, 0
        %v2292 = vsel %vm1062, 1, 0
        %v2293 = vsel %vm1063, 1, 0
        %v2294 = vsel %vm1064, 1, 0
        %v2295 = vsel %vm1065, 1, 0
        %v2296 = vsel %vm1066, 1, 0
        %v2297 = vsel %vm1067, 1, 0
        %v2298 = vsel %vm1068, 1, 0
        %v2299 = vsel %vm1069, 1, 0
        %v2300 = vsel %vm1070, 1, 0
        %v2301 = vsel %vm1071, 1, 0
        %v2302 = vsel %vm1072, 1, 0
        %v2303 = vsel %vm1073, 1, 0
        %v2304 = vsel %vm1074, 1, 0
        %v2305 = vsel %vm1075, 1, 0
        %v2306 = vsel %vm1076, 1, 0
        %v2307 = vsel %vm1077, 1, 0
        %v2308 = vsel %vm1078, 1, 0
        %v2309 = vsel %vm1079, 1, 0
        %v2310 = vsel %vm1080, 1, 0
        %v2311 = vsel %vm1081, 1, 0
        %v2312 = vsel %vm1082, 1, 0
        %v2313 = vsel %vm1083, 1, 0
        %v2314 = vsel %vm1084, 1, 0
        %v2315 = vsel %vm1085, 1, 0
        %v2316 = vsel %vm1086, 1, 0
        %v2317 = vsel %vm1087, 1, 0
        %v2318 = vsel %vm1088, 1, 0
        %v2319 = vsel %vm1089, 1, 0
        %v2320 = vsel %vm1090, 1, 0
        %v2321 = vsel %vm1091, 1, 0
        %v2322 = vsel %vm1092, 1, 0
        %v2323 = vsel %vm1093, 1, 0
        %v2324 = vsel %vm1094, 1, 0
        %v2325 = vsel %vm1095, 1, 0
        %v2326 = vsel %vm1096, 1, 0
        %v2327 = vsel %vm1097, 1, 0
        %v2328 = vsel %vm1098, 1, 0
        %v2329 = vsel %vm1099, 1, 0
        %v2330 = vsel %vm1100, 1, 0
        %v2331 = vsel %vm1101, 1, 0
        %v2332 = vsel %vm1102, 1, 0
        %v2333 = vsel %vm1103, 1, 0
        %v2334 = vsel %vm1104, 1, 0
        %v2335 = vsel %vm1105, 1, 0
        %v2336 = vsel %vm1106, 1, 0
        %v2337 = vsel %vm1107, 1, 0
        %v2338 = vsel %vm1108, 1, 0
        %v2339 = vsel %vm1109, 1, 0
        %v2340 = vsel %vm1110, 1, 0
        %v2341 = vsel %vm1111, 1, 0
        %v2342 = vsel %vm1112, 1, 0
        %v2343 = vsel %vm1113, 1, 0
        %v2344 = vsel %vm1114, 1, 0
        %v2345 = vsel %vm1115, 1, 0
        %v2346 = vsel %vm1116, 1, 0
        %v2347 = vsel %vm1117, 1, 0
        %v2348 = vsel %vm1118, 1, 0
        %v2349 = vsel %vm1119, 1, 0
        %v2350 = vsel %vm1120, 1, 0
        %v2351 = vsel %vm1121, 1, 0
        %v2352 = vsel %vm1122, 1, 0
        %v2353 = vsel %vm1123, 1, 0
        %v2354 = vsel %vm1124, 1, 0
        %v2355 = vsel %vm1125, 1, 0
        %v2356 = vsel %vm1126, 1, 0
        %v2357 = vsel %vm1127, 1, 0
        %v2358 = vsel %vm1128, 1, 0
        %v2359 = vsel %vm1129, 1, 0
        %v2360 = vsel %vm1130, 1, 0
        %v2361 = vsel %vm1131, 1, 0
        %v2362 = vsel %vm1132, 1, 0
        %v2363 = vsel %vm1133, 1, 0
        %v2364 = vsel %vm1134, 1, 0
        %v2365 = vsel %vm1135, 1, 0
        %v2366 = vsel %vm1136, 1, 0
        %v2367 = vsel %vm1137, 1, 0
        %v2368 = vsel %vm1138, 1, 0
        %v2369 = vsel %vm1139, 1, 0
        %v2370 = vsel %vm1140, 1, 0
        %v2371 = vsel %vm1141, 1, 0
        %v2372 = vsel %vm1142, 1, 0
        %v2373 = vsel %vm1143, 1, 0
        %v2374 = vsel %vm1144, 1, 0
        %v2375 = vsel %vm1145, 1, 0
        %v2376 = vsel %vm1146, 1, 0
        %v2377 = vsel %vm1147, 1, 0
        %v2378 = vsel %vm1148, 1, 0
        %v2379 = vsel %vm1149, 1, 0
        %v2380 = vsel %vm1150, 1, 0
        %v2381 = vsel %vm1151, 1, 0
        %v2382 = vsel %vm1152, 1, 0
        %v2383 = vsel %vm1153, 1, 0
        %v2384 = vsel %vm1154, 1, 0
        %v2385 = vsel %vm1155, 1, 0
        %v2386 = vsel %vm1156, 1, 0
        %v2387 = vsel %vm1157, 1, 0
        %v2388 = vsel %vm1158, 1, 0
        %v2389 = vsel %vm1159, 1, 0
        %v2390 = vsel %vm1160, 1, 0
        %v2391 = vsel %vm1161, 1, 0
        %v2392 = vsel %vm1162, 1, 0
        %v2393 = vsel %vm1163, 1, 0
        %v2394 = vsel %vm1164, 1, 0
        %v2395 = vsel %vm1165, 1, 0
        %v2396 = vsel %vm1166, 1, 0
        %v2397 = vsel %vm1167, 1, 0
        %v2398 = vsel %vm1168, 1, 0
        %v2399 = vsel %vm1169, 1, 0
        %v2400 = vsel %vm1170, 1, 0
        %v2401 = vsel %vm1171, 1, 0
        %v2402 = vsel %vm1172, 1, 0
        %v2403 = vsel %vm1173, 1, 0
        %v2404 = vsel %vm1174, 1, 0
        %v2405 = vsel %vm1175, 1, 0
        %v2406 = vsel %vm1176, 1, 0
        %v2407 = vsel %vm1177, 1, 0
        %v2408 = vsel %vm1178, 1, 0
        %v2409 = vsel %vm1179, 1, 0
        %v2410 = vsel %vm1180, 1, 0
        %v2411 = vsel %vm1181, 1, 0
        %v2412 = vsel %vm1182, 1, 0
        %v2413 = vsel %vm1183, 1, 0
        %v2414 = vsel %vm1184, 1, 0
        %v2415 = vsel %vm1185, 1, 0
        %v2416 = vsel %vm1186, 1, 0
        %v2417 = vsel %vm1187, 1, 0
        %v2418 = vsel %vm1188, 1, 0
        %v2419 = vsel %vm1189, 1, 0
        %v2420 = vsel %vm1190, 1, 0
        %v2421 = vsel %vm1191, 1, 0
        %v2422 = vsel %vm1192, 1, 0
        %v2423 = vsel %vm1193, 1, 0
        %v2424 = vsel %vm1194, 1, 0
        %v2425 = vsel %vm1195, 1, 0
        %v2426 = vsel %vm1196, 1, 0
        %v2427 = vsel %vm1197, 1, 0
        %v2428 = vsel %vm1198, 1, 0
        %v2429 = vsel %vm1199, 1, 0
        %v2430 = vsel %vm1200, 1, 0
        %v2431 = vsel %vm1201, 1, 0
        %v2432 = vsel %vm1202, 1, 0
        %v2433 = vsel %vm1203, 1, 0
        %v2434 = vsel %vm1204, 1, 0
        %v2435 = vsel %vm1205, 1, 0
        %v2436 = vsel %vm1206, 1, 0
        %v2437 = vsel %vm1207, 1, 0
        %v2438 = vsel %vm1208, 1, 0
        %v2439 = vsel %vm1209, 1, 0
        %v2440 = vsel %vm1210, 1, 0
        %v2441 = vsel %vm1211, 1, 0
        %v2442 = vsel %vm1212, 1, 0
        %v2443 = vsel %vm1213, 1, 0
        %v2444 = vsel %vm1214, 1, 0
        %v2445 = vsel %vm1215, 1, 0
        %v2446 = vsel %vm1216, 1, 0
        %v2447 = vsel %vm1217, 1, 0
        %v2448 = vsel %vm1218, 1, 0
        %v2449 = vsel %vm1219, 1, 0
        %v2450 = vsel %vm1220, 1, 0
        %v2451 = vsel %vm1221, 1, 0
        %v2452 = vsel %vm1222, 1, 0
        %v2453 = vsel %vm1223, 1, 0
        %v2454 = vsel %vm1224, 1, 0
        %v2455 = vsel %vm1225, 1, 0
        %v2456 = vsel %vm1226, 1, 0
        %v2457 = vsel %vm1227, 1, 0
        %v2458 = vsel %vm1228, 1, 0
        %v2459 = vsel %vm1229, 1, 0
        %v2460 = vsel %vm1230, 1, 0
        %v2461 = vsel %vm1231, 1, 0
        %v2462 = vsel %vm1232, 1, 0
        %v2463 = vsel %vm1233, 1, 0
        %v2464 = vsel %vm1234, 1, 0
        %v2465 = vsel %vm1235, 1, 0
        %v2466 = vsel %vm1236, 1, 0
        %v2467 = vsel %vm1237, 1, 0
        %v2468 = vsel %vm1238, 1, 0
        %v2469 = vsel %vm1239, 1, 0
        %v2470 = vsel %vm1240, 1, 0
        %v2471 = vsel %vm1241, 1, 0
        %v2472 = vsel %vm1242, 1, 0
        %v2473 = vsel %vm1243, 1, 0
        %v2474 = vsel %vm1244, 1, 0
        %v2475 = vsel %vm1245, 1, 0
        %v2476 = vsel %vm1246, 1, 0
        %v2477 = vsel %vm1247, 1, 0
        %v2478 = vsel %vm1248, 1, 0
        %v2479 = vsel %vm1249, 1, 0
        %v2480 = vsel %vm1250, 1, 0
        %v2481 = vsel %vm1251, 1, 0
        %v2482 = vsel %vm1252, 1, 0
        %v2483 = vsel %vm1253, 1, 0
        %v2484 = vsel %vm1254, 1, 0
        %v2485 = vsel %vm1255, 1, 0
        %v2486 = vsel %vm1256, 1, 0
        %v2487 = vsel %vm1257, 1, 0
        %v2488 = vsel %vm1258, 1, 0
        %v2489 = vsel %vm1259, 1, 0
        %v2490 = vsel %vm1260, 1, 0
        %v2491 = vsel %vm1261, 1, 0
        %v2492 = vsel %vm1262, 1, 0
        %v2493 = vsel %vm1263, 1, 0
        %v2494 = vsel %vm1264, 1, 0
        %v2495 = vsel %vm1265, 1, 0
        %v2496 = vsel %vm1266, 1, 0
        %v2497 = vsel %vm1267, 1, 0
        %v2498 = vsel %vm1268, 1, 0
        %v2499 = vsel %vm1269, 1, 0
        %v2500 = vsel %vm1270, 1, 0
        %v2501 = vsel %vm1271, 1, 0
        %v2502 = vsel %vm1272, 1, 0
        %v2503 = vsel %vm1273, 1, 0
        %v2504 = vsel %vm1274, 1, 0
        %v2505 = vsel %vm1275, 1, 0
        %v2506 = vsel %vm1276, 1, 0
        %v2507 = vsel %vm1277, 1, 0
        %v2508 = vsel %vm1278, 1, 0
        %v2509 = vsel %vm1279, 1, 0
        %v2510 = vsel %vm1280, 1, 0
        %v2511 = vsel %vm1281, 1, 0
        %v2512 = vsel %vm1282, 1, 0
        %v2513 = vsel %vm1283, 1, 0
        %v2514 = vsel %vm1284, 1, 0
        %v2515 = vsel %vm1285, 1, 0
        %v2516 = vsel %vm1286, 1, 0
        %v2517 = vsel %vm1287, 1, 0
        %v2518 = vsel %vm1288, 1, 0
        %v2519 = vsel %vm1289, 1, 0
        %v2520 = vsel %vm1290, 1, 0
        %v2521 = vsel %vm1291, 1, 0
        %v2522 = vsel %vm1292, 1, 0
        %v2523 = vsel %vm1293, 1, 0
        %v2524 = vsel %vm1294, 1, 0
        %v2525 = vsel %vm1295, 1, 0
        %v2526 = vsel %vm1296, 1, 0
        %v2527 = vsel %vm1297, 1, 0
        %v2528 = vsel %vm1298, 1, 0
        %v2529 = vsel %vm1299, 1, 0
        %v2530 = vsel %vm1300, 1, 0
        %v2531 = vsel %vm1301, 1, 0
        %v2532 = vsel %vm1302, 1, 0
        %v2533 = vsel %vm1303, 1, 0
        %v2534 = vsel %vm1304, 1, 0
        %v2535 = vsel %vm1305, 1, 0
        %v2536 = vsel %vm1306, 1, 0
        %v2537 = vsel %vm1307, 1, 0
        %v2538 = vsel %vm1308, 1, 0
        %v2539 = vsel %vm1309, 1, 0
        %v2540 = vsel %vm1310, 1, 0
        %v2541 = vsel %vm1311, 1, 0
        %v2542 = vsel %vm1312, 1, 0
        %v2543 = vsel %vm1313, 1, 0
        %v2544 = vsel %vm1314, 1, 0
        %v2545 = vsel %vm1315, 1, 0
        %v2546 = vsel %vm1316, 1, 0
        %v2547 = vsel %vm1317, 1, 0
        %v2548 = vsel %vm1318, 1, 0
        %v2549 = vsel %vm1319, 1, 0
        %v2550 = vsel %vm1320, 1, 0
        %v2551 = vsel %vm1321, 1, 0
        %v2552 = vsel %vm1322, 1, 0
        %v2553 = vsel %vm1323, 1, 0
        %v2554 = vsel %vm1324, 1, 0
        %v2555 = vsel %vm1325, 1, 0
        %v2556 = vsel %vm1326, 1, 0
        %v2557 = vsel %vm1327, 1, 0
        %v2558 = vsel %vm1328, 1, 0
        %v2559 = vsel %vm1329, 1, 0
        %v2560 = vsel %vm1330, 1, 0
        %v2561 = vsel %vm1331, 1, 0
        %v2562 = vsel %vm1332, 1, 0
        %v2563 = vsel %vm1333, 1, 0
        %v2564 = vsel %vm1334, 1, 0
        %v2565 = vsel %vm1335, 1, 0
        %v2566 = vsel %vm1336, 1, 0
        %v2567 = vsel %vm1337, 1, 0
        %v2568 = vsel %vm1338, 1, 0
        %v2569 = vsel %vm1339, 1, 0
        %v2570 = vsel %vm1340, 1, 0
        %v2571 = vsel %vm1341, 1, 0
        %v2572 = vsel %vm1342, 1, 0
        %v2573 = vsel %vm1343, 1, 0
        %v2574 = vsel %vm1344, 1, 0
        %v2575 = vsel %vm1345, 1, 0
        %v2576 = vsel %vm1346, 1, 0
        %v2577 = vsel %vm1347, 1, 0
        %v2578 = vsel %vm1348, 1, 0
        %v2579 = vsel %vm1349, 1, 0
        %v2580 = vsel %vm1350, 1, 0
        %v2581 = vsel %vm1351, 1, 0
        %v2582 = vsel %vm1352, 1, 0
        %v2583 = vsel %vm1353, 1, 0
        %v2584 = vsel %vm1354, 1, 0
        %v2585 = vsel %vm1355, 1, 0
        %v2586 = vsel %vm1356, 1, 0
        %v2587 = vsel %vm1357, 1, 0
        %v2588 = vsel %vm1358, 1, 0
        %v2589 = vsel %vm1359, 1, 0
        %v2590 = vsel %vm1360, 1, 0
        %v2591 = vsel %vm1361, 1, 0
        %v2592 = vsel %vm1362, 1, 0
        %v2593 = vsel %vm1363, 1, 0
        %v2594 = vsel %vm1364, 1, 0
        %v2595 = vsel %vm1365, 1, 0
        %v2596 = vsel %vm1366, 1, 0
        %v2597 = vsel %vm1367, 1, 0
        %v2598 = vsel %vm1368, 1, 0
        %v2599 = vsel %vm1369, 1, 0
        %v2600 = vsel %vm1370, 1, 0
        %v2601 = vsel %vm1371, 1, 0
        %v2602 = vsel %vm1372, 1, 0
        %v2603 = vsel %vm1373, 1, 0
        %v2604 = vsel %vm1374, 1, 0
        %v2605 = vsel %vm1375, 1, 0
        %v2606 = vsel %vm1376, 1, 0
        %v2607 = vsel %vm1377, 1, 0
        %v2608 = vsel %vm1378, 1, 0
        %v2609 = vsel %vm1379, 1, 0
        %v2610 = vsel %vm1380, 1, 0
        %v2611 = vsel %vm1381, 1, 0
        %v2612 = vsel %vm1382, 1, 0
        %v2613 = vsel %vm1383, 1, 0
        %v2614 = vsel %vm1384, 1, 0
        %v2615 = vsel %vm1385, 1, 0
        %v2616 = vsel %vm1386, 1, 0
        %v2617 = vsel %vm1387, 1, 0
        %v2618 = vsel %vm1388, 1, 0
        %v2619 = vsel %vm1389, 1, 0
        %v2620 = vsel %vm1390, 1, 0
        %v2621 = vsel %vm1391, 1, 0
        %v2622 = vsel %vm1392, 1, 0
        %v2623 = vsel %vm1393, 1, 0
        %v2624 = vsel %vm1394, 1, 0
        %v2625 = vsel %vm1395, 1, 0
        %v2626 = vsel %vm1396, 1, 0
        %v2627 = vsel %vm1397, 1, 0
        %v2628 = vsel %vm1398, 1, 0
        %v2629 = vsel %vm1399, 1, 0
        %v2630 = vsel %vm1400, 1, 0
        %v2631 = vsel %vm1401, 1, 0
        %v2632 = vsel %vm1402, 1, 0
        %v2633 = vsel %vm1403, 1, 0
        %v2634 = vsel %vm1404, 1, 0
        %v2635 = vsel %vm1405, 1, 0
        %v2636 = vsel %vm1406, 1, 0
        %v2637 = vsel %vm1407, 1, 0
        %v2638 = vsel %vm1408, 1, 0
        %v2639 = vsel %vm1409, 1, 0
        %v2640 = vsel %vm1410, 1, 0
        %v2641 = vsel %vm1411, 1, 0
        %v2642 = vsel %vm1412, 1, 0
        %v2643 = vsel %vm1413, 1, 0
        %v2644 = vsel %vm1414, 1, 0
        %v2645 = vsel %vm1415, 1, 0
        %v2646 = vsel %vm1416, 1, 0
        %v2647 = vsel %vm1417, 1, 0
        %v2648 = vsel %vm1418, 1, 0
        %v2649 = vsel %vm1419, 1, 0
        %v2650 = vsel %vm1420, 1, 0
        %v2651 = vsel %vm1421, 1, 0
        %v2652 = vsel %vm1422, 1, 0
        %v2653 = vsel %vm1423, 1, 0
        %v2654 = vsel %vm1424, 1, 0
        %v2655 = vsel %vm1425, 1, 0
        %v2656 = vsel %vm1426, 1, 0
        %v2657 = vsel %vm1427, 1, 0
        %v2658 = vsel %vm1428, 1, 0
        %v2659 = vsel %vm1429, 1, 0
        %v2660 = vsel %vm1430, 1, 0
        %v2661 = vsel %vm1431, 1, 0
        %v2662 = vsel %vm1432, 1, 0
        %v2663 = vsel %vm1433, 1, 0
        %v2664 = vsel %vm1434, 1, 0
        %v2665 = vsel %vm1435, 1, 0
        %v2666 = vsel %vm1436, 1, 0
        %v2667 = vsel %vm1437, 1, 0
        %v2668 = vsel %vm1438, 1, 0
        %v2669 = vsel %vm1439, 1, 0
        %v2670 = vsel %vm1440, 1, 0
        %v2671 = vsel %vm1441, 1, 0
        %v2672 = vsel %vm1442, 1, 0
        %v2673 = vsel %vm1443, 1, 0
        %v2674 = vsel %vm1444, 1, 0
        %v2675 = vsel %vm1445, 1, 0
        %v2676 = vsel %vm1446, 1, 0
        %v2677 = vsel %vm1447, 1, 0
        %v2678 = vsel %vm1448, 1, 0
        %v2679 = vsel %vm1449, 1, 0
        %v2680 = vsel %vm1450, 1, 0
        %v2681 = vsel %vm1451, 1, 0
        %v2682 = vsel %vm1452, 1, 0
        %v2683 = vsel %vm1453, 1, 0
        %v2684 = vsel %vm1454, 1, 0
        %v2685 = vsel %vm1455, 1, 0
        %v2686 = vsel %vm1456, 1, 0
        %v2687 = vsel %vm1457, 1, 0
        %v2688 = vsel %vm1458, 1, 0
        %v2689 = vsel %vm1459, 1, 0
        %v2690 = vsel %vm1460, 1, 0
        %v2691 = vsel %vm1461, 1, 0
        %v2692 = vsel %vm1462, 1, 0
        %v2693 = vsel %vm1463, 1, 0
        %v2694 = vsel %vm1464, 1, 0
        %v2695 = vsel %vm1465, 1, 0
        %v2696 = vsel %vm1466, 1, 0
        %v2697 = vsel %vm1467, 1, 0
        %v2698 = vsel %vm1468, 1, 0
        %v2699 = vsel %vm1469, 1, 0
        %v2700 = vsel %vm1470, 1, 0
        %v2701 = vsel %vm1471, 1, 0
        %v2702 = vsel %vm1472, 1, 0
        %v2703 = vsel %vm1473, 1, 0
        %v2704 = vsel %vm1474, 1, 0
        %v2705 = vsel %vm1475, 1, 0
        %v2706 = vsel %vm1476, 1, 0
        %v2707 = vsel %vm1477, 1, 0
        %v2708 = vsel %vm1478, 1, 0
        %v2709 = vsel %vm1479, 1, 0
        %v2710 = vsel %vm1480, 1, 0
        %v2711 = vsel %vm1481, 1, 0
        %v2712 = vsel %vm1482, 1, 0
        %v2713 = vsel %vm1483, 1, 0
        %v2714 = vsel %vm1484, 1, 0
        %v2715 = vsel %vm1485, 1, 0
        %v2716 = vsel %vm1486, 1, 0
        %v2717 = vsel %vm1487, 1, 0
        %v2718 = vsel %vm1488, 1, 0
        %v2719 = vsel %vm1489, 1, 0
        %v2720 = vsel %vm1490, 1, 0
        %v2721 = vsel %vm1491, 1, 0
        %v2722 = vsel %vm1492, 1, 0
        %v2723 = vsel %vm1493, 1, 0
        %v2724 = vsel %vm1494, 1, 0
        %v2725 = vsel %vm1495, 1, 0
        %v2726 = vsel %vm1496, 1, 0
        %v2727 = vsel %vm1497, 1, 0
        %v2728 = vsel %vm1498, 1, 0
        %v2729 = vsel %vm1499, 1, 0
        %v2730 = vsel %vm1500, 1, 0
        %v2731 = vsel %vm1501, 1, 0
        %v2732 = vsel %vm1502, 1, 0
        %v2733 = vsel %vm1503, 1, 0
        %v2734 = vsel %vm1504, 1, 0
        %v2735 = vsel %vm1505, 1, 0
        %v2736 = vsel %vm1506, 1, 0
        %v2737 = vsel %vm1507, 1, 0
        %v2738 = vsel %vm1508, 1, 0
        %v2739 = vsel %vm1509, 1, 0
        %v2740 = vsel %vm1510, 1, 0
        %v2741 = vsel %vm1511, 1, 0
        %v2742 = vsel %vm1512, 1, 0
        %v2743 = vsel %vm1513, 1, 0
        %v2744 = vsel %vm1514, 1, 0
        %v2745 = vsel %vm1515, 1, 0
        %v2746 = vsel %vm1516, 1, 0
        %v2747 = vsel %vm1517, 1, 0
        %v2748 = vsel %vm1518, 1, 0
        %v2749 = vsel %vm1519, 1, 0
        %v2750 = vsel %vm1520, 1, 0
        %v2751 = vsel %vm1521, 1, 0
        %v2752 = vsel %vm1522, 1, 0
        %v2753 = vsel %vm1523, 1, 0
        %v2754 = vsel %vm1524, 1, 0
        %v2755 = vsel %vm1525, 1, 0
        %v2756 = vsel %vm1526, 1, 0
        %v2757 = vsel %vm1527, 1, 0
        %v2758 = vsel %vm1528, 1, 0
        %v2759 = vsel %vm1529, 1, 0
        %v2760 = vsel %vm1530, 1, 0
        %v2761 = vsel %vm1531, 1, 0
        %v2762 = vsel %vm1532, 1, 0
        %v2763 = vsel %vm1533, 1, 0
        %v2764 = vsel %vm1534, 1, 0
        %v2765 = vsel %vm1535, 1, 0
        %v2766 = vsel %vm1536, 1, 0
        %v2767 = vsel %vm1537, 1, 0
        %v2768 = vsel %vm1538, 1, 0
        %v2769 = vsel %vm1539, 1, 0
        %v2770 = vsel %vm1540, 1, 0
        %v2771 = vsel %vm1541, 1, 0
        %v2772 = vsel %vm1542, 1, 0
        %v2773 = vsel %vm1543, 1, 0
        %v2774 = vsel %vm1544, 1, 0
        %v2775 = vsel %vm1545, 1, 0
        %v2776 = vsel %vm1546, 1, 0
        %v2777 = vsel %vm1547, 1, 0
        %v2778 = vsel %vm1548, 1, 0
        %v2779 = vsel %vm1549, 1, 0
        %v2780 = vsel %vm1550, 1, 0
        %v2781 = vsel %vm1551, 1, 0
        %v2782 = vsel %vm1552, 1, 0
        %v2783 = vsel %vm1553, 1, 0
        %v2784 = vsel %vm1554, 1, 0
        %v2785 = vsel %vm1555, 1, 0
        %v2786 = vsel %vm1556, 1, 0
        %v2787 = vsel %vm1557, 1, 0
        %v2788 = vsel %vm1558, 1, 0
        %v2789 = vsel %vm1559, 1, 0
        %v2790 = vsel %vm1560, 1, 0
        %v2791 = vsel %vm1561, 1, 0
        %v2792 = vsel %vm1562, 1, 0
        %v2793 = vsel %vm1563, 1, 0
        %v2794 = vsel %vm1564, 1, 0
        %v2795 = vsel %vm1565, 1, 0
        %v2796 = vsel %vm1566, 1, 0
        %v2797 = vsel %vm1567, 1, 0
        %v2798 = vsel %vm1568, 1, 0
        %v2799 = vsel %vm1569, 1, 0
        %v2800 = vsel %vm1570, 1, 0
        %v2801 = vsel %vm1571, 1, 0
        %v2802 = vsel %vm1572, 1, 0
        %v2803 = vsel %vm1573, 1, 0
        %v2804 = vsel %vm1574, 1, 0
        %v2805 = vsel %vm1575, 1, 0
        %v2806 = vsel %vm1576, 1, 0
        %v2807 = vsel %vm1577, 1, 0
        %v2808 = vsel %vm1578, 1, 0
        %v2809 = vsel %vm1579, 1, 0
        %v2810 = vsel %vm1580, 1, 0
        %v2811 = vsel %vm1581, 1, 0
        %v2812 = vsel %vm1582, 1, 0
        %v2813 = vsel %vm1583, 1, 0
        %v2814 = vsel %vm1584, 1, 0
        %v2815 = vsel %vm1585, 1, 0
        %v2816 = vsel %vm1586, 1, 0
        %v2817 = vsel %vm1587, 1, 0
        %v2818 = vsel %vm1588, 1, 0
        %v2819 = vsel %vm1589, 1, 0
        %v2820 = vsel %vm1590, 1, 0
        %v2821 = vsel %vm1591, 1, 0
        %v2822 = vsel %vm1592, 1, 0
        %v2823 = vsel %vm1593, 1, 0
        %v2824 = vsel %vm1594, 1, 0
        %v2825 = vsel %vm1595, 1, 0
        %v2826 = vsel %vm1596, 1, 0
        %v2827 = vsel %vm1597, 1, 0
        %v2828 = vsel %vm1598, 1, 0
        %v2829 = vsel %vm1599, 1, 0
        %v2830 = vsel %vm1600, 1, 0
        %v2831 = vsel %vm1601, 1, 0
        %v2832 = vsel %vm1602, 1, 0
        %v2833 = vsel %vm1603, 1, 0
        %v2834 = vsel %vm1604, 1, 0
        %v2835 = vsel %vm1605, 1, 0
        %v2836 = vsel %vm1606, 1, 0
        %v2837 = vsel %vm1607, 1, 0
        %v2838 = vsel %vm1608, 1, 0
        %v2839 = vsel %vm1609, 1, 0
        %v2840 = vsel %vm1610, 1, 0
        %v2841 = vsel %vm1611, 1, 0
        %v2842 = vsel %vm1612, 1, 0
        %v2843 = vsel %vm1613, 1, 0
        %v2844 = vsel %vm1614, 1, 0
        %v2845 = vsel %vm1615, 1, 0
        %v2846 = vsel %vm1616, 1, 0
        %v2847 = vsel %vm1617, 1, 0
        %v2848 = vsel %vm1618, 1, 0
        %v2849 = vsel %vm1619, 1, 0
        %v2850 = vsel %vm1620, 1, 0
        %v2851 = vsel %vm1621, 1, 0
        %v2852 = vsel %vm1622, 1, 0
        %v2853 = vsel %vm1623, 1, 0
        %v2854 = vsel %vm1624, 1, 0
        %v2855 = vsel %vm1625, 1, 0
        %v2856 = vsel %vm1626, 1, 0
        %v2857 = vsel %vm1627, 1, 0
        %v2858 = vsel %vm1628, 1, 0
        %v2859 = vsel %vm1629, 1, 0
        %v2860 = vsel %vm1630, 1, 0
        %v2861 = vsel %vm1631, 1, 0
        %v2862 = vsel %vm1632, 1, 0
        %v2863 = vsel %vm1633, 1, 0
        %v2864 = vsel %vm1634, 1, 0
        %v2865 = vsel %vm1635, 1, 0
        %v2866 = vsel %vm1636, 1, 0
        %v2867 = vsel %vm1637, 1, 0
        %v2868 = vsel %vm1638, 1, 0
        %v2869 = vsel %vm1639, 1, 0
        %v2870 = vsel %vm1640, 1, 0
        %v2871 = vsel %vm1641, 1, 0
        %v2872 = vsel %vm1642, 1, 0
        %v2873 = vsel %vm1643, 1, 0
        %v2874 = vsel %vm1644, 1, 0
        %v2875 = vsel %vm1645, 1, 0
        %v2876 = vsel %vm1646, 1, 0
        %v2877 = vsel %vm1647, 1, 0
        %v2878 = vsel %vm1648, 1, 0
        %v2879 = vsel %vm1649, 1, 0
        %v2880 = vsel %vm1650, 1, 0
        %v2881 = vsel %vm1651, 1, 0
        %v2882 = vsel %vm1652, 1, 0
        %v2883 = vsel %vm1653, 1, 0
        %v2884 = vsel %vm1654, 1, 0
        %v2885 = vsel %vm1655, 1, 0
        %v2886 = vsel %vm1656, 1, 0
        %v2887 = vsel %vm1657, 1, 0
        %v2888 = vsel %vm1658, 1, 0
        %v2889 = vsel %vm1659, 1, 0
        %v2890 = vsel %vm1660, 1, 0
        %v2891 = vsel %vm1661, 1, 0
        %v2892 = vsel %vm1662, 1, 0
        %v2893 = vsel %vm1663, 1, 0
        %v2894 = vsel %vm1664, 1, 0
        %v2895 = vsel %vm1665, 1, 0
        %v2896 = vsel %vm1666, 1, 0
        %v2897 = vsel %vm1667, 1, 0
        %v2898 = vsel %vm1668, 1, 0
        %v2899 = vsel %vm1669, 1, 0
        %v2900 = vsel %vm1670, 1, 0
        %v2901 = vsel %vm1671, 1, 0
        %v2902 = vsel %vm1672, 1, 0
        %v2903 = vsel %vm1673, 1, 0
        %v2904 = vsel %vm1674, 1, 0
        %v2905 = vsel %vm1675, 1, 0
        %v2906 = vsel %vm1676, 1, 0
        %v2907 = vsel %vm1677, 1, 0
        %v2908 = vsel %vm1678, 1, 0
        %v2909 = vsel %vm1679, 1, 0
        %v2910 = vsel %vm1680, 1, 0
        %v2911 = vsel %vm1681, 1, 0
        %v2912 = vsel %vm1682, 1, 0
        %v2913 = vsel %vm1683, 1, 0
        %v2914 = vsel %vm1684, 1, 0
        %v2915 = vsel %vm1685, 1, 0
        %v2916 = vsel %vm1686, 1, 0
        %v2917 = vsel %vm1687, 1, 0
        %v2918 = vsel %vm1688, 1, 0
        %v2919 = vsel %vm1689, 1, 0
        %v2920 = vsel %vm1690, 1, 0
        %v2921 = vsel %vm1691, 1, 0
        %v2922 = vsel %vm1692, 1, 0
        %v2923 = vsel %vm1693, 1, 0
        %v2924 = vsel %vm1694, 1, 0
        %v2925 = vsel %vm1695, 1, 0
        %v2926 = vsel %vm1696, 1, 0
        %v2927 = vsel %vm1697, 1, 0
        %v2928 = vsel %vm1698, 1, 0
        %v2929 = vsel %vm1699, 1, 0
        %v2930 = vsel %vm1700, 1, 0
        %v2931 = vsel %vm1701, 1, 0
        %v2932 = vsel %vm1702, 1, 0
        %v2933 = vsel %vm1703, 1, 0
        %v2934 = vsel %vm1704, 1, 0
        %v2935 = vsel %vm1705, 1, 0
        %v2936 = vsel %vm1706, 1, 0
        %v2937 = vsel %vm1707, 1, 0
        %v2938 = vsel %vm1708, 1, 0
        %v2939 = vsel %vm1709, 1, 0
        %v2940 = vsel %vm1710, 1, 0
        %v2941 = vsel %vm1711, 1, 0
        %v2942 = vsel %vm1712, 1, 0
        %v2943 = vsel %vm1713, 1, 0
        %v2944 = vsel %vm1714, 1, 0
        %v2945 = vsel %vm1715, 1, 0
        %v2946 = vsel %vm1716, 1, 0
        %v2947 = vsel %vm1717, 1, 0
        %v2948 = vsel %vm1718, 1, 0
        %v2949 = vsel %vm1719, 1, 0
        %v2950 = vsel %vm1720, 1, 0
        %v2951 = vsel %vm1721, 1, 0
        %v2952 = vsel %vm1722, 1, 0
        %v2953 = vsel %vm1723, 1, 0
        %v2954 = vsel %vm1724, 1, 0
        %v2955 = vsel %vm1725, 1, 0
        %v2956 = vsel %vm1726, 1, 0
        %v2957 = vsel %vm1727, 1, 0
        %v2958 = vsel %vm1728, 1, 0
        %v2959 = vsel %vm1729, 1, 0
        %v2960 = vsel %vm1730, 1, 0
        %v2961 = vsel %vm1731, 1, 0
        %v2962 = vsel %vm1732, 1, 0
        %v2963 = vsel %vm1733, 1, 0
        %v2964 = vsel %vm1734, 1, 0
        %v2965 = vsel %vm1735, 1, 0
        %v2966 = vsel %vm1736, 1, 0
        %v2967 = vsel %vm1737, 1, 0
        %v2968 = vsel %vm1738, 1, 0
        %v2969 = vsel %vm1739, 1, 0
        %v2970 = vsel %vm1740, 1, 0
        %v2971 = vsel %vm1741, 1, 0
        %v2972 = vsel %vm1742, 1, 0
        %v2973 = vsel %vm1743, 1, 0
        %v2974 = vsel %vm1744, 1, 0
        %v2975 = vsel %vm1745, 1, 0
        %v2976 = vsel %vm1746, 1, 0
        %v2977 = vsel %vm1747, 1, 0
        %v2978 = vsel %vm1748, 1, 0
        %v2979 = vsel %vm1749, 1, 0
        %v2980 = vsel %vm1750, 1, 0
        %v2981 = vsel %vm1751, 1, 0
        %v2982 = vsel %vm1752, 1, 0
        %v2983 = vsel %vm1753, 1, 0
        %v2984 = vsel %vm1754, 1, 0
        %v2985 = vsel %vm1755, 1, 0
        %v2986 = vsel %vm1756, 1, 0
        %v2987 = vsel %vm1757, 1, 0
        %v2988 = vsel %vm1758, 1, 0
        %v2989 = vsel %vm1759, 1, 0
        %v2990 = vsel %vm1760, 1, 0
        %v2991 = vsel %vm1761, 1, 0
        %v2992 = vsel %vm1762, 1, 0
        %v2993 = vsel %vm1763, 1, 0
        %v2994 = vsel %vm1764, 1, 0
        %v2995 = vsel %vm1765, 1, 0
        %v2996 = vsel %vm1766, 1, 0
        %v2997 = vsel %vm1767, 1, 0
        %v2998 = vsel %vm1768, 1, 0
        %v2999 = vsel %vm1769, 1, 0
        %v3000 = vsel %vm1770, 1, 0
        %v3001 = vsel %vm1771, 1, 0
        %v3002 = vsel %vm1772, 1, 0
        %v3003 = vsel %vm1773, 1, 0
        %v3004 = vsel %vm1774, 1, 0
        %v3005 = vsel %vm1775, 1, 0
        %v3006 = vsel %vm1776, 1, 0
        %v3007 = vsel %vm1777, 1, 0
        %v3008 = vsel %vm1778, 1, 0
        %v3009 = vsel %vm1779, 1, 0
        %v3010 = vsel %vm1780, 1, 0
        %v3011 = vsel %vm1781, 1, 0
        %v3012 = vsel %vm1782, 1, 0
        %v3013 = vsel %vm1783, 1, 0
        %v3014 = vsel %vm1784, 1, 0
        %v3015 = vsel %vm1785, 1, 0
        %v3016 = vsel %vm1786, 1, 0
        %v3017 = vsel %vm1787, 1, 0
        %v3018 = vsel %vm1788, 1, 0
        %v3019 = vsel %vm1789, 1, 0
        %v3020 = vsel %vm1790, 1, 0
        %v3021 = vsel %vm1791, 1, 0
        %v3022 = vsel %vm1792, 1, 0
        %v3023 = vsel %vm1793, 1, 0
        %v3024 = vsel %vm1794, 1, 0
        %v3025 = vsel %vm1795, 1, 0
        %v3026 = vsel %vm1796, 1, 0
        %v3027 = vsel %vm1797, 1, 0
        %v3028 = vsel %vm1798, 1, 0
        %v3029 = vsel %vm1799, 1, 0
        %v3030 = vsel %vm1800, 1, 0
        %v3031 = vsel %vm1801, 1, 0
        %v3032 = vsel %vm1802, 1, 0
        %v3033 = vsel %vm1803, 1, 0
        %v3034 = vsel %vm1804, 1, 0
        %v3035 = vsel %vm1805, 1, 0
        %v3036 = vsel %vm1806, 1, 0
        %v3037 = vsel %vm1807, 1, 0
        %v3038 = vsel %vm1808, 1, 0
        %v3039 = vcvt.s32.f32 %v1809
        %v3040 = vcvt.s32.f32 %v1810
        %v3041 = vcvt.s32.f32 %v1811
        %v3042 = vcvt.s32.f32 %v1812
        %v3043 = vcvt.s32.f32 %v1813
        %v3044 = vcvt.s32.f32 %v1814
        %v3045 = vcvt.s32.f32 %v1815
        %v3046 = vcvt.s32.f32 %v1816
        %v3047 = vcvt.s32.f32 %v1817
        %v3048 = vcvt.s32.f32 %v1818
        %v3049 = vcvt.s32.f32 %v1819
        %v3050 = vcvt.s32.f32 %v1820
        %v3051 = vcvt.s32.f32 %v1821
        %v3052 = vcvt.s32.f32 %v1822
        %v3053 = vcvt.s32.f32 %v1823
        %v3054 = vcvt.s32.f32 %v1824
        %v3055 = vcvt.s32.f32 %v1825
        %v3056 = vcvt.s32.f32 %v1826
        %v3057 = vcvt.s32.f32 %v1827
        %v3058 = vcvt.s32.f32 %v1828
        %v3059 = vcvt.s32.f32 %v1829
        %v3060 = vcvt.s32.f32 %v1830
        %v3061 = vcvt.s32.f32 %v1831
        %v3062 = vcvt.s32.f32 %v1832
        %v3063 = vcvt.s32.f32 %v1833
        %v3064 = vcvt.s32.f32 %v1834
        %v3065 = vcvt.s32.f32 %v1835
        %v3066 = vcvt.s32.f32 %v1836
        %v3067 = vcvt.s32.f32 %v1837
        %v3068 = vcvt.s32.f32 %v1838
        %v3069 = vcvt.s32.f32 %v1839
        %v3070 = vcvt.s32.f32 %v1840
        %v3071 = vcvt.s32.f32 %v1841
        %v3072 = vcvt.s32.f32 %v1842
        %v3073 = vcvt.s32.f32 %v1843
        %v3074 = vcvt.s32.f32 %v1844
        %v3075 = vcvt.s32.f32 %v1845
        %v3076 = vcvt.s32.f32 %v1846
        %v3077 = vcvt.s32.f32 %v1847
        %v3078 = vcvt.s32.f32 %v1848
        %v3079 = vcvt.s32.f32 %v1849
        %v3080 = vcvt.s32.f32 %v1850
        %v3081 = vcvt.s32.f32 %v1851
        %v3082 = vcvt.s32.f32 %v1852
        %v3083 = vcvt.s32.f32 %v1853
        %v3084 = vcvt.s32.f32 %v1854
        %v3085 = vcvt.s32.f32 %v1855
        %v3086 = vcvt.s32.f32 %v1856
        %v3087 = vcvt.s32.f32 %v1857
        %v3088 = vcvt.s32.f32 %v1858
        %v3089 = vcvt.s32.f32 %v1859
        %v3090 = vcvt.s32.f32 %v1860
        %v3091 = vcvt.s32.f32 %v1861
        %v3092 = vcvt.s32.f32 %v1862
        %v3093 = vcvt.s32.f32 %v1863
        %v3094 = vcvt.s32.f32 %v1864
        %v3095 = vcvt.s32.f32 %v1865
        %v3096 = vcvt.s32.f32 %v1866
        %v3097 = vcvt.s32.f32 %v1867
        %v3098 = vcvt.s32.f32 %v1868
        %v3099 = vcvt.s32.f32 %v1869
        %v3100 = vcvt.s32.f32 %v1870
        %v3101 = vcvt.s32.f32 %v1871
        %v3102 = vcvt.s32.f32 %v1872
        %v3103 = vcvt.s32.f32 %v1873
        %v3104 = vcvt.s32.f32 %v1874
        %v3105 = vcvt.s32.f32 %v1875
        %v3106 = vcvt.s32.f32 %v1876
        %v3107 = vcvt.s32.f32 %v1877
        %v3108 = vcvt.s32.f32 %v1878
        %v3109 = vcvt.s32.f32 %v1879
        %v3110 = vcvt.s32.f32 %v1880
        %v3111 = vcvt.s32.f32 %v1881
        %v3112 = vcvt.s32.f32 %v1882
        %v3113 = vcvt.s32.f32 %v1883
        %v3114 = vcvt.s32.f32 %v1884
        %v3115 = vcvt.s32.f32 %v1885
        %v3116 = vcvt.s32.f32 %v1886
        %v3117 = vcvt.s32.f32 %v1887
        %v3118 = vcvt.s32.f32 %v1888
        %v3119 = vcvt.s32.f32 %v1889
        %v3120 = vcvt.s32.f32 %v1890
        %v3121 = vcvt.s32.f32 %v1891
        %v3122 = vcvt.s32.f32 %v1892
        %v3123 = vcvt.s32.f32 %v1893
        %v3124 = vcvt.s32.f32 %v1894
        %v3125 = vcvt.s32.f32 %v1895
        %v3126 = vcvt.s32.f32 %v1896
        %v3127 = vcvt.s32.f32 %v1897
        %v3128 = vcvt.s32.f32 %v1898
        %v3129 = vcvt.s32.f32 %v1899
        %v3130 = vcvt.s32.f32 %v1900
        %v3131 = vcvt.s32.f32 %v1901
        %v3132 = vcvt.s32.f32 %v1902
        %v3133 = vcvt.s32.f32 %v1903
        %v3134 = vcvt.s32.f32 %v1904
        %v3135 = vcvt.s32.f32 %v1905
        %v3136 = vcvt.s32.f32 %v1906
        %v3137 = vcvt.s32.f32 %v1907
        %v3138 = vcvt.s32.f32 %v1908
        %v3139 = vcvt.s32.f32 %v1909
        %v3140 = vcvt.s32.f32 %v1910
        %v3141 = vcvt.s32.f32 %v1911
        %v3142 = vcvt.s32.f32 %v1912
        %v3143 = vcvt.s32.f32 %v1913
        %v3144 = vcvt.s32.f32 %v1914
        %v3145 = vcvt.s32.f32 %v1915
        %v3146 = vcvt.s32.f32 %v1916
        %v3147 = vcvt.s32.f32 %v1917
        %v3148 = vcvt.s32.f32 %v1918
        %v3149 = vcvt.s32.f32 %v1919
        %v3150 = vcvt.s32.f32 %v1920
        %v3151 = vcvt.s32.f32 %v1921
        %v3152 = vcvt.s32.f32 %v1922
        %v3153 = vcvt.s32.f32 %v1923
        %v3154 = vcvt.s32.f32 %v1924
        %v3155 = vcvt.s32.f32 %v1925
        %v3156 = vcvt.s32.f32 %v1926
        %v3157 = vcvt.s32.f32 %v1927
        %v3158 = vcvt.s32.f32 %v1928
        %v3159 = vcvt.s32.f32 %v1929
        %v3160 = vcvt.s32.f32 %v1930
        %v3161 = vcvt.s32.f32 %v1931
        %v3162 = vcvt.s32.f32 %v1932
        %v3163 = vcvt.s32.f32 %v1933
        %v3164 = vcvt.s32.f32 %v1934
        %v3165 = vcvt.s32.f32 %v1935
        %v3166 = vcvt.s32.f32 %v1936
        %v3167 = vcvt.s32.f32 %v1937
        %v3168 = vcvt.s32.f32 %v1938
        %v3169 = vcvt.s32.f32 %v1939
        %v3170 = vcvt.s32.f32 %v1940
        %v3171 = vcvt.s32.f32 %v1941
        %v3172 = vcvt.s32.f32 %v1942
        %v3173 = vcvt.s32.f32 %v1943
        %v3174 = vcvt.s32.f32 %v1944
        %v3175 = vcvt.s32.f32 %v1945
        %v3176 = vcvt.s32.f32 %v1946
        %v3177 = vcvt.s32.f32 %v1947
        %v3178 = vcvt.s32.f32 %v1948
        %v3179 = vcvt.s32.f32 %v1949
        %v3180 = vcvt.s32.f32 %v1950
        %v3181 = vcvt.s32.f32 %v1951
        %v3182 = vcvt.s32.f32 %v1952
        %v3183 = vcvt.s32.f32 %v1953
        %v3184 = vcvt.s32.f32 %v1954
        %v3185 = vcvt.s32.f32 %v1955
        %v3186 = vcvt.s32.f32 %v1956
        %v3187 = vcvt.s32.f32 %v1957
        %v3188 = vcvt.s32.f32 %v1958
        %v3189 = vcvt.s32.f32 %v1959
        %v3190 = vcvt.s32.f32 %v1960
        %v3191 = vcvt.s32.f32 %v1961
        %v3192 = vcvt.s32.f32 %v1962
        %v3193 = vcvt.s32.f32 %v1963
        %v3194 = vcvt.s32.f32 %v1964
        %v3195 = vcvt.s32.f32 %v1965
        %v3196 = vcvt.s32.f32 %v1966
        %v3197 = vcvt.s32.f32 %v1967
        %v3198 = vcvt.s32.f32 %v1968
        %v3199 = vcvt.s32.f32 %v1969
        %v3200 = vcvt.s32.f32 %v1970
        %v3201 = vcvt.s32.f32 %v1971
        %v3202 = vcvt.s32.f32 %v1972
        %v3203 = vcvt.s32.f32 %v1973
        %v3204 = vcvt.s32.f32 %v1974
        %v3205 = vcvt.s32.f32 %v1975
        %v3206 = vcvt.s32.f32 %v1976
        %v3207 = vcvt.s32.f32 %v1977
        %v3208 = vcvt.s32.f32 %v1978
        %v3209 = vcvt.s32.f32 %v1979
        %v3210 = vcvt.s32.f32 %v1980
        %v3211 = vcvt.s32.f32 %v1981
        %v3212 = vcvt.s32.f32 %v1982
        %v3213 = vcvt.s32.f32 %v1983
        %v3214 = vcvt.s32.f32 %v1984
        %v3215 = vcvt.s32.f32 %v1985
        %v3216 = vcvt.s32.f32 %v1986
        %v3217 = vcvt.s32.f32 %v1987
        %v3218 = vcvt.s32.f32 %v1988
        %v3219 = vcvt.s32.f32 %v1989
        %v3220 = vcvt.s32.f32 %v1990
        %v3221 = vcvt.s32.f32 %v1991
        %v3222 = vcvt.s32.f32 %v1992
        %v3223 = vcvt.s32.f32 %v1993
        %v3224 = vcvt.s32.f32 %v1994
        %v3225 = vcvt.s32.f32 %v1995
        %v3226 = vcvt.s32.f32 %v1996
        %v3227 = vcvt.s32.f32 %v1997
        %v3228 = vcvt.s32.f32 %v1998
        %v3229 = vcvt.s32.f32 %v1999
        %v3230 = vcvt.s32.f32 %v2000
        %v3231 = vcvt.s32.f32 %v2001
        %v3232 = vcvt.s32.f32 %v2002
        %v3233 = vcvt.s32.f32 %v2003
        %v3234 = vcvt.s32.f32 %v2004
        %v3235 = vcvt.s32.f32 %v2005
        %v3236 = vcvt.s32.f32 %v2006
        %v3237 = vcvt.s32.f32 %v2007
        %v3238 = vcvt.s32.f32 %v2008
        %v3239 = vcvt.s32.f32 %v2009
        %v3240 = vcvt.s32.f32 %v2010
        %v3241 = vcvt.s32.f32 %v2011
        %v3242 = vcvt.s32.f32 %v2012
        %v3243 = vcvt.s32.f32 %v2013
        %v3244 = vcvt.s32.f32 %v2014
        %v3245 = vcvt.s32.f32 %v2015
        %v3246 = vcvt.s32.f32 %v2016
        %v3247 = vcvt.s32.f32 %v2017
        %v3248 = vcvt.s32.f32 %v2018
        %v3249 = vcvt.s32.f32 %v2019
        %v3250 = vcvt.s32.f32 %v2020
        %v3251 = vcvt.s32.f32 %v2021
        %v3252 = vcvt.s32.f32 %v2022
        %v3253 = vcvt.s32.f32 %v2023
        %v3254 = vcvt.s32.f32 %v2024
        %v3255 = vcvt.s32.f32 %v2025
        %v3256 = vcvt.s32.f32 %v2026
        %v3257 = vcvt.s32.f32 %v2027
        %v3258 = vcvt.s32.f32 %v2028
        %v3259 = vcvt.s32.f32 %v2029
        %v3260 = vcvt.s32.f32 %v2030
        %v3261 = vcvt.s32.f32 %v2031
        %v3262 = vcvt.s32.f32 %v2032
        %v3263 = vcvt.s32.f32 %v2033
        %v3264 = vcvt.s32.f32 %v2034
        %v3265 = vcvt.s32.f32 %v2035
        %v3266 = vcvt.s32.f32 %v2036
        %v3267 = vcvt.s32.f32 %v2037
        %v3268 = vcvt.s32.f32 %v2038
        %v3269 = vcvt.s32.f32 %v2039
        %v3270 = vcvt.s32.f32 %v2040
        %v3271 = vcvt.s32.f32 %v2041
        %v3272 = vcvt.s32.f32 %v2042
        %v3273 = vcvt.s32.f32 %v2043
        %v3274 = vcvt.s32.f32 %v2044
        %v3275 = vcvt.s32.f32 %v2045
        %v3276 = vcvt.s32.f32 %v2046
        %v3277 = vcvt.s32.f32 %v2047
        %v3278 = vcvt.s32.f32 %v2048
        %v3279 = vcvt.s32.f32 %v2049
        %v3280 = vcvt.s32.f32 %v2050
        %v3281 = vcvt.s32.f32 %v2051
        %v3282 = vcvt.s32.f32 %v2052
        %v3283 = vcvt.s32.f32 %v2053
        %v3284 = vcvt.s32.f32 %v2054
        %v3285 = vcvt.s32.f32 %v2055
        %v3286 = vcvt.s32.f32 %v2056
        %v3287 = vcvt.s32.f32 %v2057
        %v3288 = vcvt.s32.f32 %v2058
        %v3289 = vcvt.s32.f32 %v2059
        %v3290 = vcvt.s32.f32 %v2060
        %v3291 = vcvt.s32.f32 %v2061
        %v3292 = vcvt.s32.f32 %v2062
        %v3293 = vcvt.s32.f32 %v2063
        %v3294 = vcvt.s32.f32 %v2064
        %v3295 = vcvt.s32.f32 %v2065
        %v3296 = vcvt.s32.f32 %v2066
        %v3297 = vcvt.s32.f32 %v2067
        %v3298 = vcvt.s32.f32 %v2068
        %v3299 = vcvt.s32.f32 %v2069
        %v3300 = vcvt.s32.f32 %v2070
        %v3301 = vcvt.s32.f32 %v2071
        %v3302 = vcvt.s32.f32 %v2072
        %v3303 = vcvt.s32.f32 %v2073
        %v3304 = vcvt.s32.f32 %v2074
        %v3305 = vcvt.s32.f32 %v2075
        %v3306 = vcvt.s32.f32 %v2076
        %v3307 = vcvt.s32.f32 %v2077
        %v3308 = vcvt.s32.f32 %v2078
        %v3309 = vcvt.s32.f32 %v2079
        %v3310 = vcvt.s32.f32 %v2080
        %v3311 = vcvt.s32.f32 %v2081
        %v3312 = vcvt.s32.f32 %v2082
        %v3313 = vcvt.s32.f32 %v2083
        %v3314 = vcvt.s32.f32 %v2084
        %v3315 = vcvt.s32.f32 %v2085
        %v3316 = vcvt.s32.f32 %v2086
        %v3317 = vcvt.s32.f32 %v2087
        %v3318 = vcvt.s32.f32 %v2088
        %v3319 = vcvt.s32.f32 %v2089
        %v3320 = vcvt.s32.f32 %v2090
        %v3321 = vcvt.s32.f32 %v2091
        %v3322 = vcvt.s32.f32 %v2092
        %v3323 = vcvt.s32.f32 %v2093
        %v3324 = vcvt.s32.f32 %v2094
        %v3325 = vcvt.s32.f32 %v2095
        %v3326 = vcvt.s32.f32 %v2096
        %v3327 = vcvt.s32.f32 %v2097
        %v3328 = vcvt.s32.f32 %v2098
        %v3329 = vcvt.s32.f32 %v2099
        %v3330 = vcvt.s32.f32 %v2100
        %v3331 = vcvt.s32.f32 %v2101
        %v3332 = vcvt.s32.f32 %v2102
        %v3333 = vcvt.s32.f32 %v2103
        %v3334 = vcvt.s32.f32 %v2104
        %v3335 = vcvt.s32.f32 %v2105
        %v3336 = vcvt.s32.f32 %v2106
        %v3337 = vcvt.s32.f32 %v2107
        %v3338 = vcvt.s32.f32 %v2108
        %v3339 = vcvt.s32.f32 %v2109
        %v3340 = vcvt.s32.f32 %v2110
        %v3341 = vcvt.s32.f32 %v2111
        %v3342 = vcvt.s32.f32 %v2112
        %v3343 = vcvt.s32.f32 %v2113
        %v3344 = vcvt.s32.f32 %v2114
        %v3345 = vcvt.s32.f32 %v2115
        %v3346 = vcvt.s32.f32 %v2116
        %v3347 = vcvt.s32.f32 %v2117
        %v3348 = vcvt.s32.f32 %v2118
        %v3349 = vcvt.s32.f32 %v2119
        %v3350 = vcvt.s32.f32 %v2120
        %v3351 = vcvt.s32.f32 %v2121
        %v3352 = vcvt.s32.f32 %v2122
        %v3353 = vcvt.s32.f32 %v2123
        %v3354 = vcvt.s32.f32 %v2124
        %v3355 = vcvt.s32.f32 %v2125
        %v3356 = vcvt.s32.f32 %v2126
        %v3357 = vcvt.s32.f32 %v2127
        %v3358 = vcvt.s32.f32 %v2128
        %v3359 = vcvt.s32.f32 %v2129
        %v3360 = vcvt.s32.f32 %v2130
        %v3361 = vcvt.s32.f32 %v2131
        %v3362 = vcvt.s32.f32 %v2132
        %v3363 = vcvt.s32.f32 %v2133
        %v3364 = vcvt.s32.f32 %v2134
        %v3365 = vcvt.s32.f32 %v2135
        %v3366 = vcvt.s32.f32 %v2136
        %v3367 = vcvt.s32.f32 %v2137
        %v3368 = vcvt.s32.f32 %v2138
        %v3369 = vcvt.s32.f32 %v2139
        %v3370 = vcvt.s32.f32 %v2140
        %v3371 = vcvt.s32.f32 %v2141
        %v3372 = vcvt.s32.f32 %v2142
        %v3373 = vcvt.s32.f32 %v2143
        %v3374 = vcvt.s32.f32 %v2144
        %v3375 = vcvt.s32.f32 %v2145
        %v3376 = vcvt.s32.f32 %v2146
        %v3377 = vcvt.s32.f32 %v2147
        %v3378 = vcvt.s32.f32 %v2148
        %v3379 = vcvt.s32.f32 %v2149
        %v3380 = vcvt.s32.f32 %v2150
        %v3381 = vcvt.s32.f32 %v2151
        %v3382 = vcvt.s32.f32 %v2152
        %v3383 = vcvt.s32.f32 %v2153
        %v3384 = vcvt.s32.f32 %v2154
        %v3385 = vcvt.s32.f32 %v2155
        %v3386 = vcvt.s32.f32 %v2156
        %v3387 = vcvt.s32.f32 %v2157
        %v3388 = vcvt.s32.f32 %v2158
        %v3389 = vcvt.s32.f32 %v2159
        %v3390 = vcvt.s32.f32 %v2160
        %v3391 = vcvt.s32.f32 %v2161
        %v3392 = vcvt.s32.f32 %v2162
        %v3393 = vcvt.s32.f32 %v2163
        %v3394 = vcvt.s32.f32 %v2164
        %v3395 = vcvt.s32.f32 %v2165
        %v3396 = vcvt.s32.f32 %v2166
        %v3397 = vcvt.s32.f32 %v2167
        %v3398 = vcvt.s32.f32 %v2168
        %v3399 = vcvt.s32.f32 %v2169
        %v3400 = vcvt.s32.f32 %v2170
        %v3401 = vcvt.s32.f32 %v2171
        %v3402 = vcvt.s32.f32 %v2172
        %v3403 = vcvt.s32.f32 %v2173
        %v3404 = vcvt.s32.f32 %v2174
        %v3405 = vcvt.s32.f32 %v2175
        %v3406 = vcvt.s32.f32 %v2176
        %v3407 = vcvt.s32.f32 %v2177
        %v3408 = vcvt.s32.f32 %v2178
        %v3409 = vcvt.s32.f32 %v2179
        %v3410 = vcvt.s32.f32 %v2180
        %v3411 = vcvt.s32.f32 %v2181
        %v3412 = vcvt.s32.f32 %v2182
        %v3413 = vcvt.s32.f32 %v2183
        %v3414 = vcvt.s32.f32 %v2184
        %v3415 = vcvt.s32.f32 %v2185
        %v3416 = vcvt.s32.f32 %v2186
        %v3417 = vcvt.s32.f32 %v2187
        %v3418 = vcvt.s32.f32 %v2188
        %v3419 = vcvt.s32.f32 %v2189
        %v3420 = vcvt.s32.f32 %v2190
        %v3421 = vcvt.s32.f32 %v2191
        %v3422 = vcvt.s32.f32 %v2192
        %v3423 = vcvt.s32.f32 %v2193
        %v3424 = vcvt.s32.f32 %v2194
        %v3425 = vcvt.s32.f32 %v2195
        %v3426 = vcvt.s32.f32 %v2196
        %v3427 = vcvt.s32.f32 %v2197
        %v3428 = vcvt.s32.f32 %v2198
        %v3429 = vcvt.s32.f32 %v2199
        %v3430 = vcvt.s32.f32 %v2200
        %v3431 = vcvt.s32.f32 %v2201
        %v3432 = vcvt.s32.f32 %v2202
        %v3433 = vcvt.s32.f32 %v2203
        %v3434 = vcvt.s32.f32 %v2204
        %v3435 = vcvt.s32.f32 %v2205
        %v3436 = vcvt.s32.f32 %v2206
        %v3437 = vcvt.s32.f32 %v2207
        %v3438 = vcvt.s32.f32 %v2208
        %v3439 = vcvt.s32.f32 %v2209
        %v3440 = vcvt.s32.f32 %v2210
        %v3441 = vcvt.s32.f32 %v2211
        %v3442 = vcvt.s32.f32 %v2212
        %v3443 = vcvt.s32.f32 %v2213
        %v3444 = vcvt.s32.f32 %v2214
        %v3445 = vcvt.s32.f32 %v2215
        %v3446 = vcvt.s32.f32 %v2216
        %v3447 = vcvt.s32.f32 %v2217
        %v3448 = vcvt.s32.f32 %v2218
        %v3449 = vcvt.s32.f32 %v2219
        %v3450 = vcvt.s32.f32 %v2220
        %v3451 = vcvt.s32.f32 %v2221
        %v3452 = vcvt.s32.f32 %v2222
        %v3453 = vcvt.s32.f32 %v2223
        %v3454 = vcvt.s32.f32 %v2224
        %v3455 = vcvt.s32.f32 %v2225
        %v3456 = vcvt.s32.f32 %v2226
        %v3457 = vcvt.s32.f32 %v2227
        %v3458 = vcvt.s32.f32 %v2228
        %v3459 = vcvt.s32.f32 %v2229
        %v3460 = vcvt.s32.f32 %v2230
        %v3461 = vcvt.s32.f32 %v2231
        %v3462 = vcvt.s32.f32 %v2232
        %v3463 = vcvt.s32.f32 %v2233
        %v3464 = vcvt.s32.f32 %v2234
        %v3465 = vcvt.s32.f32 %v2235
        %v3466 = vcvt.s32.f32 %v2236
        %v3467 = vcvt.s32.f32 %v2237
        %v3468 = vcvt.s32.f32 %v2238
        %v3469 = vcvt.s32.f32 %v2239
        %v3470 = vcvt.s32.f32 %v2240
        %v3471 = vcvt.s32.f32 %v2241
        %v3472 = vcvt.s32.f32 %v2242
        %v3473 = vcvt.s32.f32 %v2243
        %v3474 = vcvt.s32.f32 %v2244
        %v3475 = vcvt.s32.f32 %v2245
        %v3476 = vcvt.s32.f32 %v2246
        %v3477 = vcvt.s32.f32 %v2247
        %v3478 = vcvt.s32.f32 %v2248
        %v3479 = vcvt.s32.f32 %v2249
        %v3480 = vcvt.s32.f32 %v2250
        %v3481 = vcvt.s32.f32 %v2251
        %v3482 = vcvt.s32.f32 %v2252
        %v3483 = vcvt.s32.f32 %v2253
        %v3484 = vcvt.s32.f32 %v2254
        %v3485 = vcvt.s32.f32 %v2255
        %v3486 = vcvt.s32.f32 %v2256
        %v3487 = vcvt.s32.f32 %v2257
        %v3488 = vcvt.s32.f32 %v2258
        %v3489 = vcvt.s32.f32 %v2259
        %v3490 = vcvt.s32.f32 %v2260
        %v3491 = vcvt.s32.f32 %v2261
        %v3492 = vcvt.s32.f32 %v2262
        %v3493 = vcvt.s32.f32 %v2263
        %v3494 = vcvt.s32.f32 %v2264
        %v3495 = vcvt.s32.f32 %v2265
        %v3496 = vcvt.s32.f32 %v2266
        %v3497 = vcvt.s32.f32 %v2267
        %v3498 = vcvt.s32.f32 %v2268
        %v3499 = vcvt.s32.f32 %v2269
        %v3500 = vcvt.s32.f32 %v2270
        %v3501 = vcvt.s32.f32 %v2271
        %v3502 = vcvt.s32.f32 %v2272
        %v3503 = vcvt.s32.f32 %v2273
        %v3504 = vcvt.s32.f32 %v2274
        %v3505 = vcvt.s32.f32 %v2275
        %v3506 = vcvt.s32.f32 %v2276
        %v3507 = vcvt.s32.f32 %v2277
        %v3508 = vcvt.s32.f32 %v2278
        %v3509 = vcvt.s32.f32 %v2279
        %v3510 = vcvt.s32.f32 %v2280
        %v3511 = vcvt.s32.f32 %v2281
        %v3512 = vcvt.s32.f32 %v2282
        %v3513 = vcvt.s32.f32 %v2283
        %v3514 = vcvt.s32.f32 %v2284
        %v3515 = vcvt.s32.f32 %v2285
        %v3516 = vcvt.s32.f32 %v2286
        %v3517 = vcvt.s32.f32 %v2287
        %v3518 = vcvt.s32.f32 %v2288
        %v3519 = vcvt.s32.f32 %v2289
        %v3520 = vcvt.s32.f32 %v2290
        %v3521 = vcvt.s32.f32 %v2291
        %v3522 = vcvt.s32.f32 %v2292
        %v3523 = vcvt.s32.f32 %v2293
        %v3524 = vcvt.s32.f32 %v2294
        %v3525 = vcvt.s32.f32 %v2295
        %v3526 = vcvt.s32.f32 %v2296
        %v3527 = vcvt.s32.f32 %v2297
        %v3528 = vcvt.s32.f32 %v2298
        %v3529 = vcvt.s32.f32 %v2299
        %v3530 = vcvt.s32.f32 %v2300
        %v3531 = vcvt.s32.f32 %v2301
        %v3532 = vcvt.s32.f32 %v2302
        %v3533 = vcvt.s32.f32 %v2303
        %v3534 = vcvt.s32.f32 %v2304
        %v3535 = vcvt.s32.f32 %v2305
        %v3536 = vcvt.s32.f32 %v2306
        %v3537 = vcvt.s32.f32 %v2307
        %v3538 = vcvt.s32.f32 %v2308
        %v3539 = vcvt.s32.f32 %v2309
        %v3540 = vcvt.s32.f32 %v2310
        %v3541 = vcvt.s32.f32 %v2311
        %v3542 = vcvt.s32.f32 %v2312
        %v3543 = vcvt.s32.f32 %v2313
        %v3544 = vcvt.s32.f32 %v2314
        %v3545 = vcvt.s32.f32 %v2315
        %v3546 = vcvt.s32.f32 %v2316
        %v3547 = vcvt.s32.f32 %v2317
        %v3548 = vcvt.s32.f32 %v2318
        %v3549 = vcvt.s32.f32 %v2319
        %v3550 = vcvt.s32.f32 %v2320
        %v3551 = vcvt.s32.f32 %v2321
        %v3552 = vcvt.s32.f32 %v2322
        %v3553 = vcvt.s32.f32 %v2323
        %v3554 = vcvt.s32.f32 %v2324
        %v3555 = vcvt.s32.f32 %v2325
        %v3556 = vcvt.s32.f32 %v2326
        %v3557 = vcvt.s32.f32 %v2327
        %v3558 = vcvt.s32.f32 %v2328
        %v3559 = vcvt.s32.f32 %v2329
        %v3560 = vcvt.s32.f32 %v2330
        %v3561 = vcvt.s32.f32 %v2331
        %v3562 = vcvt.s32.f32 %v2332
        %v3563 = vcvt.s32.f32 %v2333
        %v3564 = vcvt.s32.f32 %v2334
        %v3565 = vcvt.s32.f32 %v2335
        %v3566 = vcvt.s32.f32 %v2336
        %v3567 = vcvt.s32.f32 %v2337
        %v3568 = vcvt.s32.f32 %v2338
        %v3569 = vcvt.s32.f32 %v2339
        %v3570 = vcvt.s32.f32 %v2340
        %v3571 = vcvt.s32.f32 %v2341
        %v3572 = vcvt.s32.f32 %v2342
        %v3573 = vcvt.s32.f32 %v2343
        %v3574 = vcvt.s32.f32 %v2344
        %v3575 = vcvt.s32.f32 %v2345
        %v3576 = vcvt.s32.f32 %v2346
        %v3577 = vcvt.s32.f32 %v2347
        %v3578 = vcvt.s32.f32 %v2348
        %v3579 = vcvt.s32.f32 %v2349
        %v3580 = vcvt.s32.f32 %v2350
        %v3581 = vcvt.s32.f32 %v2351
        %v3582 = vcvt.s32.f32 %v2352
        %v3583 = vcvt.s32.f32 %v2353
        %v3584 = vcvt.s32.f32 %v2354
        %v3585 = vcvt.s32.f32 %v2355
        %v3586 = vcvt.s32.f32 %v2356
        %v3587 = vcvt.s32.f32 %v2357
        %v3588 = vcvt.s32.f32 %v2358
        %v3589 = vcvt.s32.f32 %v2359
        %v3590 = vcvt.s32.f32 %v2360
        %v3591 = vcvt.s32.f32 %v2361
        %v3592 = vcvt.s32.f32 %v2362
        %v3593 = vcvt.s32.f32 %v2363
        %v3594 = vcvt.s32.f32 %v2364
        %v3595 = vcvt.s32.f32 %v2365
        %v3596 = vcvt.s32.f32 %v2366
        %v3597 = vcvt.s32.f32 %v2367
        %v3598 = vcvt.s32.f32 %v2368
        %v3599 = vcvt.s32.f32 %v2369
        %v3600 = vcvt.s32.f32 %v2370
        %v3601 = vcvt.s32.f32 %v2371
        %v3602 = vcvt.s32.f32 %v2372
        %v3603 = vcvt.s32.f32 %v2373
        %v3604 = vcvt.s32.f32 %v2374
        %v3605 = vcvt.s32.f32 %v2375
        %v3606 = vcvt.s32.f32 %v2376
        %v3607 = vcvt.s32.f32 %v2377
        %v3608 = vcvt.s32.f32 %v2378
        %v3609 = vcvt.s32.f32 %v2379
        %v3610 = vcvt.s32.f32 %v2380
        %v3611 = vcvt.s32.f32 %v2381
        %v3612 = vcvt.s32.f32 %v2382
        %v3613 = vcvt.s32.f32 %v2383
        %v3614 = vcvt.s32.f32 %v2384
        %v3615 = vcvt.s32.f32 %v2385
        %v3616 = vcvt.s32.f32 %v2386
        %v3617 = vcvt.s32.f32 %v2387
        %v3618 = vcvt.s32.f32 %v2388
        %v3619 = vcvt.s32.f32 %v2389
        %v3620 = vcvt.s32.f32 %v2390
        %v3621 = vcvt.s32.f32 %v2391
        %v3622 = vcvt.s32.f32 %v2392
        %v3623 = vcvt.s32.f32 %v2393
        %v3624 = vcvt.s32.f32 %v2394
        %v3625 = vcvt.s32.f32 %v2395
        %v3626 = vcvt.s32.f32 %v2396
        %v3627 = vcvt.s32.f32 %v2397
        %v3628 = vcvt.s32.f32 %v2398
        %v3629 = vcvt.s32.f32 %v2399
        %v3630 = vcvt.s32.f32 %v2400
        %v3631 = vcvt.s32.f32 %v2401
        %v3632 = vcvt.s32.f32 %v2402
        %v3633 = vcvt.s32.f32 %v2403
        %v3634 = vcvt.s32.f32 %v2404
        %v3635 = vcvt.s32.f32 %v2405
        %v3636 = vcvt.s32.f32 %v2406
        %v3637 = vcvt.s32.f32 %v2407
        %v3638 = vcvt.s32.f32 %v2408
        %v3639 = vcvt.s32.f32 %v2409
        %v3640 = vcvt.s32.f32 %v2410
        %v3641 = vcvt.s32.f32 %v2411
        %v3642 = vcvt.s32.f32 %v2412
        %v3643 = vcvt.s32.f32 %v2413
        %v3644 = vcvt.s32.f32 %v2414
        %v3645 = vcvt.s32.f32 %v2415
        %v3646 = vcvt.s32.f32 %v2416
        %v3647 = vcvt.s32.f32 %v2417
        %v3648 = vcvt.s32.f32 %v2418
        %v3649 = vcvt.s32.f32 %v2419
        %v3650 = vcvt.s32.f32 %v2420
        %v3651 = vcvt.s32.f32 %v2421
        %v3652 = vcvt.s32.f32 %v2422
        %v3653 = vcvt.s32.f32 %v2423
        %v3654 = vcvt.s32.f32 %v2424
        %v3655 = vcvt.s32.f32 %v2425
        %v3656 = vcvt.s32.f32 %v2426
        %v3657 = vcvt.s32.f32 %v2427
        %v3658 = vcvt.s32.f32 %v2428
        %v3659 = vcvt.s32.f32 %v2429
        %v3660 = vcvt.s32.f32 %v2430
        %v3661 = vcvt.s32.f32 %v2431
        %v3662 = vcvt.s32.f32 %v2432
        %v3663 = vcvt.s32.f32 %v2433
        %v3664 = vcvt.s32.f32 %v2434
        %v3665 = vcvt.s32.f32 %v2435
        %v3666 = vcvt.s32.f32 %v2436
        %v3667 = vcvt.s32.f32 %v2437
        %v3668 = vcvt.s32.f32 %v2438
        %v3669 = vcvt.s32.f32 %v2439
        %v3670 = vcvt.s32.f32 %v2440
        %v3671 = vcvt.s32.f32 %v2441
        %v3672 = vcvt.s32.f32 %v2442
        %v3673 = vcvt.s32.f32 %v2443
        %v3674 = vcvt.s32.f32 %v2444
        %v3675 = vcvt.s32.f32 %v2445
        %v3676 = vcvt.s32.f32 %v2446
        %v3677 = vcvt.s32.f32 %v2447
        %v3678 = vcvt.s32.f32 %v2448
        %v3679 = vcvt.s32.f32 %v2449
        %v3680 = vcvt.s32.f32 %v2450
        %v3681 = vcvt.s32.f32 %v2451
        %v3682 = vcvt.s32.f32 %v2452
        %v3683 = vcvt.s32.f32 %v2453
        %v3684 = vcvt.s32.f32 %v2454
        %v3685 = vcvt.s32.f32 %v2455
        %v3686 = vcvt.s32.f32 %v2456
        %v3687 = vcvt.s32.f32 %v2457
        %v3688 = vcvt.s32.f32 %v2458
        %v3689 = vcvt.s32.f32 %v2459
        %v3690 = vcvt.s32.f32 %v2460
        %v3691 = vcvt.s32.f32 %v2461
        %v3692 = vcvt.s32.f32 %v2462
        %v3693 = vcvt.s32.f32 %v2463
        %v3694 = vcvt.s32.f32 %v2464
        %v3695 = vcvt.s32.f32 %v2465
        %v3696 = vcvt.s32.f32 %v2466
        %v3697 = vcvt.s32.f32 %v2467
        %v3698 = vcvt.s32.f32 %v2468
        %v3699 = vcvt.s32.f32 %v2469
        %v3700 = vcvt.s32.f32 %v2470
        %v3701 = vcvt.s32.f32 %v2471
        %v3702 = vcvt.s32.f32 %v2472
        %v3703 = vcvt.s32.f32 %v2473
        %v3704 = vcvt.s32.f32 %v2474
        %v3705 = vcvt.s32.f32 %v2475
        %v3706 = vcvt.s32.f32 %v2476
        %v3707 = vcvt.s32.f32 %v2477
        %v3708 = vcvt.s32.f32 %v2478
        %v3709 = vcvt.s32.f32 %v2479
        %v3710 = vcvt.s32.f32 %v2480
        %v3711 = vcvt.s32.f32 %v2481
        %v3712 = vcvt.s32.f32 %v2482
        %v3713 = vcvt.s32.f32 %v2483
        %v3714 = vcvt.s32.f32 %v2484
        %v3715 = vcvt.s32.f32 %v2485
        %v3716 = vcvt.s32.f32 %v2486
        %v3717 = vcvt.s32.f32 %v2487
        %v3718 = vcvt.s32.f32 %v2488
        %v3719 = vcvt.s32.f32 %v2489
        %v3720 = vcvt.s32.f32 %v2490
        %v3721 = vcvt.s32.f32 %v2491
        %v3722 = vcvt.s32.f32 %v2492
        %v3723 = vcvt.s32.f32 %v2493
        %v3724 = vcvt.s32.f32 %v2494
        %v3725 = vcvt.s32.f32 %v2495
        %v3726 = vcvt.s32.f32 %v2496
        %v3727 = vcvt.s32.f32 %v2497
        %v3728 = vcvt.s32.f32 %v2498
        %v3729 = vcvt.s32.f32 %v2499
        %v3730 = vcvt.s32.f32 %v2500
        %v3731 = vcvt.s32.f32 %v2501
        %v3732 = vcvt.s32.f32 %v2502
        %v3733 = vcvt.s32.f32 %v2503
        %v3734 = vcvt.s32.f32 %v2504
        %v3735 = vcvt.s32.f32 %v2505
        %v3736 = vcvt.s32.f32 %v2506
        %v3737 = vcvt.s32.f32 %v2507
        %v3738 = vcvt.s32.f32 %v2508
        %v3739 = vcvt.s32.f32 %v2509
        %v3740 = vcvt.s32.f32 %v2510
        %v3741 = vcvt.s32.f32 %v2511
        %v3742 = vcvt.s32.f32 %v2512
        %v3743 = vcvt.s32.f32 %v2513
        %v3744 = vcvt.s32.f32 %v2514
        %v3745 = vcvt.s32.f32 %v2515
        %v3746 = vcvt.s32.f32 %v2516
        %v3747 = vcvt.s32.f32 %v2517
        %v3748 = vcvt.s32.f32 %v2518
        %v3749 = vcvt.s32.f32 %v2519
        %v3750 = vcvt.s32.f32 %v2520
        %v3751 = vcvt.s32.f32 %v2521
        %v3752 = vcvt.s32.f32 %v2522
        %v3753 = vcvt.s32.f32 %v2523
        %v3754 = vcvt.s32.f32 %v2524
        %v3755 = vcvt.s32.f32 %v2525
        %v3756 = vcvt.s32.f32 %v2526
        %v3757 = vcvt.s32.f32 %v2527
        %v3758 = vcvt.s32.f32 %v2528
        %v3759 = vcvt.s32.f32 %v2529
        %v3760 = vcvt.s32.f32 %v2530
        %v3761 = vcvt.s32.f32 %v2531
        %v3762 = vcvt.s32.f32 %v2532
        %v3763 = vcvt.s32.f32 %v2533
        %v3764 = vcvt.s32.f32 %v2534
        %v3765 = vcvt.s32.f32 %v2535
        %v3766 = vcvt.s32.f32 %v2536
        %v3767 = vcvt.s32.f32 %v2537
        %v3768 = vcvt.s32.f32 %v2538
        %v3769 = vcvt.s32.f32 %v2539
        %v3770 = vcvt.s32.f32 %v2540
        %v3771 = vcvt.s32.f32 %v2541
        %v3772 = vcvt.s32.f32 %v2542
        %v3773 = vcvt.s32.f32 %v2543
        %v3774 = vcvt.s32.f32 %v2544
        %v3775 = vcvt.s32.f32 %v2545
        %v3776 = vcvt.s32.f32 %v2546
        %v3777 = vcvt.s32.f32 %v2547
        %v3778 = vcvt.s32.f32 %v2548
        %v3779 = vcvt.s32.f32 %v2549
        %v3780 = vcvt.s32.f32 %v2550
        %v3781 = vcvt.s32.f32 %v2551
        %v3782 = vcvt.s32.f32 %v2552
        %v3783 = vcvt.s32.f32 %v2553
        %v3784 = vcvt.s32.f32 %v2554
        %v3785 = vcvt.s32.f32 %v2555
        %v3786 = vcvt.s32.f32 %v2556
        %v3787 = vcvt.s32.f32 %v2557
        %v3788 = vcvt.s32.f32 %v2558
        %v3789 = vcvt.s32.f32 %v2559
        %v3790 = vcvt.s32.f32 %v2560
        %v3791 = vcvt.s32.f32 %v2561
        %v3792 = vcvt.s32.f32 %v2562
        %v3793 = vcvt.s32.f32 %v2563
        %v3794 = vcvt.s32.f32 %v2564
        %v3795 = vcvt.s32.f32 %v2565
        %v3796 = vcvt.s32.f32 %v2566
        %v3797 = vcvt.s32.f32 %v2567
        %v3798 = vcvt.s32.f32 %v2568
        %v3799 = vcvt.s32.f32 %v2569
        %v3800 = vcvt.s32.f32 %v2570
        %v3801 = vcvt.s32.f32 %v2571
        %v3802 = vcvt.s32.f32 %v2572
        %v3803 = vcvt.s32.f32 %v2573
        %v3804 = vcvt.s32.f32 %v2574
        %v3805 = vcvt.s32.f32 %v2575
        %v3806 = vcvt.s32.f32 %v2576
        %v3807 = vcvt.s32.f32 %v2577
        %v3808 = vcvt.s32.f32 %v2578
        %v3809 = vcvt.s32.f32 %v2579
        %v3810 = vcvt.s32.f32 %v2580
        %v3811 = vcvt.s32.f32 %v2581
        %v3812 = vcvt.s32.f32 %v2582
        %v3813 = vcvt.s32.f32 %v2583
        %v3814 = vcvt.s32.f32 %v2584
        %v3815 = vcvt.s32.f32 %v2585
        %v3816 = vcvt.s32.f32 %v2586
        %v3817 = vcvt.s32.f32 %v2587
        %v3818 = vcvt.s32.f32 %v2588
        %v3819 = vcvt.s32.f32 %v2589
        %v3820 = vcvt.s32.f32 %v2590
        %v3821 = vcvt.s32.f32 %v2591
        %v3822 = vcvt.s32.f32 %v2592
        %v3823 = vcvt.s32.f32 %v2593
        %v3824 = vcvt.s32.f32 %v2594
        %v3825 = vcvt.s32.f32 %v2595
        %v3826 = vcvt.s32.f32 %v2596
        %v3827 = vcvt.s32.f32 %v2597
        %v3828 = vcvt.s32.f32 %v2598
        %v3829 = vcvt.s32.f32 %v2599
        %v3830 = vcvt.s32.f32 %v2600
        %v3831 = vcvt.s32.f32 %v2601
        %v3832 = vcvt.s32.f32 %v2602
        %v3833 = vcvt.s32.f32 %v2603
        %v3834 = vcvt.s32.f32 %v2604
        %v3835 = vcvt.s32.f32 %v2605
        %v3836 = vcvt.s32.f32 %v2606
        %v3837 = vcvt.s32.f32 %v2607
        %v3838 = vcvt.s32.f32 %v2608
        %v3839 = vcvt.s32.f32 %v2609
        %v3840 = vcvt.s32.f32 %v2610
        %v3841 = vcvt.s32.f32 %v2611
        %v3842 = vcvt.s32.f32 %v2612
        %v3843 = vcvt.s32.f32 %v2613
        %v3844 = vcvt.s32.f32 %v2614
        %v3845 = vcvt.s32.f32 %v2615
        %v3846 = vcvt.s32.f32 %v2616
        %v3847 = vcvt.s32.f32 %v2617
        %v3848 = vcvt.s32.f32 %v2618
        %v3849 = vcvt.s32.f32 %v2619
        %v3850 = vcvt.s32.f32 %v2620
        %v3851 = vcvt.s32.f32 %v2621
        %v3852 = vcvt.s32.f32 %v2622
        %v3853 = vcvt.s32.f32 %v2623
        %v3854 = vcvt.s32.f32 %v2624
        %v3855 = vcvt.s32.f32 %v2625
        %v3856 = vcvt.s32.f32 %v2626
        %v3857 = vcvt.s32.f32 %v2627
        %v3858 = vcvt.s32.f32 %v2628
        %v3859 = vcvt.s32.f32 %v2629
        %v3860 = vcvt.s32.f32 %v2630
        %v3861 = vcvt.s32.f32 %v2631
        %v3862 = vcvt.s32.f32 %v2632
        %v3863 = vcvt.s32.f32 %v2633
        %v3864 = vcvt.s32.f32 %v2634
        %v3865 = vcvt.s32.f32 %v2635
        %v3866 = vcvt.s32.f32 %v2636
        %v3867 = vcvt.s32.f32 %v2637
        %v3868 = vcvt.s32.f32 %v2638
        %v3869 = vcvt.s32.f32 %v2639
        %v3870 = vcvt.s32.f32 %v2640
        %v3871 = vcvt.s32.f32 %v2641
        %v3872 = vcvt.s32.f32 %v2642
        %v3873 = vcvt.s32.f32 %v2643
        %v3874 = vcvt.s32.f32 %v2644
        %v3875 = vcvt.s32.f32 %v2645
        %v3876 = vcvt.s32.f32 %v2646
        %v3877 = vcvt.s32.f32 %v2647
        %v3878 = vcvt.s32.f32 %v2648
        %v3879 = vcvt.s32.f32 %v2649
        %v3880 = vcvt.s32.f32 %v2650
        %v3881 = vcvt.s32.f32 %v2651
        %v3882 = vcvt.s32.f32 %v2652
        %v3883 = vcvt.s32.f32 %v2653
        %v3884 = vcvt.s32.f32 %v2654
        %v3885 = vcvt.s32.f32 %v2655
        %v3886 = vcvt.s32.f32 %v2656
        %v3887 = vcvt.s32.f32 %v2657
        %v3888 = vcvt.s32.f32 %v2658
        %v3889 = vcvt.s32.f32 %v2659
        %v3890 = vcvt.s32.f32 %v2660
        %v3891 = vcvt.s32.f32 %v2661
        %v3892 = vcvt.s32.f32 %v2662
        %v3893 = vcvt.s32.f32 %v2663
        %v3894 = vcvt.s32.f32 %v2664
        %v3895 = vcvt.s32.f32 %v2665
        %v3896 = vcvt.s32.f32 %v2666
        %v3897 = vcvt.s32.f32 %v2667
        %v3898 = vcvt.s32.f32 %v2668
        %v3899 = vcvt.s32.f32 %v2669
        %v3900 = vcvt.s32.f32 %v2670
        %v3901 = vcvt.s32.f32 %v2671
        %v3902 = vcvt.s32.f32 %v2672
        %v3903 = vcvt.s32.f32 %v2673
        %v3904 = vcvt.s32.f32 %v2674
        %v3905 = vcvt.s32.f32 %v2675
        %v3906 = vcvt.s32.f32 %v2676
        %v3907 = vcvt.s32.f32 %v2677
        %v3908 = vcvt.s32.f32 %v2678
        %v3909 = vcvt.s32.f32 %v2679
        %v3910 = vcvt.s32.f32 %v2680
        %v3911 = vcvt.s32.f32 %v2681
        %v3912 = vcvt.s32.f32 %v2682
        %v3913 = vcvt.s32.f32 %v2683
        %v3914 = vcvt.s32.f32 %v2684
        %v3915 = vcvt.s32.f32 %v2685
        %v3916 = vcvt.s32.f32 %v2686
        %v3917 = vcvt.s32.f32 %v2687
        %v3918 = vcvt.s32.f32 %v2688
        %v3919 = vcvt.s32.f32 %v2689
        %v3920 = vcvt.s32.f32 %v2690
        %v3921 = vcvt.s32.f32 %v2691
        %v3922 = vcvt.s32.f32 %v2692
        %v3923 = vcvt.s32.f32 %v2693
        %v3924 = vcvt.s32.f32 %v2694
        %v3925 = vcvt.s32.f32 %v2695
        %v3926 = vcvt.s32.f32 %v2696
        %v3927 = vcvt.s32.f32 %v2697
        %v3928 = vcvt.s32.f32 %v2698
        %v3929 = vcvt.s32.f32 %v2699
        %v3930 = vcvt.s32.f32 %v2700
        %v3931 = vcvt.s32.f32 %v2701
        %v3932 = vcvt.s32.f32 %v2702
        %v3933 = vcvt.s32.f32 %v2703
        %v3934 = vcvt.s32.f32 %v2704
        %v3935 = vcvt.s32.f32 %v2705
        %v3936 = vcvt.s32.f32 %v2706
        %v3937 = vcvt.s32.f32 %v2707
        %v3938 = vcvt.s32.f32 %v2708
        %v3939 = vcvt.s32.f32 %v2709
        %v3940 = vcvt.s32.f32 %v2710
        %v3941 = vcvt.s32.f32 %v2711
        %v3942 = vcvt.s32.f32 %v2712
        %v3943 = vcvt.s32.f32 %v2713
        %v3944 = vcvt.s32.f32 %v2714
        %v3945 = vcvt.s32.f32 %v2715
        %v3946 = vcvt.s32.f32 %v2716
        %v3947 = vcvt.s32.f32 %v2717
        %v3948 = vcvt.s32.f32 %v2718
        %v3949 = vcvt.s32.f32 %v2719
        %v3950 = vcvt.s32.f32 %v2720
        %v3951 = vcvt.s32.f32 %v2721
        %v3952 = vcvt.s32.f32 %v2722
        %v3953 = vcvt.s32.f32 %v2723
        %v3954 = vcvt.s32.f32 %v2724
        %v3955 = vcvt.s32.f32 %v2725
        %v3956 = vcvt.s32.f32 %v2726
        %v3957 = vcvt.s32.f32 %v2727
        %v3958 = vcvt.s32.f32 %v2728
        %v3959 = vcvt.s32.f32 %v2729
        %v3960 = vcvt.s32.f32 %v2730
        %v3961 = vcvt.s32.f32 %v2731
        %v3962 = vcvt.s32.f32 %v2732
        %v3963 = vcvt.s32.f32 %v2733
        %v3964 = vcvt.s32.f32 %v2734
        %v3965 = vcvt.s32.f32 %v2735
        %v3966 = vcvt.s32.f32 %v2736
        %v3967 = vcvt.s32.f32 %v2737
        %v3968 = vcvt.s32.f32 %v2738
        %v3969 = vcvt.s32.f32 %v2739
        %v3970 = vcvt.s32.f32 %v2740
        %v3971 = vcvt.s32.f32 %v2741
        %v3972 = vcvt.s32.f32 %v2742
        %v3973 = vcvt.s32.f32 %v2743
        %v3974 = vcvt.s32.f32 %v2744
        %v3975 = vcvt.s32.f32 %v2745
        %v3976 = vcvt.s32.f32 %v2746
        %v3977 = vcvt.s32.f32 %v2747
        %v3978 = vcvt.s32.f32 %v2748
        %v3979 = vcvt.s32.f32 %v2749
        %v3980 = vcvt.s32.f32 %v2750
        %v3981 = vcvt.s32.f32 %v2751
        %v3982 = vcvt.s32.f32 %v2752
        %v3983 = vcvt.s32.f32 %v2753
        %v3984 = vcvt.s32.f32 %v2754
        %v3985 = vcvt.s32.f32 %v2755
        %v3986 = vcvt.s32.f32 %v2756
        %v3987 = vcvt.s32.f32 %v2757
        %v3988 = vcvt.s32.f32 %v2758
        %v3989 = vcvt.s32.f32 %v2759
        %v3990 = vcvt.s32.f32 %v2760
        %v3991 = vcvt.s32.f32 %v2761
        %v3992 = vcvt.s32.f32 %v2762
        %v3993 = vcvt.s32.f32 %v2763
        %v3994 = vcvt.s32.f32 %v2764
        %v3995 = vcvt.s32.f32 %v2765
        %v3996 = vcvt.s32.f32 %v2766
        %v3997 = vcvt.s32.f32 %v2767
        %v3998 = vcvt.s32.f32 %v2768
        %v3999 = vcvt.s32.f32 %v2769
        %v4000 = vcvt.s32.f32 %v2770
        %v4001 = vcvt.s32.f32 %v2771
        %v4002 = vcvt.s32.f32 %v2772
        %v4003 = vcvt.s32.f32 %v2773
        %v4004 = vcvt.s32.f32 %v2774
        %v4005 = vcvt.s32.f32 %v2775
        %v4006 = vcvt.s32.f32 %v2776
        %v4007 = vcvt.s32.f32 %v2777
        %v4008 = vcvt.s32.f32 %v2778
        %v4009 = vcvt.s32.f32 %v2779
        %v4010 = vcvt.s32.f32 %v2780
        %v4011 = vcvt.s32.f32 %v2781
        %v4012 = vcvt.s32.f32 %v2782
        %v4013 = vcvt.s32.f32 %v2783
        %v4014 = vcvt.s32.f32 %v2784
        %v4015 = vcvt.s32.f32 %v2785
        %v4016 = vcvt.s32.f32 %v2786
        %v4017 = vcvt.s32.f32 %v2787
        %v4018 = vcvt.s32.f32 %v2788
        %v4019 = vcvt.s32.f32 %v2789
        %v4020 = vcvt.s32.f32 %v2790
        %v4021 = vcvt.s32.f32 %v2791
        %v4022 = vcvt.s32.f32 %v2792
        %v4023 = vcvt.s32.f32 %v2793
        %v4024 = vcvt.s32.f32 %v2794
        %v4025 = vcvt.s32.f32 %v2795
        %v4026 = vcvt.s32.f32 %v2796
        %v4027 = vcvt.s32.f32 %v2797
        %v4028 = vcvt.s32.f32 %v2798
        %v4029 = vcvt.s32.f32 %v2799
        %v4030 = vcvt.s32.f32 %v2800
        %v4031 = vcvt.s32.f32 %v2801
        %v4032 = vcvt.s32.f32 %v2802
        %v4033 = vcvt.s32.f32 %v2803
        %v4034 = vcvt.s32.f32 %v2804
        %v4035 = vcvt.s32.f32 %v2805
        %v4036 = vcvt.s32.f32 %v2806
        %v4037 = vcvt.s32.f32 %v2807
        %v4038 = vcvt.s32.f32 %v2808
        %v4039 = vcvt.s32.f32 %v2809
        %v4040 = vcvt.s32.f32 %v2810
        %v4041 = vcvt.s32.f32 %v2811
        %v4042 = vcvt.s32.f32 %v2812
        %v4043 = vcvt.s32.f32 %v2813
        %v4044 = vcvt.s32.f32 %v2814
        %v4045 = vcvt.s32.f32 %v2815
        %v4046 = vcvt.s32.f32 %v2816
        %v4047 = vcvt.s32.f32 %v2817
        %v4048 = vcvt.s32.f32 %v2818
        %v4049 = vcvt.s32.f32 %v2819
        %v4050 = vcvt.s32.f32 %v2820
        %v4051 = vcvt.s32.f32 %v2821
        %v4052 = vcvt.s32.f32 %v2822
        %v4053 = vcvt.s32.f32 %v2823
        %v4054 = vcvt.s32.f32 %v2824
        %v4055 = vcvt.s32.f32 %v2825
        %v4056 = vcvt.s32.f32 %v2826
        %v4057 = vcvt.s32.f32 %v2827
        %v4058 = vcvt.s32.f32 %v2828
        %v4059 = vcvt.s32.f32 %v2829
        %v4060 = vcvt.s32.f32 %v2830
        %v4061 = vcvt.s32.f32 %v2831
        %v4062 = vcvt.s32.f32 %v2832
        %v4063 = vcvt.s32.f32 %v2833
        %v4064 = vcvt.s32.f32 %v2834
        %v4065 = vcvt.s32.f32 %v2835
        %v4066 = vcvt.s32.f32 %v2836
        %v4067 = vcvt.s32.f32 %v2837
        %v4068 = vcvt.s32.f32 %v2838
        %v4069 = vcvt.s32.f32 %v2839
        %v4070 = vcvt.s32.f32 %v2840
        %v4071 = vcvt.s32.f32 %v2841
        %v4072 = vcvt.s32.f32 %v2842
        %v4073 = vcvt.s32.f32 %v2843
        %v4074 = vcvt.s32.f32 %v2844
        %v4075 = vcvt.s32.f32 %v2845
        %v4076 = vcvt.s32.f32 %v2846
        %v4077 = vcvt.s32.f32 %v2847
        %v4078 = vcvt.s32.f32 %v2848
        %v4079 = vcvt.s32.f32 %v2849
        %v4080 = vcvt.s32.f32 %v2850
        %v4081 = vcvt.s32.f32 %v2851
        %v4082 = vcvt.s32.f32 %v2852
        %v4083 = vcvt.s32.f32 %v2853
        %v4084 = vcvt.s32.f32 %v2854
        %v4085 = vcvt.s32.f32 %v2855
        %v4086 = vcvt.s32.f32 %v2856
        %v4087 = vcvt.s32.f32 %v2857
        %v4088 = vcvt.s32.f32 %v2858
        %v4089 = vcvt.s32.f32 %v2859
        %v4090 = vcvt.s32.f32 %v2860
        %v4091 = vcvt.s32.f32 %v2861
        %v4092 = vcvt.s32.f32 %v2862
        %v4093 = vcvt.s32.f32 %v2863
        %v4094 = vcvt.s32.f32 %v2864
        %v4095 = vcvt.s32.f32 %v2865
        %v4096 = vcvt.s32.f32 %v2866
        %v4097 = vcvt.s32.f32 %v2867
        %v4098 = vcvt.s32.f32 %v2868
        %v4099 = vcvt.s32.f32 %v2869
        %v4100 = vcvt.s32.f32 %v2870
        %v4101 = vcvt.s32.f32 %v2871
        %v4102 = vcvt.s32.f32 %v2872
        %v4103 = vcvt.s32.f32 %v2873
        %v4104 = vcvt.s32.f32 %v2874
        %v4105 = vcvt.s32.f32 %v2875
        %v4106 = vcvt.s32.f32 %v2876
        %v4107 = vcvt.s32.f32 %v2877
        %v4108 = vcvt.s32.f32 %v2878
        %v4109 = vcvt.s32.f32 %v2879
        %v4110 = vcvt.s32.f32 %v2880
        %v4111 = vcvt.s32.f32 %v2881
        %v4112 = vcvt.s32.f32 %v2882
        %v4113 = vcvt.s32.f32 %v2883
        %v4114 = vcvt.s32.f32 %v2884
        %v4115 = vcvt.s32.f32 %v2885
        %v4116 = vcvt.s32.f32 %v2886
        %v4117 = vcvt.s32.f32 %v2887
        %v4118 = vcvt.s32.f32 %v2888
        %v4119 = vcvt.s32.f32 %v2889
        %v4120 = vcvt.s32.f32 %v2890
        %v4121 = vcvt.s32.f32 %v2891
        %v4122 = vcvt.s32.f32 %v2892
        %v4123 = vcvt.s32.f32 %v2893
        %v4124 = vcvt.s32.f32 %v2894
        %v4125 = vcvt.s32.f32 %v2895
        %v4126 = vcvt.s32.f32 %v2896
        %v4127 = vcvt.s32.f32 %v2897
        %v4128 = vcvt.s32.f32 %v2898
        %v4129 = vcvt.s32.f32 %v2899
        %v4130 = vcvt.s32.f32 %v2900
        %v4131 = vcvt.s32.f32 %v2901
        %v4132 = vcvt.s32.f32 %v2902
        %v4133 = vcvt.s32.f32 %v2903
        %v4134 = vcvt.s32.f32 %v2904
        %v4135 = vcvt.s32.f32 %v2905
        %v4136 = vcvt.s32.f32 %v2906
        %v4137 = vcvt.s32.f32 %v2907
        %v4138 = vcvt.s32.f32 %v2908
        %v4139 = vcvt.s32.f32 %v2909
        %v4140 = vcvt.s32.f32 %v2910
        %v4141 = vcvt.s32.f32 %v2911
        %v4142 = vcvt.s32.f32 %v2912
        %v4143 = vcvt.s32.f32 %v2913
        %v4144 = vcvt.s32.f32 %v2914
        %v4145 = vcvt.s32.f32 %v2915
        %v4146 = vcvt.s32.f32 %v2916
        %v4147 = vcvt.s32.f32 %v2917
        %v4148 = vcvt.s32.f32 %v2918
        %v4149 = vcvt.s32.f32 %v2919
        %v4150 = vcvt.s32.f32 %v2920
        %v4151 = vcvt.s32.f32 %v2921
        %v4152 = vcvt.s32.f32 %v2922
        %v4153 = vcvt.s32.f32 %v2923
        %v4154 = vcvt.s32.f32 %v2924
        %v4155 = vcvt.s32.f32 %v2925
        %v4156 = vcvt.s32.f32 %v2926
        %v4157 = vcvt.s32.f32 %v2927
        %v4158 = vcvt.s32.f32 %v2928
        %v4159 = vcvt.s32.f32 %v2929
        %v4160 = vcvt.s32.f32 %v2930
        %v4161 = vcvt.s32.f32 %v2931
        %v4162 = vcvt.s32.f32 %v2932
        %v4163 = vcvt.s32.f32 %v2933
        %v4164 = vcvt.s32.f32 %v2934
        %v4165 = vcvt.s32.f32 %v2935
        %v4166 = vcvt.s32.f32 %v2936
        %v4167 = vcvt.s32.f32 %v2937
        %v4168 = vcvt.s32.f32 %v2938
        %v4169 = vcvt.s32.f32 %v2939
        %v4170 = vcvt.s32.f32 %v2940
        %v4171 = vcvt.s32.f32 %v2941
        %v4172 = vcvt.s32.f32 %v2942
        %v4173 = vcvt.s32.f32 %v2943
        %v4174 = vcvt.s32.f32 %v2944
        %v4175 = vcvt.s32.f32 %v2945
        %v4176 = vcvt.s32.f32 %v2946
        %v4177 = vcvt.s32.f32 %v2947
        %v4178 = vcvt.s32.f32 %v2948
        %v4179 = vcvt.s32.f32 %v2949
        %v4180 = vcvt.s32.f32 %v2950
        %v4181 = vcvt.s32.f32 %v2951
        %v4182 = vcvt.s32.f32 %v2952
        %v4183 = vcvt.s32.f32 %v2953
        %v4184 = vcvt.s32.f32 %v2954
        %v4185 = vcvt.s32.f32 %v2955
        %v4186 = vcvt.s32.f32 %v2956
        %v4187 = vcvt.s32.f32 %v2957
        %v4188 = vcvt.s32.f32 %v2958
        %v4189 = vcvt.s32.f32 %v2959
        %v4190 = vcvt.s32.f32 %v2960
        %v4191 = vcvt.s32.f32 %v2961
        %v4192 = vcvt.s32.f32 %v2962
        %v4193 = vcvt.s32.f32 %v2963
        %v4194 = vcvt.s32.f32 %v2964
        %v4195 = vcvt.s32.f32 %v2965
        %v4196 = vcvt.s32.f32 %v2966
        %v4197 = vcvt.s32.f32 %v2967
        %v4198 = vcvt.s32.f32 %v2968
        %v4199 = vcvt.s32.f32 %v2969
        %v4200 = vcvt.s32.f32 %v2970
        %v4201 = vcvt.s32.f32 %v2971
        %v4202 = vcvt.s32.f32 %v2972
        %v4203 = vcvt.s32.f32 %v2973
        %v4204 = vcvt.s32.f32 %v2974
        %v4205 = vcvt.s32.f32 %v2975
        %v4206 = vcvt.s32.f32 %v2976
        %v4207 = vcvt.s32.f32 %v2977
        %v4208 = vcvt.s32.f32 %v2978
        %v4209 = vcvt.s32.f32 %v2979
        %v4210 = vcvt.s32.f32 %v2980
        %v4211 = vcvt.s32.f32 %v2981
        %v4212 = vcvt.s32.f32 %v2982
        %v4213 = vcvt.s32.f32 %v2983
        %v4214 = vcvt.s32.f32 %v2984
        %v4215 = vcvt.s32.f32 %v2985
        %v4216 = vcvt.s32.f32 %v2986
        %v4217 = vcvt.s32.f32 %v2987
        %v4218 = vcvt.s32.f32 %v2988
        %v4219 = vcvt.s32.f32 %v2989
        %v4220 = vcvt.s32.f32 %v2990
        %v4221 = vcvt.s32.f32 %v2991
        %v4222 = vcvt.s32.f32 %v2992
        %v4223 = vcvt.s32.f32 %v2993
        %v4224 = vcvt.s32.f32 %v2994
        %v4225 = vcvt.s32.f32 %v2995
        %v4226 = vcvt.s32.f32 %v2996
        %v4227 = vcvt.s32.f32 %v2997
        %v4228 = vcvt.s32.f32 %v2998
        %v4229 = vcvt.s32.f32 %v2999
        %v4230 = vcvt.s32.f32 %v3000
        %v4231 = vcvt.s32.f32 %v3001
        %v4232 = vcvt.s32.f32 %v3002
        %v4233 = vcvt.s32.f32 %v3003
        %v4234 = vcvt.s32.f32 %v3004
        %v4235 = vcvt.s32.f32 %v3005
        %v4236 = vcvt.s32.f32 %v3006
        %v4237 = vcvt.s32.f32 %v3007
        %v4238 = vcvt.s32.f32 %v3008
        %v4239 = vcvt.s32.f32 %v3009
        %v4240 = vcvt.s32.f32 %v3010
        %v4241 = vcvt.s32.f32 %v3011
        %v4242 = vcvt.s32.f32 %v3012
        %v4243 = vcvt.s32.f32 %v3013
        %v4244 = vcvt.s32.f32 %v3014
        %v4245 = vcvt.s32.f32 %v3015
        %v4246 = vcvt.s32.f32 %v3016
        %v4247 = vcvt.s32.f32 %v3017
        %v4248 = vcvt.s32.f32 %v3018
        %v4249 = vcvt.s32.f32 %v3019
        %v4250 = vcvt.s32.f32 %v3020
        %v4251 = vcvt.s32.f32 %v3021
        %v4252 = vcvt.s32.f32 %v3022
        %v4253 = vcvt.s32.f32 %v3023
        %v4254 = vcvt.s32.f32 %v3024
        %v4255 = vcvt.s32.f32 %v3025
        %v4256 = vcvt.s32.f32 %v3026
        %v4257 = vcvt.s32.f32 %v3027
        %v4258 = vcvt.s32.f32 %v3028
        %v4259 = vcvt.s32.f32 %v3029
        %v4260 = vcvt.s32.f32 %v3030
        %v4261 = vcvt.s32.f32 %v3031
        %v4262 = vcvt.s32.f32 %v3032
        %v4263 = vcvt.s32.f32 %v3033
        %v4264 = vcvt.s32.f32 %v3034
        %v4265 = vcvt.s32.f32 %v3035
        %v4266 = vcvt.s32.f32 %v3036
        %v4267 = vcvt.s32.f32 %v3037
        %v4268 = vcvt.s32.f32 %v3038
        %vm4269 = vcmask 547840
        %v4271 = vsel %vm4269, %v410, 0
        %vm4273 = vcmask 1042432
        %v4275 = vsel %vm4273, %v4239, 0
        %v4278 = vsel %vm4273, %v4240, 0
        %v4281 = vsel %vm4273, %v4241, 0
        %v4284 = vsel %vm4273, %v4242, 0
        %v4287 = vsel %vm4273, %v4243, 0
        %v4290 = vsel %vm4273, %v4244, 0
        %v4293 = vsel %vm4273, %v4245, 0
        %v4296 = vsel %vm4273, %v4246, 0
        %v4299 = vsel %vm4273, %v4247, 0
        %v4302 = vsel %vm4273, %v4248, 0
        %v4305 = vsel %vm4273, %v4249, 0
        %v4308 = vsel %vm4273, %v4250, 0
        %v4311 = vsel %vm4273, %v4251, 0
        %v4314 = vsel %vm4273, %v4252, 0
        %v4317 = vsel %vm4273, %v4253, 0
        %v4320 = vsel %vm4273, %v4254, 0
        %v4323 = vsel %vm4273, %v4255, 0
        %v4326 = vsel %vm4273, %v4256, 0
        %v4329 = vsel %vm4273, %v4257, 0
        %v4332 = vsel %vm4273, %v4258, 0
        %v4335 = vsel %vm4273, %v4259, 0
        %v4338 = vsel %vm4273, %v4260, 0
        %v4341 = vsel %vm4273, %v4261, 0
        %v4344 = vsel %vm4273, %v4262, 0
        %v4347 = vsel %vm4273, %v4263, 0
        %v4350 = vsel %vm4273, %v4264, 0
        %v4353 = vsel %vm4273, %v4265, 0
        %v4356 = vsel %vm4273, %v4266, 0
        %v4359 = vsel %vm4273, %v4267, 0
        %v4362 = vsel %vm4273, %v4268, 0
        %4364 = vmatprep.subr.mxu0 %v3040
        %4365 = vmatpush1.msra.mxu0 %v3039
        %4366 = vmatprep.subr.mxu0 %v3070
        %4367 = vmatpush1.msra.mxu0 %v3069
        %4368 = vmatprep.subr.mxu0 %v3100
        %4369 = vmatpush1.msra.mxu0 %v3099
        %4370 = vmatprep.subr.mxu0 %v3130
        %4371 = vmatpush1.msra.mxu0 %v3129
        %4372 = vmatprep.subr.mxu0 %v3160
        %4373 = vmatpush1.msra.mxu0 %v3159
        %4374 = vmatprep.subr.mxu0 %v3190
        %4375 = vmatpush1.msra.mxu0 %v3189
        %4376 = vmatprep.subr.mxu0 %v3220
        %4377 = vmatpush1.msra.mxu0 %v3219
        %4378 = vmatprep.subr.mxu0 %v3250
        %4379 = vmatpush1.msra.mxu0 %v3249
        %4380 = vmatprep.subr.mxu0 %v3280
        %4381 = vmatpush1.msra.mxu0 %v3279
        %4382 = vmatprep.subr.mxu0 %v3310
        %4383 = vmatpush1.msra.mxu0 %v3309
        %4384 = vmatprep.subr.mxu0 %v3340
        %4385 = vmatpush1.msra.mxu0 %v3339
        %4386 = vmatprep.subr.mxu0 %v3370
        %4387 = vmatpush1.msra.mxu0 %v3369
        %4388 = vmatprep.subr.mxu0 %v3400
        %4389 = vmatpush1.msra.mxu0 %v3399
        %4390 = vmatprep.subr.mxu0 %v3430
        %4391 = vmatpush1.msra.mxu0 %v3429
        %4392 = vmatprep.subr.mxu0 %v3460
        %4393 = vmatpush1.msra.mxu0 %v3459
        %4394 = vmatprep.subr.mxu0 %v3490
        %4395 = vmatpush1.msra.mxu0 %v3489
        %4396 = vmatprep.subr.mxu0 %v3520
        %4397 = vmatpush1.msra.mxu0 %v3519
        %4398 = vmatprep.subr.mxu0 %v3550
        %4399 = vmatpush1.msra.mxu0 %v3549
        %4400 = vmatprep.subr.mxu0 %v3580
        %4401 = vmatpush1.msra.mxu0 %v3579
        %4402 = vmatprep.subr.mxu0 %v3610
        %4403 = vmatpush1.msra.mxu0 %v3609
        %4404 = vmatprep.subr.mxu0 %v3640
        %4405 = vmatpush1.msra.mxu0 %v3639
        %4406 = vmatprep.subr.mxu0 %v3670
        %4407 = vmatpush1.msra.mxu0 %v3669
        %4408 = vmatprep.subr.mxu0 %v3700
        %4409 = vmatpush1.msra.mxu0 %v3699
        %4410 = vmatprep.subr.mxu0 %v3730
        %4411 = vmatpush1.msra.mxu0 %v3729
        %4412 = vmatprep.subr.mxu0 %v3760
        %4413 = vmatpush1.msra.mxu0 %v3759
        %4414 = vmatprep.subr.mxu0 %v3790
        %4415 = vmatpush1.msra.mxu0 %v3789
        %4416 = vmatprep.subr.mxu0 %v3820
        %4417 = vmatpush1.msra.mxu0 %v3819
        %4418 = vmatprep.subr.mxu0 %v3850
        %4419 = vmatpush1.msra.mxu0 %v3849
        %4420 = vmatprep.subr.mxu0 %v3880
        %4421 = vmatpush1.msra.mxu0 %v3879
        %4422 = vmatprep.subr.mxu0 %v3910
        %4423 = vmatpush1.msra.mxu0 %v3909
        %4424 = vmatprep.subr.mxu0 %v3940
        %4425 = vmatpush1.msra.mxu0 %v3939
        %4426 = vmatprep.subr.mxu0 %v3970
        %4427 = vmatpush1.msra.mxu0 %v3969
        %4428 = vmatprep.mubr.f32.mxu0 %v341
        %4429 = vmatmul.mubr.f32.gmra.mrb[0].mxu0 %v339
        %v4430 = vpop.f32.mrb[0].mxu0
        %v4431 = vadd.f32 0.0, %v4430
        %v4432 = vpop.f32.mrb[0].mxu0
        %v4433 = vadd.f32 0.0, %v4432
        %4434 = vdwg.mxu0
        %4435 = vmatprep.subr.mxu0 %v4000
        %4436 = vmatpush1.msra.mxu0 %v3999
        %4437 = vmatprep.subr.mxu0 %v4030
        %4438 = vmatpush1.msra.mxu0 %v4029
        %4439 = vmatprep.subr.mxu0 %v4060
        %4440 = vmatpush1.msra.mxu0 %v4059
        %4441 = vmatprep.subr.mxu0 %v4090
        %4442 = vmatpush1.msra.mxu0 %v4089
        %4443 = vmatprep.subr.mxu0 %v4120
        %4444 = vmatpush1.msra.mxu0 %v4119
        %4445 = vmatprep.subr.mxu0 %v4150
        %4446 = vmatpush1.msra.mxu0 %v4149
        %4447 = vmatprep.subr.mxu0 %v4180
        %4448 = vmatpush1.msra.mxu0 %v4179
        %4449 = vmatprep.subr.mxu0 %v4210
        %4450 = vmatpush1.msra.mxu0 %v4209
        %4451 = vmatprep.subr.mxu0 %v4278
        %4452 = vmatpush1.msra.mxu0 %v4275
        %4453 = vmatprep.subr.mxu0 0.0
        %4454 = vmatpush1.msra.mxu0 0.0
        %4455 = vmatprep.subr.mxu0 0.0
        %4456 = vmatpush1.msra.mxu0 0.0
        %4457 = vmatprep.subr.mxu0 0.0
        %4458 = vmatpush1.msra.mxu0 0.0
        %4459 = vmatprep.subr.mxu0 0.0
        %4460 = vmatpush1.msra.mxu0 0.0
        %4461 = vmatprep.subr.mxu0 0.0
        %4462 = vmatpush1.msra.mxu0 0.0
        %4463 = vmatprep.subr.mxu0 0.0
        %4464 = vmatpush1.msra.mxu0 0.0
        %4465 = vmatprep.subr.mxu0 0.0
        %4466 = vmatpush1.msra.mxu0 0.0
        %4467 = vmatprep.subr.mxu0 0.0
        %4468 = vmatpush1.msra.mxu0 0.0
        %4469 = vmatprep.subr.mxu0 0.0
        %4470 = vmatpush1.msra.mxu0 0.0
        %4471 = vmatprep.subr.mxu0 0.0
        %4472 = vmatpush1.msra.mxu0 0.0
        %4473 = vmatprep.subr.mxu0 0.0
        %4474 = vmatpush1.msra.mxu0 0.0
        %4475 = vmatprep.subr.mxu0 0.0
        %4476 = vmatpush1.msra.mxu0 0.0
        %4477 = vmatprep.subr.mxu0 0.0
        %4478 = vmatpush1.msra.mxu0 0.0
        %4479 = vmatprep.subr.mxu0 0.0
        %4480 = vmatpush1.msra.mxu0 0.0
        %4481 = vmatprep.subr.mxu0 0.0
        %4482 = vmatpush1.msra.mxu0 0.0
        %4483 = vmatprep.subr.mxu0 0.0
        %4484 = vmatpush1.msra.mxu0 0.0
        %4485 = vmatprep.subr.mxu0 0.0
        %4486 = vmatpush1.msra.mxu0 0.0
        %4487 = vmatprep.subr.mxu0 0.0
        %4488 = vmatpush1.msra.mxu0 0.0
        %4489 = vmatprep.subr.mxu0 0.0
        %4490 = vmatpush1.msra.mxu0 0.0
        %4491 = vmatprep.subr.mxu0 0.0
        %4492 = vmatpush1.msra.mxu0 0.0
        %4493 = vmatprep.subr.mxu0 0.0
        %4494 = vmatpush1.msra.mxu0 0.0
        %4495 = vmatprep.subr.mxu0 0.0
        %4496 = vmatpush1.msra.mxu0 0.0
        %4497 = vmatprep.subr.mxu0 0.0
        %4498 = vmatpush1.msra.mxu0 0.0
        %4499 = vmatprep.mubr.f32.mxu0 0.0
        %4500 = vmatmul.mubr.f32.gmra.mrb[0].mxu0 %v4271
        %v4501 = vpop.f32.mrb[0].mxu0
        %v4502 = vadd.f32 %v4431, %v4501
        %v4503 = vpop.f32.mrb[0].mxu0
        %v4504 = vadd.f32 %v4433, %v4503
        %4505 = vdwg.mxu0
        %4506 = vmatprep.subr.mxu0 %v3042
        %4507 = vmatpush1.msra.mxu0 %v3041
        %4508 = vmatprep.subr.mxu0 %v3072
        %4509 = vmatpush1.msra.mxu0 %v3071
        %4510 = vmatprep.subr.mxu0 %v3102
        %4511 = vmatpush1.msra.mxu0 %v3101
        %4512 = vmatprep.subr.mxu0 %v3132
        %4513 = vmatpush1.msra.mxu0 %v3131
        %4514 = vmatprep.subr.mxu0 %v3162
        %4515 = vmatpush1.msra.mxu0 %v3161
        %4516 = vmatprep.subr.mxu0 %v3192
        %4517 = vmatpush1.msra.mxu0 %v3191
        %4518 = vmatprep.subr.mxu0 %v3222
        %4519 = vmatpush1.msra.mxu0 %v3221
        %4520 = vmatprep.subr.mxu0 %v3252
        %4521 = vmatpush1.msra.mxu0 %v3251
        %4522 = vmatprep.subr.mxu0 %v3282
        %4523 = vmatpush1.msra.mxu0 %v3281
        %4524 = vmatprep.subr.mxu0 %v3312
        %4525 = vmatpush1.msra.mxu0 %v3311
        %4526 = vmatprep.subr.mxu0 %v3342
        %4527 = vmatpush1.msra.mxu0 %v3341
        %4528 = vmatprep.subr.mxu0 %v3372
        %4529 = vmatpush1.msra.mxu0 %v3371
        %4530 = vmatprep.subr.mxu0 %v3402
        %4531 = vmatpush1.msra.mxu0 %v3401
        %4532 = vmatprep.subr.mxu0 %v3432
        %4533 = vmatpush1.msra.mxu0 %v3431
        %4534 = vmatprep.subr.mxu0 %v3462
        %4535 = vmatpush1.msra.mxu0 %v3461
        %4536 = vmatprep.subr.mxu0 %v3492
        %4537 = vmatpush1.msra.mxu0 %v3491
        %4538 = vmatprep.subr.mxu0 %v3522
        %4539 = vmatpush1.msra.mxu0 %v3521
        %4540 = vmatprep.subr.mxu0 %v3552
        %4541 = vmatpush1.msra.mxu0 %v3551
        %4542 = vmatprep.subr.mxu0 %v3582
        %4543 = vmatpush1.msra.mxu0 %v3581
        %4544 = vmatprep.subr.mxu0 %v3612
        %4545 = vmatpush1.msra.mxu0 %v3611
        %4546 = vmatprep.subr.mxu0 %v3642
        %4547 = vmatpush1.msra.mxu0 %v3641
        %4548 = vmatprep.subr.mxu0 %v3672
        %4549 = vmatpush1.msra.mxu0 %v3671
        %4550 = vmatprep.subr.mxu0 %v3702
        %4551 = vmatpush1.msra.mxu0 %v3701
        %4552 = vmatprep.subr.mxu0 %v3732
        %4553 = vmatpush1.msra.mxu0 %v3731
        %4554 = vmatprep.subr.mxu0 %v3762
        %4555 = vmatpush1.msra.mxu0 %v3761
        %4556 = vmatprep.subr.mxu0 %v3792
        %4557 = vmatpush1.msra.mxu0 %v3791
        %4558 = vmatprep.subr.mxu0 %v3822
        %4559 = vmatpush1.msra.mxu0 %v3821
        %4560 = vmatprep.subr.mxu0 %v3852
        %4561 = vmatpush1.msra.mxu0 %v3851
        %4562 = vmatprep.subr.mxu0 %v3882
        %4563 = vmatpush1.msra.mxu0 %v3881
        %4564 = vmatprep.subr.mxu0 %v3912
        %4565 = vmatpush1.msra.mxu0 %v3911
        %4566 = vmatprep.subr.mxu0 %v3942
        %4567 = vmatpush1.msra.mxu0 %v3941
        %4568 = vmatprep.subr.mxu0 %v3972
        %4569 = vmatpush1.msra.mxu0 %v3971
        %4570 = vmatprep.mubr.f32.mxu0 %v341
        %4571 = vmatmul.mubr.f32.gmra.mrb[0].mxu0 %v339
        %v4572 = vpop.f32.mrb[0].mxu0
        %v4573 = vadd.f32 0.0, %v4572
        %v4574 = vpop.f32.mrb[0].mxu0
        %v4575 = vadd.f32 0.0, %v4574
        %4576 = vdwg.mxu0
        %4577 = vmatprep.subr.mxu0 %v4002
        %4578 = vmatpush1.msra.mxu0 %v4001
        %4579 = vmatprep.subr.mxu0 %v4032
        %4580 = vmatpush1.msra.mxu0 %v4031
        %4581 = vmatprep.subr.mxu0 %v4062
        %4582 = vmatpush1.msra.mxu0 %v4061
        %4583 = vmatprep.subr.mxu0 %v4092
        %4584 = vmatpush1.msra.mxu0 %v4091
        %4585 = vmatprep.subr.mxu0 %v4122
        %4586 = vmatpush1.msra.mxu0 %v4121
        %4587 = vmatprep.subr.mxu0 %v4152
        %4588 = vmatpush1.msra.mxu0 %v4151
        %4589 = vmatprep.subr.mxu0 %v4182
        %4590 = vmatpush1.msra.mxu0 %v4181
        %4591 = vmatprep.subr.mxu0 %v4212
        %4592 = vmatpush1.msra.mxu0 %v4211
        %4593 = vmatprep.subr.mxu0 %v4284
        %4594 = vmatpush1.msra.mxu0 %v4281
        %4595 = vmatprep.subr.mxu0 0.0
        %4596 = vmatpush1.msra.mxu0 0.0
        %4597 = vmatprep.subr.mxu0 0.0
        %4598 = vmatpush1.msra.mxu0 0.0
        %4599 = vmatprep.subr.mxu0 0.0
        %4600 = vmatpush1.msra.mxu0 0.0
        %4601 = vmatprep.subr.mxu0 0.0
        %4602 = vmatpush1.msra.mxu0 0.0
        %4603 = vmatprep.subr.mxu0 0.0
        %4604 = vmatpush1.msra.mxu0 0.0
        %4605 = vmatprep.subr.mxu0 0.0
        %4606 = vmatpush1.msra.mxu0 0.0
        %4607 = vmatprep.subr.mxu0 0.0
        %4608 = vmatpush1.msra.mxu0 0.0
        %4609 = vmatprep.subr.mxu0 0.0
        %4610 = vmatpush1.msra.mxu0 0.0
        %4611 = vmatprep.subr.mxu0 0.0
        %4612 = vmatpush1.msra.mxu0 0.0
        %4613 = vmatprep.subr.mxu0 0.0
        %4614 = vmatpush1.msra.mxu0 0.0
        %4615 = vmatprep.subr.mxu0 0.0
        %4616 = vmatpush1.msra.mxu0 0.0
        %4617 = vmatprep.subr.mxu0 0.0
        %4618 = vmatpush1.msra.mxu0 0.0
        %4619 = vmatprep.subr.mxu0 0.0
        %4620 = vmatpush1.msra.mxu0 0.0
        %4621 = vmatprep.subr.mxu0 0.0
        %4622 = vmatpush1.msra.mxu0 0.0
        %4623 = vmatprep.subr.mxu0 0.0
        %4624 = vmatpush1.msra.mxu0 0.0
        %4625 = vmatprep.subr.mxu0 0.0
        %4626 = vmatpush1.msra.mxu0 0.0
        %4627 = vmatprep.subr.mxu0 0.0
        %4628 = vmatpush1.msra.mxu0 0.0
        %4629 = vmatprep.subr.mxu0 0.0
        %4630 = vmatpush1.msra.mxu0 0.0
        %4631 = vmatprep.subr.mxu0 0.0
        %4632 = vmatpush1.msra.mxu0 0.0
        %4633 = vmatprep.subr.mxu0 0.0
        %4634 = vmatpush1.msra.mxu0 0.0
        %4635 = vmatprep.subr.mxu0 0.0
        %4636 = vmatpush1.msra.mxu0 0.0
        %4637 = vmatprep.subr.mxu0 0.0
        %4638 = vmatpush1.msra.mxu0 0.0
        %4639 = vmatprep.subr.mxu0 0.0
        %4640 = vmatpush1.msra.mxu0 0.0
        %4641 = vmatprep.mubr.f32.mxu0 0.0
        %4642 = vmatmul.mubr.f32.gmra.mrb[0].mxu0 %v4271
        %v4643 = vpop.f32.mrb[0].mxu0
        %v4644 = vadd.f32 %v4573, %v4643
        %v4645 = vpop.f32.mrb[0].mxu0
        %v4646 = vadd.f32 %v4575, %v4645
        %4647 = vdwg.mxu0
        %4648 = vmatprep.subr.mxu0 %v3044
        %4649 = vmatpush1.msra.mxu0 %v3043
        %4650 = vmatprep.subr.mxu0 %v3074
        %4651 = vmatpush1.msra.mxu0 %v3073
        %4652 = vmatprep.subr.mxu0 %v3104
        %4653 = vmatpush1.msra.mxu0 %v3103
        %4654 = vmatprep.subr.mxu0 %v3134
        %4655 = vmatpush1.msra.mxu0 %v3133
        %4656 = vmatprep.subr.mxu0 %v3164
        %4657 = vmatpush1.msra.mxu0 %v3163
        %4658 = vmatprep.subr.mxu0 %v3194
        %4659 = vmatpush1.msra.mxu0 %v3193
        %4660 = vmatprep.subr.mxu0 %v3224
        %4661 = vmatpush1.msra.mxu0 %v3223
        %4662 = vmatprep.subr.mxu0 %v3254
        %4663 = vmatpush1.msra.mxu0 %v3253
        %4664 = vmatprep.subr.mxu0 %v3284
        %4665 = vmatpush1.msra.mxu0 %v3283
        %4666 = vmatprep.subr.mxu0 %v3314
        %4667 = vmatpush1.msra.mxu0 %v3313
        %4668 = vmatprep.subr.mxu0 %v3344
        %4669 = vmatpush1.msra.mxu0 %v3343
        %4670 = vmatprep.subr.mxu0 %v3374
        %4671 = vmatpush1.msra.mxu0 %v3373
        %4672 = vmatprep.subr.mxu0 %v3404
        %4673 = vmatpush1.msra.mxu0 %v3403
        %4674 = vmatprep.subr.mxu0 %v3434
        %4675 = vmatpush1.msra.mxu0 %v3433
        %4676 = vmatprep.subr.mxu0 %v3464
        %4677 = vmatpush1.msra.mxu0 %v3463
        %4678 = vmatprep.subr.mxu0 %v3494
        %4679 = vmatpush1.msra.mxu0 %v3493
        %4680 = vmatprep.subr.mxu0 %v3524
        %4681 = vmatpush1.msra.mxu0 %v3523
        %4682 = vmatprep.subr.mxu0 %v3554
        %4683 = vmatpush1.msra.mxu0 %v3553
        %4684 = vmatprep.subr.mxu0 %v3584
        %4685 = vmatpush1.msra.mxu0 %v3583
        %4686 = vmatprep.subr.mxu0 %v3614
        %4687 = vmatpush1.msra.mxu0 %v3613
        %4688 = vmatprep.subr.mxu0 %v3644
        %4689 = vmatpush1.msra.mxu0 %v3643
        %4690 = vmatprep.subr.mxu0 %v3674
        %4691 = vmatpush1.msra.mxu0 %v3673
        %4692 = vmatprep.subr.mxu0 %v3704
        %4693 = vmatpush1.msra.mxu0 %v3703
        %4694 = vmatprep.subr.mxu0 %v3734
        %4695 = vmatpush1.msra.mxu0 %v3733
        %4696 = vmatprep.subr.mxu0 %v3764
        %4697 = vmatpush1.msra.mxu0 %v3763
        %4698 = vmatprep.subr.mxu0 %v3794
        %4699 = vmatpush1.msra.mxu0 %v3793
        %4700 = vmatprep.subr.mxu0 %v3824
        %4701 = vmatpush1.msra.mxu0 %v3823
        %4702 = vmatprep.subr.mxu0 %v3854
        %4703 = vmatpush1.msra.mxu0 %v3853
        %4704 = vmatprep.subr.mxu0 %v3884
        %4705 = vmatpush1.msra.mxu0 %v3883
        %4706 = vmatprep.subr.mxu0 %v3914
        %4707 = vmatpush1.msra.mxu0 %v3913
        %4708 = vmatprep.subr.mxu0 %v3944
        %4709 = vmatpush1.msra.mxu0 %v3943
        %4710 = vmatprep.subr.mxu0 %v3974
        %4711 = vmatpush1.msra.mxu0 %v3973
        %4712 = vmatprep.mubr.f32.mxu0 %v341
        %4713 = vmatmul.mubr.f32.gmra.mrb[0].mxu0 %v339
        %v4714 = vpop.f32.mrb[0].mxu0
        %v4715 = vadd.f32 0.0, %v4714
        %v4716 = vpop.f32.mrb[0].mxu0
        %v4717 = vadd.f32 0.0, %v4716
        %4718 = vdwg.mxu0
        %4719 = vmatprep.subr.mxu0 %v4004
        %4720 = vmatpush1.msra.mxu0 %v4003
        %4721 = vmatprep.subr.mxu0 %v4034
        %4722 = vmatpush1.msra.mxu0 %v4033
        %4723 = vmatprep.subr.mxu0 %v4064
        %4724 = vmatpush1.msra.mxu0 %v4063
        %4725 = vmatprep.subr.mxu0 %v4094
        %4726 = vmatpush1.msra.mxu0 %v4093
        %4727 = vmatprep.subr.mxu0 %v4124
        %4728 = vmatpush1.msra.mxu0 %v4123
        %4729 = vmatprep.subr.mxu0 %v4154
        %4730 = vmatpush1.msra.mxu0 %v4153
        %4731 = vmatprep.subr.mxu0 %v4184
        %4732 = vmatpush1.msra.mxu0 %v4183
        %4733 = vmatprep.subr.mxu0 %v4214
        %4734 = vmatpush1.msra.mxu0 %v4213
        %4735 = vmatprep.subr.mxu0 %v4290
        %4736 = vmatpush1.msra.mxu0 %v4287
        %4737 = vmatprep.subr.mxu0 0.0
        %4738 = vmatpush1.msra.mxu0 0.0
        %4739 = vmatprep.subr.mxu0 0.0
        %4740 = vmatpush1.msra.mxu0 0.0
        %4741 = vmatprep.subr.mxu0 0.0
        %4742 = vmatpush1.msra.mxu0 0.0
        %4743 = vmatprep.subr.mxu0 0.0
        %4744 = vmatpush1.msra.mxu0 0.0
        %4745 = vmatprep.subr.mxu0 0.0
        %4746 = vmatpush1.msra.mxu0 0.0
        %4747 = vmatprep.subr.mxu0 0.0
        %4748 = vmatpush1.msra.mxu0 0.0
        %4749 = vmatprep.subr.mxu0 0.0
        %4750 = vmatpush1.msra.mxu0 0.0
        %4751 = vmatprep.subr.mxu0 0.0
        %4752 = vmatpush1.msra.mxu0 0.0
        %4753 = vmatprep.subr.mxu0 0.0
        %4754 = vmatpush1.msra.mxu0 0.0
        %4755 = vmatprep.subr.mxu0 0.0
        %4756 = vmatpush1.msra.mxu0 0.0
        %4757 = vmatprep.subr.mxu0 0.0
        %4758 = vmatpush1.msra.mxu0 0.0
        %4759 = vmatprep.subr.mxu0 0.0
        %4760 = vmatpush1.msra.mxu0 0.0
        %4761 = vmatprep.subr.mxu0 0.0
        %4762 = vmatpush1.msra.mxu0 0.0
        %4763 = vmatprep.subr.mxu0 0.0
        %4764 = vmatpush1.msra.mxu0 0.0
        %4765 = vmatprep.subr.mxu0 0.0
        %4766 = vmatpush1.msra.mxu0 0.0
        %4767 = vmatprep.subr.mxu0 0.0
        %4768 = vmatpush1.msra.mxu0 0.0
        %4769 = vmatprep.subr.mxu0 0.0
        %4770 = vmatpush1.msra.mxu0 0.0
        %4771 = vmatprep.subr.mxu0 0.0
        %4772 = vmatpush1.msra.mxu0 0.0
        %4773 = vmatprep.subr.mxu0 0.0
        %4774 = vmatpush1.msra.mxu0 0.0
        %4775 = vmatprep.subr.mxu0 0.0
        %4776 = vmatpush1.msra.mxu0 0.0
        %4777 = vmatprep.subr.mxu0 0.0
        %4778 = vmatpush1.msra.mxu0 0.0
        %4779 = vmatprep.subr.mxu0 0.0
        %4780 = vmatpush1.msra.mxu0 0.0
        %4781 = vmatprep.subr.mxu0 0.0
        %4782 = vmatpush1.msra.mxu0 0.0
        %4783 = vmatprep.mubr.f32.mxu0 0.0
        %4784 = vmatmul.mubr.f32.gmra.mrb[0].mxu0 %v4271
        %v4785 = vpop.f32.mrb[0].mxu0
        %v4786 = vadd.f32 %v4715, %v4785
        %v4787 = vpop.f32.mrb[0].mxu0
        %v4788 = vadd.f32 %v4717, %v4787
        %4789 = vdwg.mxu0
        %4790 = vmatprep.subr.mxu0 %v3046
        %4791 = vmatpush1.msra.mxu0 %v3045
        %4792 = vmatprep.subr.mxu0 %v3076
        %4793 = vmatpush1.msra.mxu0 %v3075
        %4794 = vmatprep.subr.mxu0 %v3106
        %4795 = vmatpush1.msra.mxu0 %v3105
        %4796 = vmatprep.subr.mxu0 %v3136
        %4797 = vmatpush1.msra.mxu0 %v3135
        %4798 = vmatprep.subr.mxu0 %v3166
        %4799 = vmatpush1.msra.mxu0 %v3165
        %4800 = vmatprep.subr.mxu0 %v3196
        %4801 = vmatpush1.msra.mxu0 %v3195
        %4802 = vmatprep.subr.mxu0 %v3226
        %4803 = vmatpush1.msra.mxu0 %v3225
        %4804 = vmatprep.subr.mxu0 %v3256
        %4805 = vmatpush1.msra.mxu0 %v3255
        %4806 = vmatprep.subr.mxu0 %v3286
        %4807 = vmatpush1.msra.mxu0 %v3285
        %4808 = vmatprep.subr.mxu0 %v3316
        %4809 = vmatpush1.msra.mxu0 %v3315
        %4810 = vmatprep.subr.mxu0 %v3346
        %4811 = vmatpush1.msra.mxu0 %v3345
        %4812 = vmatprep.subr.mxu0 %v3376
        %4813 = vmatpush1.msra.mxu0 %v3375
        %4814 = vmatprep.subr.mxu0 %v3406
        %4815 = vmatpush1.msra.mxu0 %v3405
        %4816 = vmatprep.subr.mxu0 %v3436
        %4817 = vmatpush1.msra.mxu0 %v3435
        %4818 = vmatprep.subr.mxu0 %v3466
        %4819 = vmatpush1.msra.mxu0 %v3465
        %4820 = vmatprep.subr.mxu0 %v3496
        %4821 = vmatpush1.msra.mxu0 %v3495
        %4822 = vmatprep.subr.mxu0 %v3526
        %4823 = vmatpush1.msra.mxu0 %v3525
        %4824 = vmatprep.subr.mxu0 %v3556
        %4825 = vmatpush1.msra.mxu0 %v3555
        %4826 = vmatprep.subr.mxu0 %v3586
        %4827 = vmatpush1.msra.mxu0 %v3585
        %4828 = vmatprep.subr.mxu0 %v3616
        %4829 = vmatpush1.msra.mxu0 %v3615
        %4830 = vmatprep.subr.mxu0 %v3646
        %4831 = vmatpush1.msra.mxu0 %v3645
        %4832 = vmatprep.subr.mxu0 %v3676
        %4833 = vmatpush1.msra.mxu0 %v3675
        %4834 = vmatprep.subr.mxu0 %v3706
        %4835 = vmatpush1.msra.mxu0 %v3705
        %4836 = vmatprep.subr.mxu0 %v3736
        %4837 = vmatpush1.msra.mxu0 %v3735
        %4838 = vmatprep.subr.mxu0 %v3766
        %4839 = vmatpush1.msra.mxu0 %v3765
        %4840 = vmatprep.subr.mxu0 %v3796
        %4841 = vmatpush1.msra.mxu0 %v3795
        %4842 = vmatprep.subr.mxu0 %v3826
        %4843 = vmatpush1.msra.mxu0 %v3825
        %4844 = vmatprep.subr.mxu0 %v3856
        %4845 = vmatpush1.msra.mxu0 %v3855
        %4846 = vmatprep.subr.mxu0 %v3886
        %4847 = vmatpush1.msra.mxu0 %v3885
        %4848 = vmatprep.subr.mxu0 %v3916
        %4849 = vmatpush1.msra.mxu0 %v3915
        %4850 = vmatprep.subr.mxu0 %v3946
        %4851 = vmatpush1.msra.mxu0 %v3945
        %4852 = vmatprep.subr.mxu0 %v3976
        %4853 = vmatpush1.msra.mxu0 %v3975
        %4854 = vmatprep.mubr.f32.mxu0 %v341
        %4855 = vmatmul.mubr.f32.gmra.mrb[0].mxu0 %v339
        %v4856 = vpop.f32.mrb[0].mxu0
        %v4857 = vadd.f32 0.0, %v4856
        %v4858 = vpop.f32.mrb[0].mxu0
        %v4859 = vadd.f32 0.0, %v4858
        %4860 = vdwg.mxu0
        %4861 = vmatprep.subr.mxu0 %v4006
        %4862 = vmatpush1.msra.mxu0 %v4005
        %4863 = vmatprep.subr.mxu0 %v4036
        %4864 = vmatpush1.msra.mxu0 %v4035
        %4865 = vmatprep.subr.mxu0 %v4066
        %4866 = vmatpush1.msra.mxu0 %v4065
        %4867 = vmatprep.subr.mxu0 %v4096
        %4868 = vmatpush1.msra.mxu0 %v4095
        %4869 = vmatprep.subr.mxu0 %v4126
        %4870 = vmatpush1.msra.mxu0 %v4125
        %4871 = vmatprep.subr.mxu0 %v4156
        %4872 = vmatpush1.msra.mxu0 %v4155
        %4873 = vmatprep.subr.mxu0 %v4186
        %4874 = vmatpush1.msra.mxu0 %v4185
        %4875 = vmatprep.subr.mxu0 %v4216
        %4876 = vmatpush1.msra.mxu0 %v4215
        %4877 = vmatprep.subr.mxu0 %v4296
        %4878 = vmatpush1.msra.mxu0 %v4293
        %4879 = vmatprep.subr.mxu0 0.0
        %4880 = vmatpush1.msra.mxu0 0.0
        %4881 = vmatprep.subr.mxu0 0.0
        %4882 = vmatpush1.msra.mxu0 0.0
        %4883 = vmatprep.subr.mxu0 0.0
        %4884 = vmatpush1.msra.mxu0 0.0
        %4885 = vmatprep.subr.mxu0 0.0
        %4886 = vmatpush1.msra.mxu0 0.0
        %4887 = vmatprep.subr.mxu0 0.0
        %4888 = vmatpush1.msra.mxu0 0.0
        %4889 = vmatprep.subr.mxu0 0.0
        %4890 = vmatpush1.msra.mxu0 0.0
        %4891 = vmatprep.subr.mxu0 0.0
        %4892 = vmatpush1.msra.mxu0 0.0
        %4893 = vmatprep.subr.mxu0 0.0
        %4894 = vmatpush1.msra.mxu0 0.0
        %4895 = vmatprep.subr.mxu0 0.0
        %4896 = vmatpush1.msra.mxu0 0.0
        %4897 = vmatprep.subr.mxu0 0.0
        %4898 = vmatpush1.msra.mxu0 0.0
        %4899 = vmatprep.subr.mxu0 0.0
        %4900 = vmatpush1.msra.mxu0 0.0
        %4901 = vmatprep.subr.mxu0 0.0
        %4902 = vmatpush1.msra.mxu0 0.0
        %4903 = vmatprep.subr.mxu0 0.0
        %4904 = vmatpush1.msra.mxu0 0.0
        %4905 = vmatprep.subr.mxu0 0.0
        %4906 = vmatpush1.msra.mxu0 0.0
        %4907 = vmatprep.subr.mxu0 0.0
        %4908 = vmatpush1.msra.mxu0 0.0
        %4909 = vmatprep.subr.mxu0 0.0
        %4910 = vmatpush1.msra.mxu0 0.0
        %4911 = vmatprep.subr.mxu0 0.0
        %4912 = vmatpush1.msra.mxu0 0.0
        %4913 = vmatprep.subr.mxu0 0.0
        %4914 = vmatpush1.msra.mxu0 0.0
        %4915 = vmatprep.subr.mxu0 0.0
        %4916 = vmatpush1.msra.mxu0 0.0
        %4917 = vmatprep.subr.mxu0 0.0
        %4918 = vmatpush1.msra.mxu0 0.0
        %4919 = vmatprep.subr.mxu0 0.0
        %4920 = vmatpush1.msra.mxu0 0.0
        %4921 = vmatprep.subr.mxu0 0.0
        %4922 = vmatpush1.msra.mxu0 0.0
        %4923 = vmatprep.subr.mxu0 0.0
        %4924 = vmatpush1.msra.mxu0 0.0
        %4925 = vmatprep.mubr.f32.mxu0 0.0
        %4926 = vmatmul.mubr.f32.gmra.mrb[0].mxu0 %v4271
        %v4927 = vpop.f32.mrb[0].mxu0
        %v4928 = vadd.f32 %v4857, %v4927
        %v4929 = vpop.f32.mrb[0].mxu0
        %v4930 = vadd.f32 %v4859, %v4929
        %4931 = vdwg.mxu0
        %4932 = vmatprep.subr.mxu0 %v3048
        %4933 = vmatpush1.msra.mxu0 %v3047
        %4934 = vmatprep.subr.mxu0 %v3078
        %4935 = vmatpush1.msra.mxu0 %v3077
        %4936 = vmatprep.subr.mxu0 %v3108
        %4937 = vmatpush1.msra.mxu0 %v3107
        %4938 = vmatprep.subr.mxu0 %v3138
        %4939 = vmatpush1.msra.mxu0 %v3137
        %4940 = vmatprep.subr.mxu0 %v3168
        %4941 = vmatpush1.msra.mxu0 %v3167
        %4942 = vmatprep.subr.mxu0 %v3198
        %4943 = vmatpush1.msra.mxu0 %v3197
        %4944 = vmatprep.subr.mxu0 %v3228
        %4945 = vmatpush1.msra.mxu0 %v3227
        %4946 = vmatprep.subr.mxu0 %v3258
        %4947 = vmatpush1.msra.mxu0 %v3257
        %4948 = vmatprep.subr.mxu0 %v3288
        %4949 = vmatpush1.msra.mxu0 %v3287
        %4950 = vmatprep.subr.mxu0 %v3318
        %4951 = vmatpush1.msra.mxu0 %v3317
        %4952 = vmatprep.subr.mxu0 %v3348
        %4953 = vmatpush1.msra.mxu0 %v3347
        %4954 = vmatprep.subr.mxu0 %v3378
        %4955 = vmatpush1.msra.mxu0 %v3377
        %4956 = vmatprep.subr.mxu0 %v3408
        %4957 = vmatpush1.msra.mxu0 %v3407
        %4958 = vmatprep.subr.mxu0 %v3438
        %4959 = vmatpush1.msra.mxu0 %v3437
        %4960 = vmatprep.subr.mxu0 %v3468
        %4961 = vmatpush1.msra.mxu0 %v3467
        %4962 = vmatprep.subr.mxu0 %v3498
        %4963 = vmatpush1.msra.mxu0 %v3497
        %4964 = vmatprep.subr.mxu0 %v3528
        %4965 = vmatpush1.msra.mxu0 %v3527
        %4966 = vmatprep.subr.mxu0 %v3558
        %4967 = vmatpush1.msra.mxu0 %v3557
        %4968 = vmatprep.subr.mxu0 %v3588
        %4969 = vmatpush1.msra.mxu0 %v3587
        %4970 = vmatprep.subr.mxu0 %v3618
        %4971 = vmatpush1.msra.mxu0 %v3617
        %4972 = vmatprep.subr.mxu0 %v3648
        %4973 = vmatpush1.msra.mxu0 %v3647
        %4974 = vmatprep.subr.mxu0 %v3678
        %4975 = vmatpush1.msra.mxu0 %v3677
        %4976 = vmatprep.subr.mxu0 %v3708
        %4977 = vmatpush1.msra.mxu0 %v3707
        %4978 = vmatprep.subr.mxu0 %v3738
        %4979 = vmatpush1.msra.mxu0 %v3737
        %4980 = vmatprep.subr.mxu0 %v3768
        %4981 = vmatpush1.msra.mxu0 %v3767
        %4982 = vmatprep.subr.mxu0 %v3798
        %4983 = vmatpush1.msra.mxu0 %v3797
        %4984 = vmatprep.subr.mxu0 %v3828
        %4985 = vmatpush1.msra.mxu0 %v3827
        %4986 = vmatprep.subr.mxu0 %v3858
        %4987 = vmatpush1.msra.mxu0 %v3857
        %4988 = vmatprep.subr.mxu0 %v3888
        %4989 = vmatpush1.msra.mxu0 %v3887
        %4990 = vmatprep.subr.mxu0 %v3918
        %4991 = vmatpush1.msra.mxu0 %v3917
        %4992 = vmatprep.subr.mxu0 %v3948
        %4993 = vmatpush1.msra.mxu0 %v3947
        %4994 = vmatprep.subr.mxu0 %v3978
        %4995 = vmatpush1.msra.mxu0 %v3977
        %4996 = vmatprep.mubr.f32.mxu0 %v341
        %4997 = vmatmul.mubr.f32.gmra.mrb[0].mxu0 %v339
        %v4998 = vpop.f32.mrb[0].mxu0
        %v4999 = vadd.f32 0.0, %v4998
        %v5000 = vpop.f32.mrb[0].mxu0
        %v5001 = vadd.f32 0.0, %v5000
        %5002 = vdwg.mxu0
        %5003 = vmatprep.subr.mxu0 %v4008
        %5004 = vmatpush1.msra.mxu0 %v4007
        %5005 = vmatprep.subr.mxu0 %v4038
        %5006 = vmatpush1.msra.mxu0 %v4037
        %5007 = vmatprep.subr.mxu0 %v4068
        %5008 = vmatpush1.msra.mxu0 %v4067
        %5009 = vmatprep.subr.mxu0 %v4098
        %5010 = vmatpush1.msra.mxu0 %v4097
        %5011 = vmatprep.subr.mxu0 %v4128
        %5012 = vmatpush1.msra.mxu0 %v4127
        %5013 = vmatprep.subr.mxu0 %v4158
        %5014 = vmatpush1.msra.mxu0 %v4157
        %5015 = vmatprep.subr.mxu0 %v4188
        %5016 = vmatpush1.msra.mxu0 %v4187
        %5017 = vmatprep.subr.mxu0 %v4218
        %5018 = vmatpush1.msra.mxu0 %v4217
        %5019 = vmatprep.subr.mxu0 %v4302
        %5020 = vmatpush1.msra.mxu0 %v4299
        %5021 = vmatprep.subr.mxu0 0.0
        %5022 = vmatpush1.msra.mxu0 0.0
        %5023 = vmatprep.subr.mxu0 0.0
        %5024 = vmatpush1.msra.mxu0 0.0
        %5025 = vmatprep.subr.mxu0 0.0
        %5026 = vmatpush1.msra.mxu0 0.0
        %5027 = vmatprep.subr.mxu0 0.0
        %5028 = vmatpush1.msra.mxu0 0.0
        %5029 = vmatprep.subr.mxu0 0.0
        %5030 = vmatpush1.msra.mxu0 0.0
        %5031 = vmatprep.subr.mxu0 0.0
        %5032 = vmatpush1.msra.mxu0 0.0
        %5033 = vmatprep.subr.mxu0 0.0
        %5034 = vmatpush1.msra.mxu0 0.0
        %5035 = vmatprep.subr.mxu0 0.0
        %5036 = vmatpush1.msra.mxu0 0.0
        %5037 = vmatprep.subr.mxu0 0.0
        %5038 = vmatpush1.msra.mxu0 0.0
        %5039 = vmatprep.subr.mxu0 0.0
        %5040 = vmatpush1.msra.mxu0 0.0
        %5041 = vmatprep.subr.mxu0 0.0
        %5042 = vmatpush1.msra.mxu0 0.0
        %5043 = vmatprep.subr.mxu0 0.0
        %5044 = vmatpush1.msra.mxu0 0.0
        %5045 = vmatprep.subr.mxu0 0.0
        %5046 = vmatpush1.msra.mxu0 0.0
        %5047 = vmatprep.subr.mxu0 0.0
        %5048 = vmatpush1.msra.mxu0 0.0
        %5049 = vmatprep.subr.mxu0 0.0
        %5050 = vmatpush1.msra.mxu0 0.0
        %5051 = vmatprep.subr.mxu0 0.0
        %5052 = vmatpush1.msra.mxu0 0.0
        %5053 = vmatprep.subr.mxu0 0.0
        %5054 = vmatpush1.msra.mxu0 0.0
        %5055 = vmatprep.subr.mxu0 0.0
        %5056 = vmatpush1.msra.mxu0 0.0
        %5057 = vmatprep.subr.mxu0 0.0
        %5058 = vmatpush1.msra.mxu0 0.0
        %5059 = vmatprep.subr.mxu0 0.0
        %5060 = vmatpush1.msra.mxu0 0.0
        %5061 = vmatprep.subr.mxu0 0.0
        %5062 = vmatpush1.msra.mxu0 0.0
        %5063 = vmatprep.subr.mxu0 0.0
        %5064 = vmatpush1.msra.mxu0 0.0
        %5065 = vmatprep.subr.mxu0 0.0
        %5066 = vmatpush1.msra.mxu0 0.0
        %5067 = vmatprep.mubr.f32.mxu0 0.0
        %5068 = vmatmul.mubr.f32.gmra.mrb[0].mxu0 %v4271
        %v5069 = vpop.f32.mrb[0].mxu0
        %v5070 = vadd.f32 %v4999, %v5069
        %v5071 = vpop.f32.mrb[0].mxu0
        %v5072 = vadd.f32 %v5001, %v5071
        %5073 = vdwg.mxu0
        %5074 = vmatprep.subr.mxu0 %v3050
        %5075 = vmatpush1.msra.mxu0 %v3049
        %5076 = vmatprep.subr.mxu0 %v3080
        %5077 = vmatpush1.msra.mxu0 %v3079
        %5078 = vmatprep.subr.mxu0 %v3110
        %5079 = vmatpush1.msra.mxu0 %v3109
        %5080 = vmatprep.subr.mxu0 %v3140
        %5081 = vmatpush1.msra.mxu0 %v3139
        %5082 = vmatprep.subr.mxu0 %v3170
        %5083 = vmatpush1.msra.mxu0 %v3169
        %5084 = vmatprep.subr.mxu0 %v3200
        %5085 = vmatpush1.msra.mxu0 %v3199
        %5086 = vmatprep.subr.mxu0 %v3230
        %5087 = vmatpush1.msra.mxu0 %v3229
        %5088 = vmatprep.subr.mxu0 %v3260
        %5089 = vmatpush1.msra.mxu0 %v3259
        %5090 = vmatprep.subr.mxu0 %v3290
        %5091 = vmatpush1.msra.mxu0 %v3289
        %5092 = vmatprep.subr.mxu0 %v3320
        %5093 = vmatpush1.msra.mxu0 %v3319
        %5094 = vmatprep.subr.mxu0 %v3350
        %5095 = vmatpush1.msra.mxu0 %v3349
        %5096 = vmatprep.subr.mxu0 %v3380
        %5097 = vmatpush1.msra.mxu0 %v3379
        %5098 = vmatprep.subr.mxu0 %v3410
        %5099 = vmatpush1.msra.mxu0 %v3409
        %5100 = vmatprep.subr.mxu0 %v3440
        %5101 = vmatpush1.msra.mxu0 %v3439
        %5102 = vmatprep.subr.mxu0 %v3470
        %5103 = vmatpush1.msra.mxu0 %v3469
        %5104 = vmatprep.subr.mxu0 %v3500
        %5105 = vmatpush1.msra.mxu0 %v3499
        %5106 = vmatprep.subr.mxu0 %v3530
        %5107 = vmatpush1.msra.mxu0 %v3529
        %5108 = vmatprep.subr.mxu0 %v3560
        %5109 = vmatpush1.msra.mxu0 %v3559
        %5110 = vmatprep.subr.mxu0 %v3590
        %5111 = vmatpush1.msra.mxu0 %v3589
        %5112 = vmatprep.subr.mxu0 %v3620
        %5113 = vmatpush1.msra.mxu0 %v3619
        %5114 = vmatprep.subr.mxu0 %v3650
        %5115 = vmatpush1.msra.mxu0 %v3649
        %5116 = vmatprep.subr.mxu0 %v3680
        %5117 = vmatpush1.msra.mxu0 %v3679
        %5118 = vmatprep.subr.mxu0 %v3710
        %5119 = vmatpush1.msra.mxu0 %v3709
        %5120 = vmatprep.subr.mxu0 %v3740
        %5121 = vmatpush1.msra.mxu0 %v3739
        %5122 = vmatprep.subr.mxu0 %v3770
        %5123 = vmatpush1.msra.mxu0 %v3769
        %5124 = vmatprep.subr.mxu0 %v3800
        %5125 = vmatpush1.msra.mxu0 %v3799
        %5126 = vmatprep.subr.mxu0 %v3830
        %5127 = vmatpush1.msra.mxu0 %v3829
        %5128 = vmatprep.subr.mxu0 %v3860
        %5129 = vmatpush1.msra.mxu0 %v3859
        %5130 = vmatprep.subr.mxu0 %v3890
        %5131 = vmatpush1.msra.mxu0 %v3889
        %5132 = vmatprep.subr.mxu0 %v3920
        %5133 = vmatpush1.msra.mxu0 %v3919
        %5134 = vmatprep.subr.mxu0 %v3950
        %5135 = vmatpush1.msra.mxu0 %v3949
        %5136 = vmatprep.subr.mxu0 %v3980
        %5137 = vmatpush1.msra.mxu0 %v3979
        %5138 = vmatprep.mubr.f32.mxu0 %v341
        %5139 = vmatmul.mubr.f32.gmra.mrb[0].mxu0 %v339
        %v5140 = vpop.f32.mrb[0].mxu0
        %v5141 = vadd.f32 0.0, %v5140
        %v5142 = vpop.f32.mrb[0].mxu0
        %v5143 = vadd.f32 0.0, %v5142
        %5144 = vdwg.mxu0
        %5145 = vmatprep.subr.mxu0 %v4010
        %5146 = vmatpush1.msra.mxu0 %v4009
        %5147 = vmatprep.subr.mxu0 %v4040
        %5148 = vmatpush1.msra.mxu0 %v4039
        %5149 = vmatprep.subr.mxu0 %v4070
        %5150 = vmatpush1.msra.mxu0 %v4069
        %5151 = vmatprep.subr.mxu0 %v4100
        %5152 = vmatpush1.msra.mxu0 %v4099
        %5153 = vmatprep.subr.mxu0 %v4130
        %5154 = vmatpush1.msra.mxu0 %v4129
        %5155 = vmatprep.subr.mxu0 %v4160
        %5156 = vmatpush1.msra.mxu0 %v4159
        %5157 = vmatprep.subr.mxu0 %v4190
        %5158 = vmatpush1.msra.mxu0 %v4189
        %5159 = vmatprep.subr.mxu0 %v4220
        %5160 = vmatpush1.msra.mxu0 %v4219
        %5161 = vmatprep.subr.mxu0 %v4308
        %5162 = vmatpush1.msra.mxu0 %v4305
        %5163 = vmatprep.subr.mxu0 0.0
        %5164 = vmatpush1.msra.mxu0 0.0
        %5165 = vmatprep.subr.mxu0 0.0
        %5166 = vmatpush1.msra.mxu0 0.0
        %5167 = vmatprep.subr.mxu0 0.0
        %5168 = vmatpush1.msra.mxu0 0.0
        %5169 = vmatprep.subr.mxu0 0.0
        %5170 = vmatpush1.msra.mxu0 0.0
        %5171 = vmatprep.subr.mxu0 0.0
        %5172 = vmatpush1.msra.mxu0 0.0
        %5173 = vmatprep.subr.mxu0 0.0
        %5174 = vmatpush1.msra.mxu0 0.0
        %5175 = vmatprep.subr.mxu0 0.0
        %5176 = vmatpush1.msra.mxu0 0.0
        %5177 = vmatprep.subr.mxu0 0.0
        %5178 = vmatpush1.msra.mxu0 0.0
        %5179 = vmatprep.subr.mxu0 0.0
        %5180 = vmatpush1.msra.mxu0 0.0
        %5181 = vmatprep.subr.mxu0 0.0
        %5182 = vmatpush1.msra.mxu0 0.0
        %5183 = vmatprep.subr.mxu0 0.0
        %5184 = vmatpush1.msra.mxu0 0.0
        %5185 = vmatprep.subr.mxu0 0.0
        %5186 = vmatpush1.msra.mxu0 0.0
        %5187 = vmatprep.subr.mxu0 0.0
        %5188 = vmatpush1.msra.mxu0 0.0
        %5189 = vmatprep.subr.mxu0 0.0
        %5190 = vmatpush1.msra.mxu0 0.0
        %5191 = vmatprep.subr.mxu0 0.0
        %5192 = vmatpush1.msra.mxu0 0.0
        %5193 = vmatprep.subr.mxu0 0.0
        %5194 = vmatpush1.msra.mxu0 0.0
        %5195 = vmatprep.subr.mxu0 0.0
        %5196 = vmatpush1.msra.mxu0 0.0
        %5197 = vmatprep.subr.mxu0 0.0
        %5198 = vmatpush1.msra.mxu0 0.0
        %5199 = vmatprep.subr.mxu0 0.0
        %5200 = vmatpush1.msra.mxu0 0.0
        %5201 = vmatprep.subr.mxu0 0.0
        %5202 = vmatpush1.msra.mxu0 0.0
        %5203 = vmatprep.subr.mxu0 0.0
        %5204 = vmatpush1.msra.mxu0 0.0
        %5205 = vmatprep.subr.mxu0 0.0
        %5206 = vmatpush1.msra.mxu0 0.0
        %5207 = vmatprep.subr.mxu0 0.0
        %5208 = vmatpush1.msra.mxu0 0.0
        %5209 = vmatprep.mubr.f32.mxu0 0.0
        %5210 = vmatmul.mubr.f32.gmra.mrb[0].mxu0 %v4271
        %v5211 = vpop.f32.mrb[0].mxu0
        %v5212 = vadd.f32 %v5141, %v5211
        %v5213 = vpop.f32.mrb[0].mxu0
        %v5214 = vadd.f32 %v5143, %v5213
        %5215 = vdwg.mxu0
        %5216 = vmatprep.subr.mxu0 %v3052
        %5217 = vmatpush1.msra.mxu0 %v3051
        %5218 = vmatprep.subr.mxu0 %v3082
        %5219 = vmatpush1.msra.mxu0 %v3081
        %5220 = vmatprep.subr.mxu0 %v3112
        %5221 = vmatpush1.msra.mxu0 %v3111
        %5222 = vmatprep.subr.mxu0 %v3142
        %5223 = vmatpush1.msra.mxu0 %v3141
        %5224 = vmatprep.subr.mxu0 %v3172
        %5225 = vmatpush1.msra.mxu0 %v3171
        %5226 = vmatprep.subr.mxu0 %v3202
        %5227 = vmatpush1.msra.mxu0 %v3201
        %5228 = vmatprep.subr.mxu0 %v3232
        %5229 = vmatpush1.msra.mxu0 %v3231
        %5230 = vmatprep.subr.mxu0 %v3262
        %5231 = vmatpush1.msra.mxu0 %v3261
        %5232 = vmatprep.subr.mxu0 %v3292
        %5233 = vmatpush1.msra.mxu0 %v3291
        %5234 = vmatprep.subr.mxu0 %v3322
        %5235 = vmatpush1.msra.mxu0 %v3321
        %5236 = vmatprep.subr.mxu0 %v3352
        %5237 = vmatpush1.msra.mxu0 %v3351
        %5238 = vmatprep.subr.mxu0 %v3382
        %5239 = vmatpush1.msra.mxu0 %v3381
        %5240 = vmatprep.subr.mxu0 %v3412
        %5241 = vmatpush1.msra.mxu0 %v3411
        %5242 = vmatprep.subr.mxu0 %v3442
        %5243 = vmatpush1.msra.mxu0 %v3441
        %5244 = vmatprep.subr.mxu0 %v3472
        %5245 = vmatpush1.msra.mxu0 %v3471
        %5246 = vmatprep.subr.mxu0 %v3502
        %5247 = vmatpush1.msra.mxu0 %v3501
        %5248 = vmatprep.subr.mxu0 %v3532
        %5249 = vmatpush1.msra.mxu0 %v3531
        %5250 = vmatprep.subr.mxu0 %v3562
        %5251 = vmatpush1.msra.mxu0 %v3561
        %5252 = vmatprep.subr.mxu0 %v3592
        %5253 = vmatpush1.msra.mxu0 %v3591
        %5254 = vmatprep.subr.mxu0 %v3622
        %5255 = vmatpush1.msra.mxu0 %v3621
        %5256 = vmatprep.subr.mxu0 %v3652
        %5257 = vmatpush1.msra.mxu0 %v3651
        %5258 = vmatprep.subr.mxu0 %v3682
        %5259 = vmatpush1.msra.mxu0 %v3681
        %5260 = vmatprep.subr.mxu0 %v3712
        %5261 = vmatpush1.msra.mxu0 %v3711
        %5262 = vmatprep.subr.mxu0 %v3742
        %5263 = vmatpush1.msra.mxu0 %v3741
        %5264 = vmatprep.subr.mxu0 %v3772
        %5265 = vmatpush1.msra.mxu0 %v3771
        %5266 = vmatprep.subr.mxu0 %v3802
        %5267 = vmatpush1.msra.mxu0 %v3801
        %5268 = vmatprep.subr.mxu0 %v3832
        %5269 = vmatpush1.msra.mxu0 %v3831
        %5270 = vmatprep.subr.mxu0 %v3862
        %5271 = vmatpush1.msra.mxu0 %v3861
        %5272 = vmatprep.subr.mxu0 %v3892
        %5273 = vmatpush1.msra.mxu0 %v3891
        %5274 = vmatprep.subr.mxu0 %v3922
        %5275 = vmatpush1.msra.mxu0 %v3921
        %5276 = vmatprep.subr.mxu0 %v3952
        %5277 = vmatpush1.msra.mxu0 %v3951
        %5278 = vmatprep.subr.mxu0 %v3982
        %5279 = vmatpush1.msra.mxu0 %v3981
        %5280 = vmatprep.mubr.f32.mxu0 %v341
        %5281 = vmatmul.mubr.f32.gmra.mrb[0].mxu0 %v339
        %v5282 = vpop.f32.mrb[0].mxu0
        %v5283 = vadd.f32 0.0, %v5282
        %v5284 = vpop.f32.mrb[0].mxu0
        %v5285 = vadd.f32 0.0, %v5284
        %5286 = vdwg.mxu0
        %5287 = vmatprep.subr.mxu0 %v4012
        %5288 = vmatpush1.msra.mxu0 %v4011
        %5289 = vmatprep.subr.mxu0 %v4042
        %5290 = vmatpush1.msra.mxu0 %v4041
        %5291 = vmatprep.subr.mxu0 %v4072
        %5292 = vmatpush1.msra.mxu0 %v4071
        %5293 = vmatprep.subr.mxu0 %v4102
        %5294 = vmatpush1.msra.mxu0 %v4101
        %5295 = vmatprep.subr.mxu0 %v4132
        %5296 = vmatpush1.msra.mxu0 %v4131
        %5297 = vmatprep.subr.mxu0 %v4162
        %5298 = vmatpush1.msra.mxu0 %v4161
        %5299 = vmatprep.subr.mxu0 %v4192
        %5300 = vmatpush1.msra.mxu0 %v4191
        %5301 = vmatprep.subr.mxu0 %v4222
        %5302 = vmatpush1.msra.mxu0 %v4221
        %5303 = vmatprep.subr.mxu0 %v4314
        %5304 = vmatpush1.msra.mxu0 %v4311
        %5305 = vmatprep.subr.mxu0 0.0
        %5306 = vmatpush1.msra.mxu0 0.0
        %5307 = vmatprep.subr.mxu0 0.0
        %5308 = vmatpush1.msra.mxu0 0.0
        %5309 = vmatprep.subr.mxu0 0.0
        %5310 = vmatpush1.msra.mxu0 0.0
        %5311 = vmatprep.subr.mxu0 0.0
        %5312 = vmatpush1.msra.mxu0 0.0
        %5313 = vmatprep.subr.mxu0 0.0
        %5314 = vmatpush1.msra.mxu0 0.0
        %5315 = vmatprep.subr.mxu0 0.0
        %5316 = vmatpush1.msra.mxu0 0.0
        %5317 = vmatprep.subr.mxu0 0.0
        %5318 = vmatpush1.msra.mxu0 0.0
        %5319 = vmatprep.subr.mxu0 0.0
        %5320 = vmatpush1.msra.mxu0 0.0
        %5321 = vmatprep.subr.mxu0 0.0
        %5322 = vmatpush1.msra.mxu0 0.0
        %5323 = vmatprep.subr.mxu0 0.0
        %5324 = vmatpush1.msra.mxu0 0.0
        %5325 = vmatprep.subr.mxu0 0.0
        %5326 = vmatpush1.msra.mxu0 0.0
        %5327 = vmatprep.subr.mxu0 0.0
        %5328 = vmatpush1.msra.mxu0 0.0
        %5329 = vmatprep.subr.mxu0 0.0
        %5330 = vmatpush1.msra.mxu0 0.0
        %5331 = vmatprep.subr.mxu0 0.0
        %5332 = vmatpush1.msra.mxu0 0.0
        %5333 = vmatprep.subr.mxu0 0.0
        %5334 = vmatpush1.msra.mxu0 0.0
        %5335 = vmatprep.subr.mxu0 0.0
        %5336 = vmatpush1.msra.mxu0 0.0
        %5337 = vmatprep.subr.mxu0 0.0
        %5338 = vmatpush1.msra.mxu0 0.0
        %5339 = vmatprep.subr.mxu0 0.0
        %5340 = vmatpush1.msra.mxu0 0.0
        %5341 = vmatprep.subr.mxu0 0.0
        %5342 = vmatpush1.msra.mxu0 0.0
        %5343 = vmatprep.subr.mxu0 0.0
        %5344 = vmatpush1.msra.mxu0 0.0
        %5345 = vmatprep.subr.mxu0 0.0
        %5346 = vmatpush1.msra.mxu0 0.0
        %5347 = vmatprep.subr.mxu0 0.0
        %5348 = vmatpush1.msra.mxu0 0.0
        %5349 = vmatprep.subr.mxu0 0.0
        %5350 = vmatpush1.msra.mxu0 0.0
        %5351 = vmatprep.mubr.f32.mxu0 0.0
        %5352 = vmatmul.mubr.f32.gmra.mrb[0].mxu0 %v4271
        %v5353 = vpop.f32.mrb[0].mxu0
        %v5354 = vadd.f32 %v5283, %v5353
        %v5355 = vpop.f32.mrb[0].mxu0
        %v5356 = vadd.f32 %v5285, %v5355
        %5357 = vdwg.mxu0
        %5358 = vmatprep.subr.mxu0 %v3054
        %5359 = vmatpush1.msra.mxu0 %v3053
        %5360 = vmatprep.subr.mxu0 %v3084
        %5361 = vmatpush1.msra.mxu0 %v3083
        %5362 = vmatprep.subr.mxu0 %v3114
        %5363 = vmatpush1.msra.mxu0 %v3113
        %5364 = vmatprep.subr.mxu0 %v3144
        %5365 = vmatpush1.msra.mxu0 %v3143
        %5366 = vmatprep.subr.mxu0 %v3174
        %5367 = vmatpush1.msra.mxu0 %v3173
        %5368 = vmatprep.subr.mxu0 %v3204
        %5369 = vmatpush1.msra.mxu0 %v3203
        %5370 = vmatprep.subr.mxu0 %v3234
        %5371 = vmatpush1.msra.mxu0 %v3233
        %5372 = vmatprep.subr.mxu0 %v3264
        %5373 = vmatpush1.msra.mxu0 %v3263
        %5374 = vmatprep.subr.mxu0 %v3294
        %5375 = vmatpush1.msra.mxu0 %v3293
        %5376 = vmatprep.subr.mxu0 %v3324
        %5377 = vmatpush1.msra.mxu0 %v3323
        %5378 = vmatprep.subr.mxu0 %v3354
        %5379 = vmatpush1.msra.mxu0 %v3353
        %5380 = vmatprep.subr.mxu0 %v3384
        %5381 = vmatpush1.msra.mxu0 %v3383
        %5382 = vmatprep.subr.mxu0 %v3414
        %5383 = vmatpush1.msra.mxu0 %v3413
        %5384 = vmatprep.subr.mxu0 %v3444
        %5385 = vmatpush1.msra.mxu0 %v3443
        %5386 = vmatprep.subr.mxu0 %v3474
        %5387 = vmatpush1.msra.mxu0 %v3473
        %5388 = vmatprep.subr.mxu0 %v3504
        %5389 = vmatpush1.msra.mxu0 %v3503
        %5390 = vmatprep.subr.mxu0 %v3534
        %5391 = vmatpush1.msra.mxu0 %v3533
        %5392 = vmatprep.subr.mxu0 %v3564
        %5393 = vmatpush1.msra.mxu0 %v3563
        %5394 = vmatprep.subr.mxu0 %v3594
        %5395 = vmatpush1.msra.mxu0 %v3593
        %5396 = vmatprep.subr.mxu0 %v3624
        %5397 = vmatpush1.msra.mxu0 %v3623
        %5398 = vmatprep.subr.mxu0 %v3654
        %5399 = vmatpush1.msra.mxu0 %v3653
        %5400 = vmatprep.subr.mxu0 %v3684
        %5401 = vmatpush1.msra.mxu0 %v3683
        %5402 = vmatprep.subr.mxu0 %v3714
        %5403 = vmatpush1.msra.mxu0 %v3713
        %5404 = vmatprep.subr.mxu0 %v3744
        %5405 = vmatpush1.msra.mxu0 %v3743
        %5406 = vmatprep.subr.mxu0 %v3774
        %5407 = vmatpush1.msra.mxu0 %v3773
        %5408 = vmatprep.subr.mxu0 %v3804
        %5409 = vmatpush1.msra.mxu0 %v3803
        %5410 = vmatprep.subr.mxu0 %v3834
        %5411 = vmatpush1.msra.mxu0 %v3833
        %5412 = vmatprep.subr.mxu0 %v3864
        %5413 = vmatpush1.msra.mxu0 %v3863
        %5414 = vmatprep.subr.mxu0 %v3894
        %5415 = vmatpush1.msra.mxu0 %v3893
        %5416 = vmatprep.subr.mxu0 %v3924
        %5417 = vmatpush1.msra.mxu0 %v3923
        %5418 = vmatprep.subr.mxu0 %v3954
        %5419 = vmatpush1.msra.mxu0 %v3953
        %5420 = vmatprep.subr.mxu0 %v3984
        %5421 = vmatpush1.msra.mxu0 %v3983
        %5422 = vmatprep.mubr.f32.mxu0 %v341
        %5423 = vmatmul.mubr.f32.gmra.mrb[0].mxu0 %v339
        %v5424 = vpop.f32.mrb[0].mxu0
        %v5425 = vadd.f32 0.0, %v5424
        %v5426 = vpop.f32.mrb[0].mxu0
        %v5427 = vadd.f32 0.0, %v5426
        %5428 = vdwg.mxu0
        %5429 = vmatprep.subr.mxu0 %v4014
        %5430 = vmatpush1.msra.mxu0 %v4013
        %5431 = vmatprep.subr.mxu0 %v4044
        %5432 = vmatpush1.msra.mxu0 %v4043
        %5433 = vmatprep.subr.mxu0 %v4074
        %5434 = vmatpush1.msra.mxu0 %v4073
        %5435 = vmatprep.subr.mxu0 %v4104
        %5436 = vmatpush1.msra.mxu0 %v4103
        %5437 = vmatprep.subr.mxu0 %v4134
        %5438 = vmatpush1.msra.mxu0 %v4133
        %5439 = vmatprep.subr.mxu0 %v4164
        %5440 = vmatpush1.msra.mxu0 %v4163
        %5441 = vmatprep.subr.mxu0 %v4194
        %5442 = vmatpush1.msra.mxu0 %v4193
        %5443 = vmatprep.subr.mxu0 %v4224
        %5444 = vmatpush1.msra.mxu0 %v4223
        %5445 = vmatprep.subr.mxu0 %v4320
        %5446 = vmatpush1.msra.mxu0 %v4317
        %5447 = vmatprep.subr.mxu0 0.0
        %5448 = vmatpush1.msra.mxu0 0.0
        %5449 = vmatprep.subr.mxu0 0.0
        %5450 = vmatpush1.msra.mxu0 0.0
        %5451 = vmatprep.subr.mxu0 0.0
        %5452 = vmatpush1.msra.mxu0 0.0
        %5453 = vmatprep.subr.mxu0 0.0
        %5454 = vmatpush1.msra.mxu0 0.0
        %5455 = vmatprep.subr.mxu0 0.0
        %5456 = vmatpush1.msra.mxu0 0.0
        %5457 = vmatprep.subr.mxu0 0.0
        %5458 = vmatpush1.msra.mxu0 0.0
        %5459 = vmatprep.subr.mxu0 0.0
        %5460 = vmatpush1.msra.mxu0 0.0
        %5461 = vmatprep.subr.mxu0 0.0
        %5462 = vmatpush1.msra.mxu0 0.0
        %5463 = vmatprep.subr.mxu0 0.0
        %5464 = vmatpush1.msra.mxu0 0.0
        %5465 = vmatprep.subr.mxu0 0.0
        %5466 = vmatpush1.msra.mxu0 0.0
        %5467 = vmatprep.subr.mxu0 0.0
        %5468 = vmatpush1.msra.mxu0 0.0
        %5469 = vmatprep.subr.mxu0 0.0
        %5470 = vmatpush1.msra.mxu0 0.0
        %5471 = vmatprep.subr.mxu0 0.0
        %5472 = vmatpush1.msra.mxu0 0.0
        %5473 = vmatprep.subr.mxu0 0.0
        %5474 = vmatpush1.msra.mxu0 0.0
        %5475 = vmatprep.subr.mxu0 0.0
        %5476 = vmatpush1.msra.mxu0 0.0
        %5477 = vmatprep.subr.mxu0 0.0
        %5478 = vmatpush1.msra.mxu0 0.0
        %5479 = vmatprep.subr.mxu0 0.0
        %5480 = vmatpush1.msra.mxu0 0.0
        %5481 = vmatprep.subr.mxu0 0.0
        %5482 = vmatpush1.msra.mxu0 0.0
        %5483 = vmatprep.subr.mxu0 0.0
        %5484 = vmatpush1.msra.mxu0 0.0
        %5485 = vmatprep.subr.mxu0 0.0
        %5486 = vmatpush1.msra.mxu0 0.0
        %5487 = vmatprep.subr.mxu0 0.0
        %5488 = vmatpush1.msra.mxu0 0.0
        %5489 = vmatprep.subr.mxu0 0.0
        %5490 = vmatpush1.msra.mxu0 0.0
        %5491 = vmatprep.subr.mxu0 0.0
        %5492 = vmatpush1.msra.mxu0 0.0
        %5493 = vmatprep.mubr.f32.mxu0 0.0
        %5494 = vmatmul.mubr.f32.gmra.mrb[0].mxu0 %v4271
        %v5495 = vpop.f32.mrb[0].mxu0
        %v5496 = vadd.f32 %v5425, %v5495
        %v5497 = vpop.f32.mrb[0].mxu0
        %v5498 = vadd.f32 %v5427, %v5497
        %5499 = vdwg.mxu0
        %5500 = vmatprep.subr.mxu0 %v3056
        %5501 = vmatpush1.msra.mxu0 %v3055
        %5502 = vmatprep.subr.mxu0 %v3086
        %5503 = vmatpush1.msra.mxu0 %v3085
        %5504 = vmatprep.subr.mxu0 %v3116
        %5505 = vmatpush1.msra.mxu0 %v3115
        %5506 = vmatprep.subr.mxu0 %v3146
        %5507 = vmatpush1.msra.mxu0 %v3145
        %5508 = vmatprep.subr.mxu0 %v3176
        %5509 = vmatpush1.msra.mxu0 %v3175
        %5510 = vmatprep.subr.mxu0 %v3206
        %5511 = vmatpush1.msra.mxu0 %v3205
        %5512 = vmatprep.subr.mxu0 %v3236
        %5513 = vmatpush1.msra.mxu0 %v3235
        %5514 = vmatprep.subr.mxu0 %v3266
        %5515 = vmatpush1.msra.mxu0 %v3265
        %5516 = vmatprep.subr.mxu0 %v3296
        %5517 = vmatpush1.msra.mxu0 %v3295
        %5518 = vmatprep.subr.mxu0 %v3326
        %5519 = vmatpush1.msra.mxu0 %v3325
        %5520 = vmatprep.subr.mxu0 %v3356
        %5521 = vmatpush1.msra.mxu0 %v3355
        %5522 = vmatprep.subr.mxu0 %v3386
        %5523 = vmatpush1.msra.mxu0 %v3385
        %5524 = vmatprep.subr.mxu0 %v3416
        %5525 = vmatpush1.msra.mxu0 %v3415
        %5526 = vmatprep.subr.mxu0 %v3446
        %5527 = vmatpush1.msra.mxu0 %v3445
        %5528 = vmatprep.subr.mxu0 %v3476
        %5529 = vmatpush1.msra.mxu0 %v3475
        %5530 = vmatprep.subr.mxu0 %v3506
        %5531 = vmatpush1.msra.mxu0 %v3505
        %5532 = vmatprep.subr.mxu0 %v3536
        %5533 = vmatpush1.msra.mxu0 %v3535
        %5534 = vmatprep.subr.mxu0 %v3566
        %5535 = vmatpush1.msra.mxu0 %v3565
        %5536 = vmatprep.subr.mxu0 %v3596
        %5537 = vmatpush1.msra.mxu0 %v3595
        %5538 = vmatprep.subr.mxu0 %v3626
        %5539 = vmatpush1.msra.mxu0 %v3625
        %5540 = vmatprep.subr.mxu0 %v3656
        %5541 = vmatpush1.msra.mxu0 %v3655
        %5542 = vmatprep.subr.mxu0 %v3686
        %5543 = vmatpush1.msra.mxu0 %v3685
        %5544 = vmatprep.subr.mxu0 %v3716
        %5545 = vmatpush1.msra.mxu0 %v3715
        %5546 = vmatprep.subr.mxu0 %v3746
        %5547 = vmatpush1.msra.mxu0 %v3745
        %5548 = vmatprep.subr.mxu0 %v3776
        %5549 = vmatpush1.msra.mxu0 %v3775
        %5550 = vmatprep.subr.mxu0 %v3806
        %5551 = vmatpush1.msra.mxu0 %v3805
        %5552 = vmatprep.subr.mxu0 %v3836
        %5553 = vmatpush1.msra.mxu0 %v3835
        %5554 = vmatprep.subr.mxu0 %v3866
        %5555 = vmatpush1.msra.mxu0 %v3865
        %5556 = vmatprep.subr.mxu0 %v3896
        %5557 = vmatpush1.msra.mxu0 %v3895
        %5558 = vmatprep.subr.mxu0 %v3926
        %5559 = vmatpush1.msra.mxu0 %v3925
        %5560 = vmatprep.subr.mxu0 %v3956
        %5561 = vmatpush1.msra.mxu0 %v3955
        %5562 = vmatprep.subr.mxu0 %v3986
        %5563 = vmatpush1.msra.mxu0 %v3985
        %5564 = vmatprep.mubr.f32.mxu0 %v341
        %5565 = vmatmul.mubr.f32.gmra.mrb[0].mxu0 %v339
        %v5566 = vpop.f32.mrb[0].mxu0
        %v5567 = vadd.f32 0.0, %v5566
        %v5568 = vpop.f32.mrb[0].mxu0
        %v5569 = vadd.f32 0.0, %v5568
        %5570 = vdwg.mxu0
        %5571 = vmatprep.subr.mxu0 %v4016
        %5572 = vmatpush1.msra.mxu0 %v4015
        %5573 = vmatprep.subr.mxu0 %v4046
        %5574 = vmatpush1.msra.mxu0 %v4045
        %5575 = vmatprep.subr.mxu0 %v4076
        %5576 = vmatpush1.msra.mxu0 %v4075
        %5577 = vmatprep.subr.mxu0 %v4106
        %5578 = vmatpush1.msra.mxu0 %v4105
        %5579 = vmatprep.subr.mxu0 %v4136
        %5580 = vmatpush1.msra.mxu0 %v4135
        %5581 = vmatprep.subr.mxu0 %v4166
        %5582 = vmatpush1.msra.mxu0 %v4165
        %5583 = vmatprep.subr.mxu0 %v4196
        %5584 = vmatpush1.msra.mxu0 %v4195
        %5585 = vmatprep.subr.mxu0 %v4226
        %5586 = vmatpush1.msra.mxu0 %v4225
        %5587 = vmatprep.subr.mxu0 %v4326
        %5588 = vmatpush1.msra.mxu0 %v4323
        %5589 = vmatprep.subr.mxu0 0.0
        %5590 = vmatpush1.msra.mxu0 0.0
        %5591 = vmatprep.subr.mxu0 0.0
        %5592 = vmatpush1.msra.mxu0 0.0
        %5593 = vmatprep.subr.mxu0 0.0
        %5594 = vmatpush1.msra.mxu0 0.0
        %5595 = vmatprep.subr.mxu0 0.0
        %5596 = vmatpush1.msra.mxu0 0.0
        %5597 = vmatprep.subr.mxu0 0.0
        %5598 = vmatpush1.msra.mxu0 0.0
        %5599 = vmatprep.subr.mxu0 0.0
        %5600 = vmatpush1.msra.mxu0 0.0
        %5601 = vmatprep.subr.mxu0 0.0
        %5602 = vmatpush1.msra.mxu0 0.0
        %5603 = vmatprep.subr.mxu0 0.0
        %5604 = vmatpush1.msra.mxu0 0.0
        %5605 = vmatprep.subr.mxu0 0.0
        %5606 = vmatpush1.msra.mxu0 0.0
        %5607 = vmatprep.subr.mxu0 0.0
        %5608 = vmatpush1.msra.mxu0 0.0
        %5609 = vmatprep.subr.mxu0 0.0
        %5610 = vmatpush1.msra.mxu0 0.0
        %5611 = vmatprep.subr.mxu0 0.0
        %5612 = vmatpush1.msra.mxu0 0.0
        %5613 = vmatprep.subr.mxu0 0.0
        %5614 = vmatpush1.msra.mxu0 0.0
        %5615 = vmatprep.subr.mxu0 0.0
        %5616 = vmatpush1.msra.mxu0 0.0
        %5617 = vmatprep.subr.mxu0 0.0
        %5618 = vmatpush1.msra.mxu0 0.0
        %5619 = vmatprep.subr.mxu0 0.0
        %5620 = vmatpush1.msra.mxu0 0.0
        %5621 = vmatprep.subr.mxu0 0.0
        %5622 = vmatpush1.msra.mxu0 0.0
        %5623 = vmatprep.subr.mxu0 0.0
        %5624 = vmatpush1.msra.mxu0 0.0
        %5625 = vmatprep.subr.mxu0 0.0
        %5626 = vmatpush1.msra.mxu0 0.0
        %5627 = vmatprep.subr.mxu0 0.0
        %5628 = vmatpush1.msra.mxu0 0.0
        %5629 = vmatprep.subr.mxu0 0.0
        %5630 = vmatpush1.msra.mxu0 0.0
        %5631 = vmatprep.subr.mxu0 0.0
        %5632 = vmatpush1.msra.mxu0 0.0
        %5633 = vmatprep.subr.mxu0 0.0
        %5634 = vmatpush1.msra.mxu0 0.0
        %5635 = vmatprep.mubr.f32.mxu0 0.0
        %5636 = vmatmul.mubr.f32.gmra.mrb[0].mxu0 %v4271
        %v5637 = vpop.f32.mrb[0].mxu0
        %v5638 = vadd.f32 %v5567, %v5637
        %v5639 = vpop.f32.mrb[0].mxu0
        %v5640 = vadd.f32 %v5569, %v5639
        %5641 = vdwg.mxu0
        %5642 = vmatprep.subr.mxu0 %v3058
        %5643 = vmatpush1.msra.mxu0 %v3057
        %5644 = vmatprep.subr.mxu0 %v3088
        %5645 = vmatpush1.msra.mxu0 %v3087
        %5646 = vmatprep.subr.mxu0 %v3118
        %5647 = vmatpush1.msra.mxu0 %v3117
        %5648 = vmatprep.subr.mxu0 %v3148
        %5649 = vmatpush1.msra.mxu0 %v3147
        %5650 = vmatprep.subr.mxu0 %v3178
        %5651 = vmatpush1.msra.mxu0 %v3177
        %5652 = vmatprep.subr.mxu0 %v3208
        %5653 = vmatpush1.msra.mxu0 %v3207
        %5654 = vmatprep.subr.mxu0 %v3238
        %5655 = vmatpush1.msra.mxu0 %v3237
        %5656 = vmatprep.subr.mxu0 %v3268
        %5657 = vmatpush1.msra.mxu0 %v3267
        %5658 = vmatprep.subr.mxu0 %v3298
        %5659 = vmatpush1.msra.mxu0 %v3297
        %5660 = vmatprep.subr.mxu0 %v3328
        %5661 = vmatpush1.msra.mxu0 %v3327
        %5662 = vmatprep.subr.mxu0 %v3358
        %5663 = vmatpush1.msra.mxu0 %v3357
        %5664 = vmatprep.subr.mxu0 %v3388
        %5665 = vmatpush1.msra.mxu0 %v3387
        %5666 = vmatprep.subr.mxu0 %v3418
        %5667 = vmatpush1.msra.mxu0 %v3417
        %5668 = vmatprep.subr.mxu0 %v3448
        %5669 = vmatpush1.msra.mxu0 %v3447
        %5670 = vmatprep.subr.mxu0 %v3478
        %5671 = vmatpush1.msra.mxu0 %v3477
        %5672 = vmatprep.subr.mxu0 %v3508
        %5673 = vmatpush1.msra.mxu0 %v3507
        %5674 = vmatprep.subr.mxu0 %v3538
        %5675 = vmatpush1.msra.mxu0 %v3537
        %5676 = vmatprep.subr.mxu0 %v3568
        %5677 = vmatpush1.msra.mxu0 %v3567
        %5678 = vmatprep.subr.mxu0 %v3598
        %5679 = vmatpush1.msra.mxu0 %v3597
        %5680 = vmatprep.subr.mxu0 %v3628
        %5681 = vmatpush1.msra.mxu0 %v3627
        %5682 = vmatprep.subr.mxu0 %v3658
        %5683 = vmatpush1.msra.mxu0 %v3657
        %5684 = vmatprep.subr.mxu0 %v3688
        %5685 = vmatpush1.msra.mxu0 %v3687
        %5686 = vmatprep.subr.mxu0 %v3718
        %5687 = vmatpush1.msra.mxu0 %v3717
        %5688 = vmatprep.subr.mxu0 %v3748
        %5689 = vmatpush1.msra.mxu0 %v3747
        %5690 = vmatprep.subr.mxu0 %v3778
        %5691 = vmatpush1.msra.mxu0 %v3777
        %5692 = vmatprep.subr.mxu0 %v3808
        %5693 = vmatpush1.msra.mxu0 %v3807
        %5694 = vmatprep.subr.mxu0 %v3838
        %5695 = vmatpush1.msra.mxu0 %v3837
        %5696 = vmatprep.subr.mxu0 %v3868
        %5697 = vmatpush1.msra.mxu0 %v3867
        %5698 = vmatprep.subr.mxu0 %v3898
        %5699 = vmatpush1.msra.mxu0 %v3897
        %5700 = vmatprep.subr.mxu0 %v3928
        %5701 = vmatpush1.msra.mxu0 %v3927
        %5702 = vmatprep.subr.mxu0 %v3958
        %5703 = vmatpush1.msra.mxu0 %v3957
        %5704 = vmatprep.subr.mxu0 %v3988
        %5705 = vmatpush1.msra.mxu0 %v3987
        %5706 = vmatprep.mubr.f32.mxu0 %v341
        %5707 = vmatmul.mubr.f32.gmra.mrb[0].mxu0 %v339
        %v5708 = vpop.f32.mrb[0].mxu0
        %v5709 = vadd.f32 0.0, %v5708
        %v5710 = vpop.f32.mrb[0].mxu0
        %v5711 = vadd.f32 0.0, %v5710
        %5712 = vdwg.mxu0
        %5713 = vmatprep.subr.mxu0 %v4018
        %5714 = vmatpush1.msra.mxu0 %v4017
        %5715 = vmatprep.subr.mxu0 %v4048
        %5716 = vmatpush1.msra.mxu0 %v4047
        %5717 = vmatprep.subr.mxu0 %v4078
        %5718 = vmatpush1.msra.mxu0 %v4077
        %5719 = vmatprep.subr.mxu0 %v4108
        %5720 = vmatpush1.msra.mxu0 %v4107
        %5721 = vmatprep.subr.mxu0 %v4138
        %5722 = vmatpush1.msra.mxu0 %v4137
        %5723 = vmatprep.subr.mxu0 %v4168
        %5724 = vmatpush1.msra.mxu0 %v4167
        %5725 = vmatprep.subr.mxu0 %v4198
        %5726 = vmatpush1.msra.mxu0 %v4197
        %5727 = vmatprep.subr.mxu0 %v4228
        %5728 = vmatpush1.msra.mxu0 %v4227
        %5729 = vmatprep.subr.mxu0 %v4332
        %5730 = vmatpush1.msra.mxu0 %v4329
        %5731 = vmatprep.subr.mxu0 0.0
        %5732 = vmatpush1.msra.mxu0 0.0
        %5733 = vmatprep.subr.mxu0 0.0
        %5734 = vmatpush1.msra.mxu0 0.0
        %5735 = vmatprep.subr.mxu0 0.0
        %5736 = vmatpush1.msra.mxu0 0.0
        %5737 = vmatprep.subr.mxu0 0.0
        %5738 = vmatpush1.msra.mxu0 0.0
        %5739 = vmatprep.subr.mxu0 0.0
        %5740 = vmatpush1.msra.mxu0 0.0
        %5741 = vmatprep.subr.mxu0 0.0
        %5742 = vmatpush1.msra.mxu0 0.0
        %5743 = vmatprep.subr.mxu0 0.0
        %5744 = vmatpush1.msra.mxu0 0.0
        %5745 = vmatprep.subr.mxu0 0.0
        %5746 = vmatpush1.msra.mxu0 0.0
        %5747 = vmatprep.subr.mxu0 0.0
        %5748 = vmatpush1.msra.mxu0 0.0
        %5749 = vmatprep.subr.mxu0 0.0
        %5750 = vmatpush1.msra.mxu0 0.0
        %5751 = vmatprep.subr.mxu0 0.0
        %5752 = vmatpush1.msra.mxu0 0.0
        %5753 = vmatprep.subr.mxu0 0.0
        %5754 = vmatpush1.msra.mxu0 0.0
        %5755 = vmatprep.subr.mxu0 0.0
        %5756 = vmatpush1.msra.mxu0 0.0
        %5757 = vmatprep.subr.mxu0 0.0
        %5758 = vmatpush1.msra.mxu0 0.0
        %5759 = vmatprep.subr.mxu0 0.0
        %5760 = vmatpush1.msra.mxu0 0.0
        %5761 = vmatprep.subr.mxu0 0.0
        %5762 = vmatpush1.msra.mxu0 0.0
        %5763 = vmatprep.subr.mxu0 0.0
        %5764 = vmatpush1.msra.mxu0 0.0
        %5765 = vmatprep.subr.mxu0 0.0
        %5766 = vmatpush1.msra.mxu0 0.0
        %5767 = vmatprep.subr.mxu0 0.0
        %5768 = vmatpush1.msra.mxu0 0.0
        %5769 = vmatprep.subr.mxu0 0.0
        %5770 = vmatpush1.msra.mxu0 0.0
        %5771 = vmatprep.subr.mxu0 0.0
        %5772 = vmatpush1.msra.mxu0 0.0
        %5773 = vmatprep.subr.mxu0 0.0
        %5774 = vmatpush1.msra.mxu0 0.0
        %5775 = vmatprep.subr.mxu0 0.0
        %5776 = vmatpush1.msra.mxu0 0.0
        %5777 = vmatprep.mubr.f32.mxu0 0.0
        %5778 = vmatmul.mubr.f32.gmra.mrb[0].mxu0 %v4271
        %v5779 = vpop.f32.mrb[0].mxu0
        %v5780 = vadd.f32 %v5709, %v5779
        %v5781 = vpop.f32.mrb[0].mxu0
        %v5782 = vadd.f32 %v5711, %v5781
        %5783 = vdwg.mxu0
        %5784 = vmatprep.subr.mxu0 %v3060
        %5785 = vmatpush1.msra.mxu0 %v3059
        %5786 = vmatprep.subr.mxu0 %v3090
        %5787 = vmatpush1.msra.mxu0 %v3089
        %5788 = vmatprep.subr.mxu0 %v3120
        %5789 = vmatpush1.msra.mxu0 %v3119
        %5790 = vmatprep.subr.mxu0 %v3150
        %5791 = vmatpush1.msra.mxu0 %v3149
        %5792 = vmatprep.subr.mxu0 %v3180
        %5793 = vmatpush1.msra.mxu0 %v3179
        %5794 = vmatprep.subr.mxu0 %v3210
        %5795 = vmatpush1.msra.mxu0 %v3209
        %5796 = vmatprep.subr.mxu0 %v3240
        %5797 = vmatpush1.msra.mxu0 %v3239
        %5798 = vmatprep.subr.mxu0 %v3270
        %5799 = vmatpush1.msra.mxu0 %v3269
        %5800 = vmatprep.subr.mxu0 %v3300
        %5801 = vmatpush1.msra.mxu0 %v3299
        %5802 = vmatprep.subr.mxu0 %v3330
        %5803 = vmatpush1.msra.mxu0 %v3329
        %5804 = vmatprep.subr.mxu0 %v3360
        %5805 = vmatpush1.msra.mxu0 %v3359
        %5806 = vmatprep.subr.mxu0 %v3390
        %5807 = vmatpush1.msra.mxu0 %v3389
        %5808 = vmatprep.subr.mxu0 %v3420
        %5809 = vmatpush1.msra.mxu0 %v3419
        %5810 = vmatprep.subr.mxu0 %v3450
        %5811 = vmatpush1.msra.mxu0 %v3449
        %5812 = vmatprep.subr.mxu0 %v3480
        %5813 = vmatpush1.msra.mxu0 %v3479
        %5814 = vmatprep.subr.mxu0 %v3510
        %5815 = vmatpush1.msra.mxu0 %v3509
        %5816 = vmatprep.subr.mxu0 %v3540
        %5817 = vmatpush1.msra.mxu0 %v3539
        %5818 = vmatprep.subr.mxu0 %v3570
        %5819 = vmatpush1.msra.mxu0 %v3569
        %5820 = vmatprep.subr.mxu0 %v3600
        %5821 = vmatpush1.msra.mxu0 %v3599
        %5822 = vmatprep.subr.mxu0 %v3630
        %5823 = vmatpush1.msra.mxu0 %v3629
        %5824 = vmatprep.subr.mxu0 %v3660
        %5825 = vmatpush1.msra.mxu0 %v3659
        %5826 = vmatprep.subr.mxu0 %v3690
        %5827 = vmatpush1.msra.mxu0 %v3689
        %5828 = vmatprep.subr.mxu0 %v3720
        %5829 = vmatpush1.msra.mxu0 %v3719
        %5830 = vmatprep.subr.mxu0 %v3750
        %5831 = vmatpush1.msra.mxu0 %v3749
        %5832 = vmatprep.subr.mxu0 %v3780
        %5833 = vmatpush1.msra.mxu0 %v3779
        %5834 = vmatprep.subr.mxu0 %v3810
        %5835 = vmatpush1.msra.mxu0 %v3809
        %5836 = vmatprep.subr.mxu0 %v3840
        %5837 = vmatpush1.msra.mxu0 %v3839
        %5838 = vmatprep.subr.mxu0 %v3870
        %5839 = vmatpush1.msra.mxu0 %v3869
        %5840 = vmatprep.subr.mxu0 %v3900
        %5841 = vmatpush1.msra.mxu0 %v3899
        %5842 = vmatprep.subr.mxu0 %v3930
        %5843 = vmatpush1.msra.mxu0 %v3929
        %5844 = vmatprep.subr.mxu0 %v3960
        %5845 = vmatpush1.msra.mxu0 %v3959
        %5846 = vmatprep.subr.mxu0 %v3990
        %5847 = vmatpush1.msra.mxu0 %v3989
        %5848 = vmatprep.mubr.f32.mxu0 %v341
        %5849 = vmatmul.mubr.f32.gmra.mrb[0].mxu0 %v339
        %v5850 = vpop.f32.mrb[0].mxu0
        %v5851 = vadd.f32 0.0, %v5850
        %v5852 = vpop.f32.mrb[0].mxu0
        %v5853 = vadd.f32 0.0, %v5852
        %5854 = vdwg.mxu0
        %5855 = vmatprep.subr.mxu0 %v4020
        %5856 = vmatpush1.msra.mxu0 %v4019
        %5857 = vmatprep.subr.mxu0 %v4050
        %5858 = vmatpush1.msra.mxu0 %v4049
        %5859 = vmatprep.subr.mxu0 %v4080
        %5860 = vmatpush1.msra.mxu0 %v4079
        %5861 = vmatprep.subr.mxu0 %v4110
        %5862 = vmatpush1.msra.mxu0 %v4109
        %5863 = vmatprep.subr.mxu0 %v4140
        %5864 = vmatpush1.msra.mxu0 %v4139
        %5865 = vmatprep.subr.mxu0 %v4170
        %5866 = vmatpush1.msra.mxu0 %v4169
        %5867 = vmatprep.subr.mxu0 %v4200
        %5868 = vmatpush1.msra.mxu0 %v4199
        %5869 = vmatprep.subr.mxu0 %v4230
        %5870 = vmatpush1.msra.mxu0 %v4229
        %5871 = vmatprep.subr.mxu0 %v4338
        %5872 = vmatpush1.msra.mxu0 %v4335
        %5873 = vmatprep.subr.mxu0 0.0
        %5874 = vmatpush1.msra.mxu0 0.0
        %5875 = vmatprep.subr.mxu0 0.0
        %5876 = vmatpush1.msra.mxu0 0.0
        %5877 = vmatprep.subr.mxu0 0.0
        %5878 = vmatpush1.msra.mxu0 0.0
        %5879 = vmatprep.subr.mxu0 0.0
        %5880 = vmatpush1.msra.mxu0 0.0
        %5881 = vmatprep.subr.mxu0 0.0
        %5882 = vmatpush1.msra.mxu0 0.0
        %5883 = vmatprep.subr.mxu0 0.0
        %5884 = vmatpush1.msra.mxu0 0.0
        %5885 = vmatprep.subr.mxu0 0.0
        %5886 = vmatpush1.msra.mxu0 0.0
        %5887 = vmatprep.subr.mxu0 0.0
        %5888 = vmatpush1.msra.mxu0 0.0
        %5889 = vmatprep.subr.mxu0 0.0
        %5890 = vmatpush1.msra.mxu0 0.0
        %5891 = vmatprep.subr.mxu0 0.0
        %5892 = vmatpush1.msra.mxu0 0.0
        %5893 = vmatprep.subr.mxu0 0.0
        %5894 = vmatpush1.msra.mxu0 0.0
        %5895 = vmatprep.subr.mxu0 0.0
        %5896 = vmatpush1.msra.mxu0 0.0
        %5897 = vmatprep.subr.mxu0 0.0
        %5898 = vmatpush1.msra.mxu0 0.0
        %5899 = vmatprep.subr.mxu0 0.0
        %5900 = vmatpush1.msra.mxu0 0.0
        %5901 = vmatprep.subr.mxu0 0.0
        %5902 = vmatpush1.msra.mxu0 0.0
        %5903 = vmatprep.subr.mxu0 0.0
        %5904 = vmatpush1.msra.mxu0 0.0
        %5905 = vmatprep.subr.mxu0 0.0
        %5906 = vmatpush1.msra.mxu0 0.0
        %5907 = vmatprep.subr.mxu0 0.0
        %5908 = vmatpush1.msra.mxu0 0.0
        %5909 = vmatprep.subr.mxu0 0.0
        %5910 = vmatpush1.msra.mxu0 0.0
        %5911 = vmatprep.subr.mxu0 0.0
        %5912 = vmatpush1.msra.mxu0 0.0
        %5913 = vmatprep.subr.mxu0 0.0
        %5914 = vmatpush1.msra.mxu0 0.0
        %5915 = vmatprep.subr.mxu0 0.0
        %5916 = vmatpush1.msra.mxu0 0.0
        %5917 = vmatprep.subr.mxu0 0.0
        %5918 = vmatpush1.msra.mxu0 0.0
        %5919 = vmatprep.mubr.f32.mxu0 0.0
        %5920 = vmatmul.mubr.f32.gmra.mrb[0].mxu0 %v4271
        %v5921 = vpop.f32.mrb[0].mxu0
        %v5922 = vadd.f32 %v5851, %v5921
        %v5923 = vpop.f32.mrb[0].mxu0
        %v5924 = vadd.f32 %v5853, %v5923
        %5925 = vdwg.mxu0
        %5926 = vmatprep.subr.mxu0 %v3062
        %5927 = vmatpush1.msra.mxu0 %v3061
        %5928 = vmatprep.subr.mxu0 %v3092
        %5929 = vmatpush1.msra.mxu0 %v3091
        %5930 = vmatprep.subr.mxu0 %v3122
        %5931 = vmatpush1.msra.mxu0 %v3121
        %5932 = vmatprep.subr.mxu0 %v3152
        %5933 = vmatpush1.msra.mxu0 %v3151
        %5934 = vmatprep.subr.mxu0 %v3182
        %5935 = vmatpush1.msra.mxu0 %v3181
        %5936 = vmatprep.subr.mxu0 %v3212
        %5937 = vmatpush1.msra.mxu0 %v3211
        %5938 = vmatprep.subr.mxu0 %v3242
        %5939 = vmatpush1.msra.mxu0 %v3241
        %5940 = vmatprep.subr.mxu0 %v3272
        %5941 = vmatpush1.msra.mxu0 %v3271
        %5942 = vmatprep.subr.mxu0 %v3302
        %5943 = vmatpush1.msra.mxu0 %v3301
        %5944 = vmatprep.subr.mxu0 %v3332
        %5945 = vmatpush1.msra.mxu0 %v3331
        %5946 = vmatprep.subr.mxu0 %v3362
        %5947 = vmatpush1.msra.mxu0 %v3361
        %5948 = vmatprep.subr.mxu0 %v3392
        %5949 = vmatpush1.msra.mxu0 %v3391
        %5950 = vmatprep.subr.mxu0 %v3422
        %5951 = vmatpush1.msra.mxu0 %v3421
        %5952 = vmatprep.subr.mxu0 %v3452
        %5953 = vmatpush1.msra.mxu0 %v3451
        %5954 = vmatprep.subr.mxu0 %v3482
        %5955 = vmatpush1.msra.mxu0 %v3481
        %5956 = vmatprep.subr.mxu0 %v3512
        %5957 = vmatpush1.msra.mxu0 %v3511
        %5958 = vmatprep.subr.mxu0 %v3542
        %5959 = vmatpush1.msra.mxu0 %v3541
        %5960 = vmatprep.subr.mxu0 %v3572
        %5961 = vmatpush1.msra.mxu0 %v3571
        %5962 = vmatprep.subr.mxu0 %v3602
        %5963 = vmatpush1.msra.mxu0 %v3601
        %5964 = vmatprep.subr.mxu0 %v3632
        %5965 = vmatpush1.msra.mxu0 %v3631
        %5966 = vmatprep.subr.mxu0 %v3662
        %5967 = vmatpush1.msra.mxu0 %v3661
        %5968 = vmatprep.subr.mxu0 %v3692
        %5969 = vmatpush1.msra.mxu0 %v3691
        %5970 = vmatprep.subr.mxu0 %v3722
        %5971 = vmatpush1.msra.mxu0 %v3721
        %5972 = vmatprep.subr.mxu0 %v3752
        %5973 = vmatpush1.msra.mxu0 %v3751
        %5974 = vmatprep.subr.mxu0 %v3782
        %5975 = vmatpush1.msra.mxu0 %v3781
        %5976 = vmatprep.subr.mxu0 %v3812
        %5977 = vmatpush1.msra.mxu0 %v3811
        %5978 = vmatprep.subr.mxu0 %v3842
        %5979 = vmatpush1.msra.mxu0 %v3841
        %5980 = vmatprep.subr.mxu0 %v3872
        %5981 = vmatpush1.msra.mxu0 %v3871
        %5982 = vmatprep.subr.mxu0 %v3902
        %5983 = vmatpush1.msra.mxu0 %v3901
        %5984 = vmatprep.subr.mxu0 %v3932
        %5985 = vmatpush1.msra.mxu0 %v3931
        %5986 = vmatprep.subr.mxu0 %v3962
        %5987 = vmatpush1.msra.mxu0 %v3961
        %5988 = vmatprep.subr.mxu0 %v3992
        %5989 = vmatpush1.msra.mxu0 %v3991
        %5990 = vmatprep.mubr.f32.mxu0 %v341
        %5991 = vmatmul.mubr.f32.gmra.mrb[0].mxu0 %v339
        %v5992 = vpop.f32.mrb[0].mxu0
        %v5993 = vadd.f32 0.0, %v5992
        %v5994 = vpop.f32.mrb[0].mxu0
        %v5995 = vadd.f32 0.0, %v5994
        %5996 = vdwg.mxu0
        %5997 = vmatprep.subr.mxu0 %v4022
        %5998 = vmatpush1.msra.mxu0 %v4021
        %5999 = vmatprep.subr.mxu0 %v4052
        %6000 = vmatpush1.msra.mxu0 %v4051
        %6001 = vmatprep.subr.mxu0 %v4082
        %6002 = vmatpush1.msra.mxu0 %v4081
        %6003 = vmatprep.subr.mxu0 %v4112
        %6004 = vmatpush1.msra.mxu0 %v4111
        %6005 = vmatprep.subr.mxu0 %v4142
        %6006 = vmatpush1.msra.mxu0 %v4141
        %6007 = vmatprep.subr.mxu0 %v4172
        %6008 = vmatpush1.msra.mxu0 %v4171
        %6009 = vmatprep.subr.mxu0 %v4202
        %6010 = vmatpush1.msra.mxu0 %v4201
        %6011 = vmatprep.subr.mxu0 %v4232
        %6012 = vmatpush1.msra.mxu0 %v4231
        %6013 = vmatprep.subr.mxu0 %v4344
        %6014 = vmatpush1.msra.mxu0 %v4341
        %6015 = vmatprep.subr.mxu0 0.0
        %6016 = vmatpush1.msra.mxu0 0.0
        %6017 = vmatprep.subr.mxu0 0.0
        %6018 = vmatpush1.msra.mxu0 0.0
        %6019 = vmatprep.subr.mxu0 0.0
        %6020 = vmatpush1.msra.mxu0 0.0
        %6021 = vmatprep.subr.mxu0 0.0
        %6022 = vmatpush1.msra.mxu0 0.0
        %6023 = vmatprep.subr.mxu0 0.0
        %6024 = vmatpush1.msra.mxu0 0.0
        %6025 = vmatprep.subr.mxu0 0.0
        %6026 = vmatpush1.msra.mxu0 0.0
        %6027 = vmatprep.subr.mxu0 0.0
        %6028 = vmatpush1.msra.mxu0 0.0
        %6029 = vmatprep.subr.mxu0 0.0
        %6030 = vmatpush1.msra.mxu0 0.0
        %6031 = vmatprep.subr.mxu0 0.0
        %6032 = vmatpush1.msra.mxu0 0.0
        %6033 = vmatprep.subr.mxu0 0.0
        %6034 = vmatpush1.msra.mxu0 0.0
        %6035 = vmatprep.subr.mxu0 0.0
        %6036 = vmatpush1.msra.mxu0 0.0
        %6037 = vmatprep.subr.mxu0 0.0
        %6038 = vmatpush1.msra.mxu0 0.0
        %6039 = vmatprep.subr.mxu0 0.0
        %6040 = vmatpush1.msra.mxu0 0.0
        %6041 = vmatprep.subr.mxu0 0.0
        %6042 = vmatpush1.msra.mxu0 0.0
        %6043 = vmatprep.subr.mxu0 0.0
        %6044 = vmatpush1.msra.mxu0 0.0
        %6045 = vmatprep.subr.mxu0 0.0
        %6046 = vmatpush1.msra.mxu0 0.0
        %6047 = vmatprep.subr.mxu0 0.0
        %6048 = vmatpush1.msra.mxu0 0.0
        %6049 = vmatprep.subr.mxu0 0.0
        %6050 = vmatpush1.msra.mxu0 0.0
        %6051 = vmatprep.subr.mxu0 0.0
        %6052 = vmatpush1.msra.mxu0 0.0
        %6053 = vmatprep.subr.mxu0 0.0
        %6054 = vmatpush1.msra.mxu0 0.0
        %6055 = vmatprep.subr.mxu0 0.0
        %6056 = vmatpush1.msra.mxu0 0.0
        %6057 = vmatprep.subr.mxu0 0.0
        %6058 = vmatpush1.msra.mxu0 0.0
        %6059 = vmatprep.subr.mxu0 0.0
        %6060 = vmatpush1.msra.mxu0 0.0
        %6061 = vmatprep.mubr.f32.mxu0 0.0
        %6062 = vmatmul.mubr.f32.gmra.mrb[0].mxu0 %v4271
        %v6063 = vpop.f32.mrb[0].mxu0
        %v6064 = vadd.f32 %v5993, %v6063
        %v6065 = vpop.f32.mrb[0].mxu0
        %v6066 = vadd.f32 %v5995, %v6065
        %6067 = vdwg.mxu0
        %6068 = vmatprep.subr.mxu0 %v3064
        %6069 = vmatpush1.msra.mxu0 %v3063
        %6070 = vmatprep.subr.mxu0 %v3094
        %6071 = vmatpush1.msra.mxu0 %v3093
        %6072 = vmatprep.subr.mxu0 %v3124
        %6073 = vmatpush1.msra.mxu0 %v3123
        %6074 = vmatprep.subr.mxu0 %v3154
        %6075 = vmatpush1.msra.mxu0 %v3153
        %6076 = vmatprep.subr.mxu0 %v3184
        %6077 = vmatpush1.msra.mxu0 %v3183
        %6078 = vmatprep.subr.mxu0 %v3214
        %6079 = vmatpush1.msra.mxu0 %v3213
        %6080 = vmatprep.subr.mxu0 %v3244
        %6081 = vmatpush1.msra.mxu0 %v3243
        %6082 = vmatprep.subr.mxu0 %v3274
        %6083 = vmatpush1.msra.mxu0 %v3273
        %6084 = vmatprep.subr.mxu0 %v3304
        %6085 = vmatpush1.msra.mxu0 %v3303
        %6086 = vmatprep.subr.mxu0 %v3334
        %6087 = vmatpush1.msra.mxu0 %v3333
        %6088 = vmatprep.subr.mxu0 %v3364
        %6089 = vmatpush1.msra.mxu0 %v3363
        %6090 = vmatprep.subr.mxu0 %v3394
        %6091 = vmatpush1.msra.mxu0 %v3393
        %6092 = vmatprep.subr.mxu0 %v3424
        %6093 = vmatpush1.msra.mxu0 %v3423
        %6094 = vmatprep.subr.mxu0 %v3454
        %6095 = vmatpush1.msra.mxu0 %v3453
        %6096 = vmatprep.subr.mxu0 %v3484
        %6097 = vmatpush1.msra.mxu0 %v3483
        %6098 = vmatprep.subr.mxu0 %v3514
        %6099 = vmatpush1.msra.mxu0 %v3513
        %6100 = vmatprep.subr.mxu0 %v3544
        %6101 = vmatpush1.msra.mxu0 %v3543
        %6102 = vmatprep.subr.mxu0 %v3574
        %6103 = vmatpush1.msra.mxu0 %v3573
        %6104 = vmatprep.subr.mxu0 %v3604
        %6105 = vmatpush1.msra.mxu0 %v3603
        %6106 = vmatprep.subr.mxu0 %v3634
        %6107 = vmatpush1.msra.mxu0 %v3633
        %6108 = vmatprep.subr.mxu0 %v3664
        %6109 = vmatpush1.msra.mxu0 %v3663
        %6110 = vmatprep.subr.mxu0 %v3694
        %6111 = vmatpush1.msra.mxu0 %v3693
        %6112 = vmatprep.subr.mxu0 %v3724
        %6113 = vmatpush1.msra.mxu0 %v3723
        %6114 = vmatprep.subr.mxu0 %v3754
        %6115 = vmatpush1.msra.mxu0 %v3753
        %6116 = vmatprep.subr.mxu0 %v3784
        %6117 = vmatpush1.msra.mxu0 %v3783
        %6118 = vmatprep.subr.mxu0 %v3814
        %6119 = vmatpush1.msra.mxu0 %v3813
        %6120 = vmatprep.subr.mxu0 %v3844
        %6121 = vmatpush1.msra.mxu0 %v3843
        %6122 = vmatprep.subr.mxu0 %v3874
        %6123 = vmatpush1.msra.mxu0 %v3873
        %6124 = vmatprep.subr.mxu0 %v3904
        %6125 = vmatpush1.msra.mxu0 %v3903
        %6126 = vmatprep.subr.mxu0 %v3934
        %6127 = vmatpush1.msra.mxu0 %v3933
        %6128 = vmatprep.subr.mxu0 %v3964
        %6129 = vmatpush1.msra.mxu0 %v3963
        %6130 = vmatprep.subr.mxu0 %v3994
        %6131 = vmatpush1.msra.mxu0 %v3993
        %6132 = vmatprep.mubr.f32.mxu0 %v341
        %6133 = vmatmul.mubr.f32.gmra.mrb[0].mxu0 %v339
        %v6134 = vpop.f32.mrb[0].mxu0
        %v6135 = vadd.f32 0.0, %v6134
        %v6136 = vpop.f32.mrb[0].mxu0
        %v6137 = vadd.f32 0.0, %v6136
        %6138 = vdwg.mxu0
        %6139 = vmatprep.subr.mxu0 %v4024
        %6140 = vmatpush1.msra.mxu0 %v4023
        %6141 = vmatprep.subr.mxu0 %v4054
        %6142 = vmatpush1.msra.mxu0 %v4053
        %6143 = vmatprep.subr.mxu0 %v4084
        %6144 = vmatpush1.msra.mxu0 %v4083
        %6145 = vmatprep.subr.mxu0 %v4114
        %6146 = vmatpush1.msra.mxu0 %v4113
        %6147 = vmatprep.subr.mxu0 %v4144
        %6148 = vmatpush1.msra.mxu0 %v4143
        %6149 = vmatprep.subr.mxu0 %v4174
        %6150 = vmatpush1.msra.mxu0 %v4173
        %6151 = vmatprep.subr.mxu0 %v4204
        %6152 = vmatpush1.msra.mxu0 %v4203
        %6153 = vmatprep.subr.mxu0 %v4234
        %6154 = vmatpush1.msra.mxu0 %v4233
        %6155 = vmatprep.subr.mxu0 %v4350
        %6156 = vmatpush1.msra.mxu0 %v4347
        %6157 = vmatprep.subr.mxu0 0.0
        %6158 = vmatpush1.msra.mxu0 0.0
        %6159 = vmatprep.subr.mxu0 0.0
        %6160 = vmatpush1.msra.mxu0 0.0
        %6161 = vmatprep.subr.mxu0 0.0
        %6162 = vmatpush1.msra.mxu0 0.0
        %6163 = vmatprep.subr.mxu0 0.0
        %6164 = vmatpush1.msra.mxu0 0.0
        %6165 = vmatprep.subr.mxu0 0.0
        %6166 = vmatpush1.msra.mxu0 0.0
        %6167 = vmatprep.subr.mxu0 0.0
        %6168 = vmatpush1.msra.mxu0 0.0
        %6169 = vmatprep.subr.mxu0 0.0
        %6170 = vmatpush1.msra.mxu0 0.0
        %6171 = vmatprep.subr.mxu0 0.0
        %6172 = vmatpush1.msra.mxu0 0.0
        %6173 = vmatprep.subr.mxu0 0.0
        %6174 = vmatpush1.msra.mxu0 0.0
        %6175 = vmatprep.subr.mxu0 0.0
        %6176 = vmatpush1.msra.mxu0 0.0
        %6177 = vmatprep.subr.mxu0 0.0
        %6178 = vmatpush1.msra.mxu0 0.0
        %6179 = vmatprep.subr.mxu0 0.0
        %6180 = vmatpush1.msra.mxu0 0.0
        %6181 = vmatprep.subr.mxu0 0.0
        %6182 = vmatpush1.msra.mxu0 0.0
        %6183 = vmatprep.subr.mxu0 0.0
        %6184 = vmatpush1.msra.mxu0 0.0
        %6185 = vmatprep.subr.mxu0 0.0
        %6186 = vmatpush1.msra.mxu0 0.0
        %6187 = vmatprep.subr.mxu0 0.0
        %6188 = vmatpush1.msra.mxu0 0.0
        %6189 = vmatprep.subr.mxu0 0.0
        %6190 = vmatpush1.msra.mxu0 0.0
        %6191 = vmatprep.subr.mxu0 0.0
        %6192 = vmatpush1.msra.mxu0 0.0
        %6193 = vmatprep.subr.mxu0 0.0
        %6194 = vmatpush1.msra.mxu0 0.0
        %6195 = vmatprep.subr.mxu0 0.0
        %6196 = vmatpush1.msra.mxu0 0.0
        %6197 = vmatprep.subr.mxu0 0.0
        %6198 = vmatpush1.msra.mxu0 0.0
        %6199 = vmatprep.subr.mxu0 0.0
        %6200 = vmatpush1.msra.mxu0 0.0
        %6201 = vmatprep.subr.mxu0 0.0
        %6202 = vmatpush1.msra.mxu0 0.0
        %6203 = vmatprep.mubr.f32.mxu0 0.0
        %6204 = vmatmul.mubr.f32.gmra.mrb[0].mxu0 %v4271
        %v6205 = vpop.f32.mrb[0].mxu0
        %v6206 = vadd.f32 %v6135, %v6205
        %v6207 = vpop.f32.mrb[0].mxu0
        %v6208 = vadd.f32 %v6137, %v6207
        %6209 = vdwg.mxu0
        %6210 = vmatprep.subr.mxu0 %v3066
        %6211 = vmatpush1.msra.mxu0 %v3065
        %6212 = vmatprep.subr.mxu0 %v3096
        %6213 = vmatpush1.msra.mxu0 %v3095
        %6214 = vmatprep.subr.mxu0 %v3126
        %6215 = vmatpush1.msra.mxu0 %v3125
        %6216 = vmatprep.subr.mxu0 %v3156
        %6217 = vmatpush1.msra.mxu0 %v3155
        %6218 = vmatprep.subr.mxu0 %v3186
        %6219 = vmatpush1.msra.mxu0 %v3185
        %6220 = vmatprep.subr.mxu0 %v3216
        %6221 = vmatpush1.msra.mxu0 %v3215
        %6222 = vmatprep.subr.mxu0 %v3246
        %6223 = vmatpush1.msra.mxu0 %v3245
        %6224 = vmatprep.subr.mxu0 %v3276
        %6225 = vmatpush1.msra.mxu0 %v3275
        %6226 = vmatprep.subr.mxu0 %v3306
        %6227 = vmatpush1.msra.mxu0 %v3305
        %6228 = vmatprep.subr.mxu0 %v3336
        %6229 = vmatpush1.msra.mxu0 %v3335
        %6230 = vmatprep.subr.mxu0 %v3366
        %6231 = vmatpush1.msra.mxu0 %v3365
        %6232 = vmatprep.subr.mxu0 %v3396
        %6233 = vmatpush1.msra.mxu0 %v3395
        %6234 = vmatprep.subr.mxu0 %v3426
        %6235 = vmatpush1.msra.mxu0 %v3425
        %6236 = vmatprep.subr.mxu0 %v3456
        %6237 = vmatpush1.msra.mxu0 %v3455
        %6238 = vmatprep.subr.mxu0 %v3486
        %6239 = vmatpush1.msra.mxu0 %v3485
        %6240 = vmatprep.subr.mxu0 %v3516
        %6241 = vmatpush1.msra.mxu0 %v3515
        %6242 = vmatprep.subr.mxu0 %v3546
        %6243 = vmatpush1.msra.mxu0 %v3545
        %6244 = vmatprep.subr.mxu0 %v3576
        %6245 = vmatpush1.msra.mxu0 %v3575
        %6246 = vmatprep.subr.mxu0 %v3606
        %6247 = vmatpush1.msra.mxu0 %v3605
        %6248 = vmatprep.subr.mxu0 %v3636
        %6249 = vmatpush1.msra.mxu0 %v3635
        %6250 = vmatprep.subr.mxu0 %v3666
        %6251 = vmatpush1.msra.mxu0 %v3665
        %6252 = vmatprep.subr.mxu0 %v3696
        %6253 = vmatpush1.msra.mxu0 %v3695
        %6254 = vmatprep.subr.mxu0 %v3726
        %6255 = vmatpush1.msra.mxu0 %v3725
        %6256 = vmatprep.subr.mxu0 %v3756
        %6257 = vmatpush1.msra.mxu0 %v3755
        %6258 = vmatprep.subr.mxu0 %v3786
        %6259 = vmatpush1.msra.mxu0 %v3785
        %6260 = vmatprep.subr.mxu0 %v3816
        %6261 = vmatpush1.msra.mxu0 %v3815
        %6262 = vmatprep.subr.mxu0 %v3846
        %6263 = vmatpush1.msra.mxu0 %v3845
        %6264 = vmatprep.subr.mxu0 %v3876
        %6265 = vmatpush1.msra.mxu0 %v3875
        %6266 = vmatprep.subr.mxu0 %v3906
        %6267 = vmatpush1.msra.mxu0 %v3905
        %6268 = vmatprep.subr.mxu0 %v3936
        %6269 = vmatpush1.msra.mxu0 %v3935
        %6270 = vmatprep.subr.mxu0 %v3966
        %6271 = vmatpush1.msra.mxu0 %v3965
        %6272 = vmatprep.subr.mxu0 %v3996
        %6273 = vmatpush1.msra.mxu0 %v3995
        %6274 = vmatprep.mubr.f32.mxu0 %v341
        %6275 = vmatmul.mubr.f32.gmra.mrb[0].mxu0 %v339
        %v6276 = vpop.f32.mrb[0].mxu0
        %v6277 = vadd.f32 0.0, %v6276
        %v6278 = vpop.f32.mrb[0].mxu0
        %v6279 = vadd.f32 0.0, %v6278
        %6280 = vdwg.mxu0
        %6281 = vmatprep.subr.mxu0 %v4026
        %6282 = vmatpush1.msra.mxu0 %v4025
        %6283 = vmatprep.subr.mxu0 %v4056
        %6284 = vmatpush1.msra.mxu0 %v4055
        %6285 = vmatprep.subr.mxu0 %v4086
        %6286 = vmatpush1.msra.mxu0 %v4085
        %6287 = vmatprep.subr.mxu0 %v4116
        %6288 = vmatpush1.msra.mxu0 %v4115
        %6289 = vmatprep.subr.mxu0 %v4146
        %6290 = vmatpush1.msra.mxu0 %v4145
        %6291 = vmatprep.subr.mxu0 %v4176
        %6292 = vmatpush1.msra.mxu0 %v4175
        %6293 = vmatprep.subr.mxu0 %v4206
        %6294 = vmatpush1.msra.mxu0 %v4205
        %6295 = vmatprep.subr.mxu0 %v4236
        %6296 = vmatpush1.msra.mxu0 %v4235
        %6297 = vmatprep.subr.mxu0 %v4356
        %6298 = vmatpush1.msra.mxu0 %v4353
        %6299 = vmatprep.subr.mxu0 0.0
        %6300 = vmatpush1.msra.mxu0 0.0
        %6301 = vmatprep.subr.mxu0 0.0
        %6302 = vmatpush1.msra.mxu0 0.0
        %6303 = vmatprep.subr.mxu0 0.0
        %6304 = vmatpush1.msra.mxu0 0.0
        %6305 = vmatprep.subr.mxu0 0.0
        %6306 = vmatpush1.msra.mxu0 0.0
        %6307 = vmatprep.subr.mxu0 0.0
        %6308 = vmatpush1.msra.mxu0 0.0
        %6309 = vmatprep.subr.mxu0 0.0
        %6310 = vmatpush1.msra.mxu0 0.0
        %6311 = vmatprep.subr.mxu0 0.0
        %6312 = vmatpush1.msra.mxu0 0.0
        %6313 = vmatprep.subr.mxu0 0.0
        %6314 = vmatpush1.msra.mxu0 0.0
        %6315 = vmatprep.subr.mxu0 0.0
        %6316 = vmatpush1.msra.mxu0 0.0
        %6317 = vmatprep.subr.mxu0 0.0
        %6318 = vmatpush1.msra.mxu0 0.0
        %6319 = vmatprep.subr.mxu0 0.0
        %6320 = vmatpush1.msra.mxu0 0.0
        %6321 = vmatprep.subr.mxu0 0.0
        %6322 = vmatpush1.msra.mxu0 0.0
        %6323 = vmatprep.subr.mxu0 0.0
        %6324 = vmatpush1.msra.mxu0 0.0
        %6325 = vmatprep.subr.mxu0 0.0
        %6326 = vmatpush1.msra.mxu0 0.0
        %6327 = vmatprep.subr.mxu0 0.0
        %6328 = vmatpush1.msra.mxu0 0.0
        %6329 = vmatprep.subr.mxu0 0.0
        %6330 = vmatpush1.msra.mxu0 0.0
        %6331 = vmatprep.subr.mxu0 0.0
        %6332 = vmatpush1.msra.mxu0 0.0
        %6333 = vmatprep.subr.mxu0 0.0
        %6334 = vmatpush1.msra.mxu0 0.0
        %6335 = vmatprep.subr.mxu0 0.0
        %6336 = vmatpush1.msra.mxu0 0.0
        %6337 = vmatprep.subr.mxu0 0.0
        %6338 = vmatpush1.msra.mxu0 0.0
        %6339 = vmatprep.subr.mxu0 0.0
        %6340 = vmatpush1.msra.mxu0 0.0
        %6341 = vmatprep.subr.mxu0 0.0
        %6342 = vmatpush1.msra.mxu0 0.0
        %6343 = vmatprep.subr.mxu0 0.0
        %6344 = vmatpush1.msra.mxu0 0.0
        %6345 = vmatprep.mubr.f32.mxu0 0.0
        %6346 = vmatmul.mubr.f32.gmra.mrb[0].mxu0 %v4271
        %v6347 = vpop.f32.mrb[0].mxu0
        %v6348 = vadd.f32 %v6277, %v6347
        %v6349 = vpop.f32.mrb[0].mxu0
        %v6350 = vadd.f32 %v6279, %v6349
        %6351 = vdwg.mxu0
        %6352 = vmatprep.subr.mxu0 %v3068
        %6353 = vmatpush1.msra.mxu0 %v3067
        %6354 = vmatprep.subr.mxu0 %v3098
        %6355 = vmatpush1.msra.mxu0 %v3097
        %6356 = vmatprep.subr.mxu0 %v3128
        %6357 = vmatpush1.msra.mxu0 %v3127
        %6358 = vmatprep.subr.mxu0 %v3158
        %6359 = vmatpush1.msra.mxu0 %v3157
        %6360 = vmatprep.subr.mxu0 %v3188
        %6361 = vmatpush1.msra.mxu0 %v3187
        %6362 = vmatprep.subr.mxu0 %v3218
        %6363 = vmatpush1.msra.mxu0 %v3217
        %6364 = vmatprep.subr.mxu0 %v3248
        %6365 = vmatpush1.msra.mxu0 %v3247
        %6366 = vmatprep.subr.mxu0 %v3278
        %6367 = vmatpush1.msra.mxu0 %v3277
        %6368 = vmatprep.subr.mxu0 %v3308
        %6369 = vmatpush1.msra.mxu0 %v3307
        %6370 = vmatprep.subr.mxu0 %v3338
        %6371 = vmatpush1.msra.mxu0 %v3337
        %6372 = vmatprep.subr.mxu0 %v3368
        %6373 = vmatpush1.msra.mxu0 %v3367
        %6374 = vmatprep.subr.mxu0 %v3398
        %6375 = vmatpush1.msra.mxu0 %v3397
        %6376 = vmatprep.subr.mxu0 %v3428
        %6377 = vmatpush1.msra.mxu0 %v3427
        %6378 = vmatprep.subr.mxu0 %v3458
        %6379 = vmatpush1.msra.mxu0 %v3457
        %6380 = vmatprep.subr.mxu0 %v3488
        %6381 = vmatpush1.msra.mxu0 %v3487
        %6382 = vmatprep.subr.mxu0 %v3518
        %6383 = vmatpush1.msra.mxu0 %v3517
        %6384 = vmatprep.subr.mxu0 %v3548
        %6385 = vmatpush1.msra.mxu0 %v3547
        %6386 = vmatprep.subr.mxu0 %v3578
        %6387 = vmatpush1.msra.mxu0 %v3577
        %6388 = vmatprep.subr.mxu0 %v3608
        %6389 = vmatpush1.msra.mxu0 %v3607
        %6390 = vmatprep.subr.mxu0 %v3638
        %6391 = vmatpush1.msra.mxu0 %v3637
        %6392 = vmatprep.subr.mxu0 %v3668
        %6393 = vmatpush1.msra.mxu0 %v3667
        %6394 = vmatprep.subr.mxu0 %v3698
        %6395 = vmatpush1.msra.mxu0 %v3697
        %6396 = vmatprep.subr.mxu0 %v3728
        %6397 = vmatpush1.msra.mxu0 %v3727
        %6398 = vmatprep.subr.mxu0 %v3758
        %6399 = vmatpush1.msra.mxu0 %v3757
        %6400 = vmatprep.subr.mxu0 %v3788
        %6401 = vmatpush1.msra.mxu0 %v3787
        %6402 = vmatprep.subr.mxu0 %v3818
        %6403 = vmatpush1.msra.mxu0 %v3817
        %6404 = vmatprep.subr.mxu0 %v3848
        %6405 = vmatpush1.msra.mxu0 %v3847
        %6406 = vmatprep.subr.mxu0 %v3878
        %6407 = vmatpush1.msra.mxu0 %v3877
        %6408 = vmatprep.subr.mxu0 %v3908
        %6409 = vmatpush1.msra.mxu0 %v3907
        %6410 = vmatprep.subr.mxu0 %v3938
        %6411 = vmatpush1.msra.mxu0 %v3937
        %6412 = vmatprep.subr.mxu0 %v3968
        %6413 = vmatpush1.msra.mxu0 %v3967
        %6414 = vmatprep.subr.mxu0 %v3998
        %6415 = vmatpush1.msra.mxu0 %v3997
        %6416 = vmatprep.mubr.f32.mxu0 %v341
        %6417 = vmatmul.mubr.f32.gmra.mrb[0].mxu0 %v339
        %v6418 = vpop.f32.mrb[0].mxu0
        %v6419 = vadd.f32 0.0, %v6418
        %v6420 = vpop.f32.mrb[0].mxu0
        %v6421 = vadd.f32 0.0, %v6420
        %6422 = vdwg.mxu0
        %6423 = vmatprep.subr.mxu0 %v4028
        %6424 = vmatpush1.msra.mxu0 %v4027
        %6425 = vmatprep.subr.mxu0 %v4058
        %6426 = vmatpush1.msra.mxu0 %v4057
        %6427 = vmatprep.subr.mxu0 %v4088
        %6428 = vmatpush1.msra.mxu0 %v4087
        %6429 = vmatprep.subr.mxu0 %v4118
        %6430 = vmatpush1.msra.mxu0 %v4117
        %6431 = vmatprep.subr.mxu0 %v4148
        %6432 = vmatpush1.msra.mxu0 %v4147
        %6433 = vmatprep.subr.mxu0 %v4178
        %6434 = vmatpush1.msra.mxu0 %v4177
        %6435 = vmatprep.subr.mxu0 %v4208
        %6436 = vmatpush1.msra.mxu0 %v4207
        %6437 = vmatprep.subr.mxu0 %v4238
        %6438 = vmatpush1.msra.mxu0 %v4237
        %6439 = vmatprep.subr.mxu0 %v4362
        %6440 = vmatpush1.msra.mxu0 %v4359
        %6441 = vmatprep.subr.mxu0 0.0
        %6442 = vmatpush1.msra.mxu0 0.0
        %6443 = vmatprep.subr.mxu0 0.0
        %6444 = vmatpush1.msra.mxu0 0.0
        %6445 = vmatprep.subr.mxu0 0.0
        %6446 = vmatpush1.msra.mxu0 0.0
        %6447 = vmatprep.subr.mxu0 0.0
        %6448 = vmatpush1.msra.mxu0 0.0
        %6449 = vmatprep.subr.mxu0 0.0
        %6450 = vmatpush1.msra.mxu0 0.0
        %6451 = vmatprep.subr.mxu0 0.0
        %6452 = vmatpush1.msra.mxu0 0.0
        %6453 = vmatprep.subr.mxu0 0.0
        %6454 = vmatpush1.msra.mxu0 0.0
        %6455 = vmatprep.subr.mxu0 0.0
        %6456 = vmatpush1.msra.mxu0 0.0
        %6457 = vmatprep.subr.mxu0 0.0
        %6458 = vmatpush1.msra.mxu0 0.0
        %6459 = vmatprep.subr.mxu0 0.0
        %6460 = vmatpush1.msra.mxu0 0.0
        %6461 = vmatprep.subr.mxu0 0.0
        %6462 = vmatpush1.msra.mxu0 0.0
        %6463 = vmatprep.subr.mxu0 0.0
        %6464 = vmatpush1.msra.mxu0 0.0
        %6465 = vmatprep.subr.mxu0 0.0
        %6466 = vmatpush1.msra.mxu0 0.0
        %6467 = vmatprep.subr.mxu0 0.0
        %6468 = vmatpush1.msra.mxu0 0.0
        %6469 = vmatprep.subr.mxu0 0.0
        %6470 = vmatpush1.msra.mxu0 0.0
        %6471 = vmatprep.subr.mxu0 0.0
        %6472 = vmatpush1.msra.mxu0 0.0
        %6473 = vmatprep.subr.mxu0 0.0
        %6474 = vmatpush1.msra.mxu0 0.0
        %6475 = vmatprep.subr.mxu0 0.0
        %6476 = vmatpush1.msra.mxu0 0.0
        %6477 = vmatprep.subr.mxu0 0.0
        %6478 = vmatpush1.msra.mxu0 0.0
        %6479 = vmatprep.subr.mxu0 0.0
        %6480 = vmatpush1.msra.mxu0 0.0
        %6481 = vmatprep.subr.mxu0 0.0
        %6482 = vmatpush1.msra.mxu0 0.0
        %6483 = vmatprep.subr.mxu0 0.0
        %6484 = vmatpush1.msra.mxu0 0.0
        %6485 = vmatprep.subr.mxu0 0.0
        %6486 = vmatpush1.msra.mxu0 0.0
        %6487 = vmatprep.mubr.f32.mxu0 0.0
        %6488 = vmatmul.mubr.f32.gmra.mrb[0].mxu0 %v4271
        %v6489 = vpop.f32.mrb[0].mxu0
        %v6490 = vadd.f32 %v6419, %v6489
        %v6491 = vpop.f32.mrb[0].mxu0
        %v6492 = vadd.f32 %v6421, %v6491
        %6493 = vdwg.mxu0
        %v6524 = vcombine.low %v4502, %v4504
        %v6525 = vcombine.low %v4644, %v4646
        %v6526 = vcombine.low %v4786, %v4788
        %v6527 = vcombine.low %v4928, %v4930
        %v6528 = vcombine.low %v5070, %v5072
        %v6529 = vcombine.low %v5212, %v5214
        %v6530 = vcombine.low %v5354, %v5356
        %v6531 = vcombine.low %v5496, %v5498
        %v6532 = vcombine.low %v5638, %v5640
        %v6533 = vcombine.low %v5780, %v5782
        %v6534 = vcombine.low %v5922, %v5924
        %v6535 = vcombine.low %v6064, %v6066
        %v6536 = vcombine.low %v6206, %v6208
        %v6537 = vcombine.low %v6348, %v6350
        %v6538 = vcombine.low %v6490, %v6492
        %6554 = vst [vmem:[%s162] sm:$0xff] %v6524
        %6555 = vst [vmem:[%s162 + $0x8] sm:$0xff] %v6525
        %6556 = vst [vmem:[%s162 + $0x10] sm:$0xff] %v6526
        %6557 = vst [vmem:[%s162 + $0x18] sm:$0xff] %v6527
        %6558 = vst [vmem:[%s162 + $0x20] sm:$0xff] %v6528
        %6559 = vst [vmem:[%s162 + $0x28] sm:$0xff] %v6529
        %6560 = vst [vmem:[%s162 + $0x30] sm:$0xff] %v6530
        %6561 = vst [vmem:[%s162 + $0x38] sm:$0xff] %v6531
        %6562 = vst [vmem:[%s162 + $0x40] sm:$0xff] %v6532
        %6563 = vst [vmem:[%s162 + $0x48] sm:$0xff] %v6533
        %6564 = vst [vmem:[%s162 + $0x50] sm:$0xff] %v6534
        %6565 = vst [vmem:[%s162 + $0x58] sm:$0xff] %v6535
        %6566 = vst [vmem:[%s162 + $0x60] sm:$0xff] %v6536
        %6567 = vst [vmem:[%s162 + $0x68] sm:$0xff] %v6537
        %6568 = vst [vmem:[%s162 + $0x70] sm:$0xff] %v6538
        %s6569 = sand.u32 %s93, 1
        %s6570 = scalar_lea.sflag [#allocation3], %s6569
        %s6571 = sand.u32 %s93, 1
        %s6572 = smul.addr %s6571, 120
        %s6573 = scalar_lea.vmem [#allocation2], %s6572
        // Predicated region
        $region33: #{tpu_custom_call.1} parent=31 // pred_check
          %p6574 = pneg %p103
        $region34: #{tpu_custom_call.1} parent=31 // pred_check_branch
          %6576 = sbr.rel (%p6574) target = $region36
        $region35: #{tpu_custom_call.1} parent=31 // pred_region
          %s6577 = smul.u32 30, %s17
          %s6579 = ssub.s32 1920, 1920
          %6580 = vsyncadd %s6570, %s6579
          %s6581 = smul.addr %s6577, 64
          %s6582 = scalar_lea.hbm %s3, %s6581
          %s6584 = sshll.u32 %s6573, 4
          %s6585 = int_to_ptr.vmem [resolvable:$true] %s6584
          %6587 = dma.vmem_to_hbm [thread:$0]  %s6585, 1920, %s6582, %s6570
        $region36: #{tpu_custom_call.1} parent=31 // pred_fallthru
          _
      $region32: #{tpu_custom_call.1} parent=5 // pred_fallthru
        _
      %p6588 = scmp.le.s32.totalorder 2, %s12
      // Predicated region
      $region37: #{tpu_custom_call.1} parent=5 // pred_check
        %p6589 = pneg %p6588
      $region38: #{tpu_custom_call.1} parent=5 // pred_check_branch
        %6591 = sbr.rel (%p6589) target = $region40
      $region39: #{tpu_custom_call.1} parent=5 // pred_region
        %s6592 = ssub.s32 %s12, 2
        // Predicated region
        $region41: #{tpu_custom_call.1} parent=39 // pred_check
          %p6593 = pneg %p109
        $region42: #{tpu_custom_call.1} parent=39 // pred_check_branch
          %6595 = sbr.rel (%p6593) target = $region44
        $region43: #{tpu_custom_call.1} parent=39 // pred_region
          %s6596 = sand.u32 %s94, 1
          %s6597 = scalar_lea.sflag [#allocation3], %s6596
          %s6598 = sand.u32 %s94, 1
          %s6599 = smul.addr %s6598, 120
          %s6600 = scalar_lea.vmem [#allocation2], %s6599
          %6601 = dma.done %s6597, 1920
        $region44: #{tpu_custom_call.1} parent=39 // pred_fallthru
          _
      $region40: #{tpu_custom_call.1} parent=5 // pred_fallthru
        _
    $region6: #{tpu_custom_call.1} parent=1 // loop_footer
      %s16 = sadd.s32 1, %s12
    $region7: #{tpu_custom_call.1} parent=1 // loop_footer_branch
      %11 = sbr.rel target = $region3
    $region8: #{tpu_custom_call.1} parent=1 // loop_exit
      _
    %6602 = vsyncpa [#allocation3], 1
    %s6603 = scalar_lea.sflag [#allocation3], 1
    %6604 = vsyncpa %s6603, 1

</llo_original>
